<compile_context>
chip_gen: v7x
topology: tpu7x:2x2x1
jax: 0.10.0
libtpu: 0.0.40
codegen_flags: <defaults>
</compile_context>

<pallas_src>
import jax
import jax.numpy as jnp
from jax.experimental import pallas as pl
from jax.experimental.pallas import tpu as pltpu


def _make_kernel(valid_k, mm_dtype):
    """valid_k: number of real (unpadded) regions; mm_dtype: MXU input dtype or None."""

    def kernel(i_ref, q1_ref, q2_ref,
               wi_ref, bi_ref,
               wq1_ref, bq1_ref,
               wq2_ref, bq2_ref,
               wt_ref,
               o_ref):
        # i_ref : (Bb, Kp, Di) block of image-region features (f32)
        # q*_ref: (Bb, Dq*)    blocks of question features (f32)
        # w*_ref: pre-transposed (D_in, H) FC weights (bf16 or f32, resident)
        # b*_ref: (1, H) f32 biases;  wt_ref: (1, H) effective weight-normed transform
        # o_ref : (Bb, Kp)     lane-dense attention (softmax over the Kp lane axis)
        Bb, Kp, Di = i_ref.shape
        H = wi_ref.shape[1]

        # Kp is a multiple of 8 -> this flatten is a free layout no-op.
        i_flat = i_ref[...].reshape(Bb * Kp, Di)
        q1 = q1_ref[...]
        q2 = q2_ref[...]
        if mm_dtype is not None:
            # In-kernel cast: MXU-rate win with no extra HBM pass over i.
            i_flat = i_flat.astype(mm_dtype)
            q1 = q1.astype(mm_dtype)
            q2 = q2.astype(mm_dtype)

        # --- image branch: one flattened (Bb*Kp, Di) x (Di, H) MXU matmul -----
        img_fa = jnp.maximum(
            jnp.dot(i_flat, wi_ref[...], preferred_element_type=jnp.float32)
            + bi_ref[...], 0.0)                                    # (Bb*Kp, H) f32

        # --- question branches: batched (Bb, Dq) x (Dq, H) matmuls ------------
        q1_fa = jnp.maximum(
            jnp.dot(q1, wq1_ref[...], preferred_element_type=jnp.float32)
            + bq1_ref[...], 0.0)                                   # (Bb, H)
        q2_fa = jnp.maximum(
            jnp.dot(q2, wq2_ref[...], preferred_element_type=jnp.float32)
            + bq2_ref[...], 0.0)                                   # (Bb, H)

        # Fold the (weight-normed) transform weight into the question product:
        # one small (Bb, H) multiply instead of a (Bb, Kp, H) one.
        qw = q1_fa * q2_fa * wt_ref[...]                           # (Bb, H)
        # TODO(synk): nn.Dropout inside the fusion module is identity at eval; omitted.

        # --- fused transform Linear(h_dim, 1): lane-dense logits --------------
        logits = jnp.sum(img_fa.reshape(Bb, Kp, H) * qw[:, None, :], axis=-1)  # (Bb, Kp)
        # Transform bias dropped: softmax over regions is shift-invariant.

        if valid_k < Kp:
            lane = jax.lax.broadcasted_iota(jnp.int32, (Bb, Kp), 1)
            logits = jnp.where(lane < valid_k, logits, jnp.float32(-1e30))

        # --- softmax over regions (lane axis), exact normalization ------------
        m = jnp.max(logits, axis=-1, keepdims=True)
        e = jnp.exp(logits - m)
        s = jnp.sum(e, axis=-1, keepdims=True)
        o_ref[...] = e / s

    return kernel


def _pick_block_b(B, K, requested=None):
    """Batch block: multiple of 8 (or full B), prefers >=2 grid steps and bb*K >= 256."""
    if (requested is not None and requested <= B and B % requested == 0
            and (requested % 8 == 0 or requested == B)):
        return requested
    cands = [c for c in range(8, B + 1, 8) if B % c == 0]
    if not cands:
        return B
    pool = [c for c in cands if B // c >= 2] or cands     # keep both v7x TCs busy
    big = [c for c in pool if c * K >= 256]                # fill the MXU rows
    return min(big) if big else max(pool)


def _pick_vmem_limit():
    """Generation-aware VMEM scoped limit (~85% of capacity, >= 32 MiB)."""
    try:
        cap = pltpu.get_tpu_info().vmem_capacity_bytes
        return max(32 << 20, min(int(cap * 0.85), cap - (8 << 20)))
    except Exception:
        return 64 << 20


def triple_one_way_top_down(i, q1, q2, params, *, block_b=None,
                            matmul_dtype=jnp.bfloat16):
    """Pallas forward.  matmul_dtype is the MXU input dtype for all three
    projections (bf16 recommended on every generation); None keeps them f32.
    Elementwise / softmax math is always f32."""
    B, K, Di = i.shape
    Dq1 = q1.shape[1]
    Dq2 = q2.shape[1]
    H = params["wi"].shape[1]

    # Pad regions to a multiple of 8 so flatten/unflatten reshapes are free;
    # padded-region logits are masked to -inf in the kernel.
    K_pad = ((K + 7) // 8) * 8
    if K_pad != K:
        i = jnp.pad(i, ((0, 0), (0, K_pad - K), (0, 0)))

    bb = _pick_block_b(B, K_pad, block_b)
    nb = B // bb

    # Fold weight-norm (dim=None -> norm over the whole weight) of the transform.
    v = params["wt_v"]                                    # (1, H)
    g = params["wt_g"]                                    # scalar
    wt_eff = (g * v / jnp.sqrt(jnp.sum(v * v))).reshape(1, H).astype(jnp.float32)

    # Weights resident in VMEM: cast once here (halves their footprint in bf16).
    if matmul_dtype is not None:
        wi_in = params["wi"].astype(matmul_dtype)
        wq1_in = params["wq1"].astype(matmul_dtype)
        wq2_in = params["wq2"].astype(matmul_dtype)
    else:
        wi_in, wq1_in, wq2_in = params["wi"], params["wq1"], params["wq2"]

    kernel = _make_kernel(K, matmul_dtype)
    vmem_limit = _pick_vmem_limit()

    def run(single_buffer_weights):
        def const_spec(shape):
            # Grid-invariant block (constant index_map) -> stays resident in VMEM.
            idx = lambda b: (0,) * len(shape)
            if single_buffer_weights:
                # Constant blocks: the second pipeline buffer is pure VMEM waste.
                return pl.BlockSpec(shape, idx, pipeline_mode=pl.Buffered(1))
            return pl.BlockSpec(shape, idx)

        return pl.pallas_call(
            kernel,
            out_shape=jax.ShapeDtypeStruct((B, K_pad), jnp.float32),
            grid_spec=pltpu.PrefetchScalarGridSpec(
                num_scalar_prefetch=0,
                grid=(nb,),
                in_specs=[
                    pl.BlockSpec((bb, K_pad, Di), lambda b: (b, 0, 0)),
                    pl.BlockSpec((bb, Dq1), lambda b: (b, 0)),
                    pl.BlockSpec((bb, Dq2), lambda b: (b, 0)),
                    const_spec((Di, H)), const_spec((1, H)),
                    const_spec((Dq1, H)), const_spec((1, H)),
                    const_spec((Dq2, H)), const_spec((1, H)),
                    const_spec((1, H)),
                ],
                out_specs=pl.BlockSpec((bb, K_pad), lambda b: (b, 0)),
            ),
            compiler_params=pltpu.CompilerParams(
                dimension_semantics=("parallel",),
                vmem_limit_bytes=vmem_limit,
            ),
        )(i, q1, q2,
          wi_in, params["bi"],
          wq1_in, params["bq1"],
          wq2_in, params["bq2"],
          wt_eff)

    try:
        out2d = run(True)
    except Exception:
        # Fallback if this JAX build rejects pipeline_mode=pl.Buffered(1).
        out2d = run(False)

    # Lane-dense (B, K_pad) in the kernel; drop padding and restore (B, K, 1).
    return out2d[:, :K, None]


def _reference(i, q1, q2, params):
    """Pure-JAX reference mirroring the PyTorch forward (incl. transform bias)."""
    v = params["wt_v"]
    g = params["wt_g"]
    wt = (g * v / jnp.sqrt(jnp.sum(v * v))).reshape(1, -1)
    img_fa = jax.nn.relu(jnp.einsum("bkd,dh->bkh", i, params["wi"]) + params["bi"])
    q1_fa = jax.nn.relu(q1 @ params["wq1"] + params["bq1"])[:, None, :]
    q2_fa = jax.nn.relu(q2 @ params["wq2"] + params["bq2"])[:, None, :]
    joint = img_fa * q1_fa * q2_fa
    logits = jnp.sum(joint * wt[None], axis=-1, keepdims=True) + params["bt"][0, 0]
    return jax.nn.softmax(logits, axis=1)


def _make_params(key, Di, Dq1, Dq2, H):
    keys = jax.random.split(key, 9)
    scale = 0.1
    return {
        # fusion FC weights stored pre-transposed as (D_in, H)
        "wi":  scale * jax.random.normal(keys[0], (Di, H), jnp.float32),
        "bi":  scale * jax.random.normal(keys[1], (1, H), jnp.float32),
        "wq1": scale * jax.random.normal(keys[2], (Dq1, H), jnp.float32),
        "bq1": scale * jax.random.normal(keys[3], (1, H), jnp.float32),
        "wq2": scale * jax.random.normal(keys[4], (Dq2, H), jnp.float32),
        "bq2": scale * jax.random.normal(keys[5], (1, H), jnp.float32),
        # weight-normed transform Linear(h_dim, 1): v (direction), g (magnitude), bias
        "wt_v": scale * jax.random.normal(keys[6], (1, H), jnp.float32),
        "wt_g": jnp.float32(1.5),
        "bt":  scale * jax.random.normal(keys[7], (1, 1), jnp.float32),
    }


if __name__ == "__main__":
    key = jax.random.PRNGKey(0)
    k_data, k_par, k_data2 = jax.random.split(key, 3)

    # --- main test: B=32, K=16 -> bb=16 (M=256/step), 2 grid steps ------------
    B, K = 32, 16
    Di, Dq1, Dq2, H = 32, 32, 32, 32
    kd = jax.random.split(k_data, 3)
    i = jax.random.normal(kd[0], (B, K, Di), jnp.float32)
    q1 = jax.random.normal(kd[1], (B, Dq1), jnp.float32)
    q2 = jax.random.normal(kd[2], (B, Dq2), jnp.float32)
    params = _make_params(k_par, Di, Dq1, Dq2, H)
    ref = _reference(i, q1, q2, params)

    # f32 matmul path: exact softmax division -> tight tolerance.
    out = triple_one_way_top_down(i, q1, q2, params, matmul_dtype=None)
    out = jax.block_until_ready(out)
    assert out.shape == (B, K, 1)
    assert jnp.allclose(out, ref, atol=1e-5, rtol=1e-5), "mismatch vs reference (f32)"
    assert jnp.allclose(jnp.sum(out, axis=1), 1.0, atol=1e-5), "softmax not normalized"

    # default bf16 MXU path (f32 accumulation / softmax).
    out_bf16 = triple_one_way_top_down(i, q1, q2, params)
    out_bf16 = jax.block_until_ready(out_bf16)
    assert jnp.allclose(out_bf16, ref, atol=2e-2, rtol=2e-2), "mismatch vs reference (bf16)"
    assert jnp.allclose(jnp.sum(out_bf16, axis=1), 1.0, atol=1e-5), "softmax not normalized (bf16)"

    # --- non-multiple-of-8 region count: exercises K padding + -inf masking ---
    K2 = 12
    kd2 = jax.random.split(k_data2, 3)
    i2 = jax.random.normal(kd2[0], (B, K2, Di), jnp.float32)
    q1b = jax.random.normal(kd2[1], (B, Dq1), jnp.float32)
    q2b = jax.random.normal(kd2[2], (B, Dq2), jnp.float32)
    ref2 = _reference(i2, q1b, q2b, params)
    out2 = triple_one_way_top_down(i2, q1b, q2b, params, matmul_dtype=None)
    out2 = jax.block_until_ready(out2)
    assert out2.shape == (B, K2, 1)
    assert jnp.allclose(out2, ref2, atol=1e-5, rtol=1e-5), "mismatch vs reference (padded K)"
    assert jnp.allclose(jnp.sum(out2, axis=1), 1.0, atol=1e-5), "softmax not normalized (padded K)"

    print("KERNEL_OK")
</pallas_src>

<mosaic_0001>
module attributes {stable_mosaic.version = 11 : i64} {
  func.func @kernel(%arg0: i32, %arg1: memref<16x16x32xf32, #tpu.memory_space<vmem>>, %arg2: memref<16x32xf32, #tpu.memory_space<vmem>>, %arg3: memref<16x32xf32, #tpu.memory_space<vmem>>, %arg4: memref<32x32xf32, #tpu.memory_space<vmem>>, %arg5: memref<1x32xf32, #tpu.memory_space<vmem>>, %arg6: memref<32x32xf32, #tpu.memory_space<vmem>>, %arg7: memref<1x32xf32, #tpu.memory_space<vmem>>, %arg8: memref<32x32xf32, #tpu.memory_space<vmem>>, %arg9: memref<1x32xf32, #tpu.memory_space<vmem>>, %arg10: memref<1x32xf32, #tpu.memory_space<vmem>>, %arg11: memref<16x16xf32, #tpu.memory_space<vmem>>) attributes {dimension_semantics = [#tpu.dimension_semantics<parallel>], iteration_bounds = array<i64: 2>, scalar_prefetch = 0 : i64, scratch_operands = 0 : i64, tpu.core_type = #tpu.core_type<tc>, window_params = [{transform_indices = @transform_0, window_bounds = array<i64: 16, 16, 32>}, {transform_indices = @transform_1, window_bounds = array<i64: 16, 32>}, {transform_indices = @transform_2, window_bounds = array<i64: 16, 32>}, {pipeline_mode = #tpu.pipeline_mode<synchronous>, transform_indices = @transform_3, window_bounds = array<i64: 32, 32>}, {pipeline_mode = #tpu.pipeline_mode<synchronous>, transform_indices = @transform_4, window_bounds = array<i64: 1, 32>}, {pipeline_mode = #tpu.pipeline_mode<synchronous>, transform_indices = @transform_5, window_bounds = array<i64: 32, 32>}, {pipeline_mode = #tpu.pipeline_mode<synchronous>, transform_indices = @transform_6, window_bounds = array<i64: 1, 32>}, {pipeline_mode = #tpu.pipeline_mode<synchronous>, transform_indices = @transform_7, window_bounds = array<i64: 32, 32>}, {pipeline_mode = #tpu.pipeline_mode<synchronous>, transform_indices = @transform_8, window_bounds = array<i64: 1, 32>}, {pipeline_mode = #tpu.pipeline_mode<synchronous>, transform_indices = @transform_9, window_bounds = array<i64: 1, 32>}, {transform_indices = @transform_10, window_bounds = array<i64: 16, 16>}]} {
    %c0 = arith.constant 0 : index
    %c0_0 = arith.constant 0 : index
    %c0_1 = arith.constant 0 : index
    %0 = vector.load %arg1[%c0, %c0_0, %c0_1] : memref<16x16x32xf32, #tpu.memory_space<vmem>>, vector<16x16x32xf32>
    %1 = vector.shape_cast %0 : vector<16x16x32xf32> to vector<256x32xf32>
    %c0_2 = arith.constant 0 : index
    %c0_3 = arith.constant 0 : index
    %2 = vector.load %arg2[%c0_2, %c0_3] : memref<16x32xf32, #tpu.memory_space<vmem>>, vector<16x32xf32>
    %c0_4 = arith.constant 0 : index
    %c0_5 = arith.constant 0 : index
    %3 = vector.load %arg3[%c0_4, %c0_5] : memref<16x32xf32, #tpu.memory_space<vmem>>, vector<16x32xf32>
    %c0_6 = arith.constant 0 : index
    %c0_7 = arith.constant 0 : index
    %4 = vector.load %arg4[%c0_6, %c0_7] : memref<32x32xf32, #tpu.memory_space<vmem>>, vector<32x32xf32>
    %cst = arith.constant dense<0.000000e+00> : vector<256x32xf32>
    %5 = tpu.matmul %1, %4, %cst {dimension_numbers = #tpu.dot_dimension_numbers<[1], [0], [0], [1], [0, 0, 1, 1], [], []>} : vector<256x32xf32>, vector<32x32xf32>, vector<256x32xf32> -> vector<256x32xf32>
    %c0_8 = arith.constant 0 : index
    %c0_9 = arith.constant 0 : index
    %6 = vector.load %arg5[%c0_8, %c0_9] : memref<1x32xf32, #tpu.memory_space<vmem>>, vector<1x32xf32>
    %7 = vector.broadcast %6 : vector<1x32xf32> to vector<256x32xf32>
    %8 = arith.addf %5, %7 : vector<256x32xf32>
    %cst_10 = arith.constant 0.000000e+00 : f32
    %9 = vector.broadcast %cst_10 : f32 to vector<256x32xf32>
    %10 = arith.maximumf %8, %9 : vector<256x32xf32>
    %c0_11 = arith.constant 0 : index
    %c0_12 = arith.constant 0 : index
    %11 = vector.load %arg6[%c0_11, %c0_12] : memref<32x32xf32, #tpu.memory_space<vmem>>, vector<32x32xf32>
    %cst_13 = arith.constant dense<0.000000e+00> : vector<16x32xf32>
    %12 = tpu.matmul %2, %11, %cst_13 {dimension_numbers = #tpu.dot_dimension_numbers<[1], [0], [0], [1], [0, 0, 1, 1], [], []>} : vector<16x32xf32>, vector<32x32xf32>, vector<16x32xf32> -> vector<16x32xf32>
    %c0_14 = arith.constant 0 : index
    %c0_15 = arith.constant 0 : index
    %13 = vector.load %arg7[%c0_14, %c0_15] : memref<1x32xf32, #tpu.memory_space<vmem>>, vector<1x32xf32>
    %14 = vector.broadcast %13 : vector<1x32xf32> to vector<16x32xf32>
    %15 = arith.addf %12, %14 : vector<16x32xf32>
    %cst_16 = arith.constant 0.000000e+00 : f32
    %16 = vector.broadcast %cst_16 : f32 to vector<16x32xf32>
    %17 = arith.maximumf %15, %16 : vector<16x32xf32>
    %c0_17 = arith.constant 0 : index
    %c0_18 = arith.constant 0 : index
    %18 = vector.load %arg8[%c0_17, %c0_18] : memref<32x32xf32, #tpu.memory_space<vmem>>, vector<32x32xf32>
    %cst_19 = arith.constant dense<0.000000e+00> : vector<16x32xf32>
    %19 = tpu.matmul %3, %18, %cst_19 {dimension_numbers = #tpu.dot_dimension_numbers<[1], [0], [0], [1], [0, 0, 1, 1], [], []>} : vector<16x32xf32>, vector<32x32xf32>, vector<16x32xf32> -> vector<16x32xf32>
    %c0_20 = arith.constant 0 : index
    %c0_21 = arith.constant 0 : index
    %20 = vector.load %arg9[%c0_20, %c0_21] : memref<1x32xf32, #tpu.memory_space<vmem>>, vector<1x32xf32>
    %21 = vector.broadcast %20 : vector<1x32xf32> to vector<16x32xf32>
    %22 = arith.addf %19, %21 : vector<16x32xf32>
    %cst_22 = arith.constant 0.000000e+00 : f32
    %23 = vector.broadcast %cst_22 : f32 to vector<16x32xf32>
    %24 = arith.maximumf %22, %23 : vector<16x32xf32>
    %25 = arith.mulf %17, %24 : vector<16x32xf32>
    %c0_23 = arith.constant 0 : index
    %c0_24 = arith.constant 0 : index
    %26 = vector.load %arg10[%c0_23, %c0_24] : memref<1x32xf32, #tpu.memory_space<vmem>>, vector<1x32xf32>
    %27 = vector.broadcast %26 : vector<1x32xf32> to vector<16x32xf32>
    %28 = arith.mulf %25, %27 : vector<16x32xf32>
    %29 = vector.shape_cast %10 : vector<256x32xf32> to vector<16x16x32xf32>
    %30 = vector.shape_cast %28 : vector<16x32xf32> to vector<16x1x32xf32>
    %31 = vector.broadcast %30 : vector<16x1x32xf32> to vector<16x16x32xf32>
    %32 = arith.mulf %29, %31 : vector<16x16x32xf32>
    %cst_25 = arith.constant dense<0.000000e+00> : vector<16x16xf32>
    %33 = vector.multi_reduction <add>, %32, %cst_25 [2] : vector<16x16x32xf32> to vector<16x16xf32>
    %cst_26 = arith.constant dense<0xFF800000> : vector<16xf32>
    %34 = vector.multi_reduction <maximumf>, %33, %cst_26 [1] : vector<16x16xf32> to vector<16xf32>
    %35 = vector.shape_cast %34 : vector<16xf32> to vector<16x1xf32>
    %36 = vector.broadcast %35 : vector<16x1xf32> to vector<16x16xf32>
    %37 = arith.subf %33, %36 : vector<16x16xf32>
    %38 = math.exp %37 : vector<16x16xf32>
    %cst_27 = arith.constant dense<0.000000e+00> : vector<16xf32>
    %39 = vector.multi_reduction <add>, %38, %cst_27 [1] : vector<16x16xf32> to vector<16xf32>
    %40 = vector.shape_cast %39 : vector<16xf32> to vector<16x1xf32>
    %41 = vector.broadcast %40 : vector<16x1xf32> to vector<16x16xf32>
    %42 = arith.divf %38, %41 : vector<16x16xf32>
    %c0_28 = arith.constant 0 : index
    %c0_29 = arith.constant 0 : index
    %43 = vector.load %arg11[%c0_28, %c0_29] : memref<16x16xf32, #tpu.memory_space<vmem>>, vector<16x16xf32>
    tpu.vector_store %arg11[%c0_28, %c0_29], %42 {strides = array<i32>} : memref<16x16xf32, #tpu.memory_space<vmem>>, vector<16x16xf32>,
    return
  }
  func.func @transform_0(%arg0: i32) -> (i32, i32, i32) {
    %c0_i32 = arith.constant 0 : i32
    %c0_i32_0 = arith.constant 0 : i32
    %c0_i32_1 = arith.constant 0 : i32
    return %arg0, %c0_i32, %c0_i32_0 : i32, i32, i32
  }
  func.func @transform_1(%arg0: i32) -> (i32, i32) {
    %c0_i32 = arith.constant 0 : i32
    %c0_i32_0 = arith.constant 0 : i32
    return %arg0, %c0_i32 : i32, i32
  }
  func.func @transform_2(%arg0: i32) -> (i32, i32) {
    %c0_i32 = arith.constant 0 : i32
    %c0_i32_0 = arith.constant 0 : i32
    return %arg0, %c0_i32 : i32, i32
  }
  func.func @transform_3(%arg0: i32) -> (i32, i32) {
    %c0_i32 = arith.constant 0 : i32
    %c0_i32_0 = arith.constant 0 : i32
    %c0_i32_1 = arith.constant 0 : i32
    return %c0_i32, %c0_i32_0 : i32, i32
  }
  func.func @transform_4(%arg0: i32) -> (i32, i32) {
    %c0_i32 = arith.constant 0 : i32
    %c0_i32_0 = arith.constant 0 : i32
    %c0_i32_1 = arith.constant 0 : i32
    return %c0_i32, %c0_i32_0 : i32, i32
  }
  func.func @transform_5(%arg0: i32) -> (i32, i32) {
    %c0_i32 = arith.constant 0 : i32
    %c0_i32_0 = arith.constant 0 : i32
    %c0_i32_1 = arith.constant 0 : i32
    return %c0_i32, %c0_i32_0 : i32, i32
  }
  func.func @transform_6(%arg0: i32) -> (i32, i32) {
    %c0_i32 = arith.constant 0 : i32
    %c0_i32_0 = arith.constant 0 : i32
    %c0_i32_1 = arith.constant 0 : i32
    return %c0_i32, %c0_i32_0 : i32, i32
  }
  func.func @transform_7(%arg0: i32) -> (i32, i32) {
    %c0_i32 = arith.constant 0 : i32
    %c0_i32_0 = arith.constant 0 : i32
    %c0_i32_1 = arith.constant 0 : i32
    return %c0_i32, %c0_i32_0 : i32, i32
  }
  func.func @transform_8(%arg0: i32) -> (i32, i32) {
    %c0_i32 = arith.constant 0 : i32
    %c0_i32_0 = arith.constant 0 : i32
    %c0_i32_1 = arith.constant 0 : i32
    return %c0_i32, %c0_i32_0 : i32, i32
  }
  func.func @transform_9(%arg0: i32) -> (i32, i32) {
    %c0_i32 = arith.constant 0 : i32
    %c0_i32_0 = arith.constant 0 : i32
    %c0_i32_1 = arith.constant 0 : i32
    return %c0_i32, %c0_i32_0 : i32, i32
  }
  func.func @transform_10(%arg0: i32) -> (i32, i32) {
    %c0_i32 = arith.constant 0 : i32
    %c0_i32_0 = arith.constant 0 : i32
    return %arg0, %c0_i32 : i32, i32
  }
}

module attributes {stable_mosaic.version = 11 : i64} {
  func.func @kernel(%arg0: i32, %arg1: memref<16x16x32xf32, #tpu.memory_space<vmem>>, %arg2: memref<16x32xf32, #tpu.memory_space<vmem>>, %arg3: memref<16x32xf32, #tpu.memory_space<vmem>>, %arg4: memref<32x32xf32, #tpu.memory_space<vmem>>, %arg5: memref<1x32xf32, #tpu.memory_space<vmem>>, %arg6: memref<32x32xf32, #tpu.memory_space<vmem>>, %arg7: memref<1x32xf32, #tpu.memory_space<vmem>>, %arg8: memref<32x32xf32, #tpu.memory_space<vmem>>, %arg9: memref<1x32xf32, #tpu.memory_space<vmem>>, %arg10: memref<1x32xf32, #tpu.memory_space<vmem>>, %arg11: memref<16x16xf32, #tpu.memory_space<vmem>>) attributes {dimension_semantics = [#tpu.dimension_semantics<parallel>], iteration_bounds = array<i64: 2>, scalar_prefetch = 0 : i64, scratch_operands = 0 : i64, tpu.core_type = #tpu.core_type<tc>, window_params = [{transform_indices = @transform_0, window_bounds = array<i64: 16, 16, 32>}, {transform_indices = @transform_1, window_bounds = array<i64: 16, 32>}, {transform_indices = @transform_2, window_bounds = array<i64: 16, 32>}, {pipeline_mode = #tpu.pipeline_mode<synchronous>, transform_indices = @transform_3, window_bounds = array<i64: 32, 32>}, {pipeline_mode = #tpu.pipeline_mode<synchronous>, transform_indices = @transform_4, window_bounds = array<i64: 1, 32>}, {pipeline_mode = #tpu.pipeline_mode<synchronous>, transform_indices = @transform_5, window_bounds = array<i64: 32, 32>}, {pipeline_mode = #tpu.pipeline_mode<synchronous>, transform_indices = @transform_6, window_bounds = array<i64: 1, 32>}, {pipeline_mode = #tpu.pipeline_mode<synchronous>, transform_indices = @transform_7, window_bounds = array<i64: 32, 32>}, {pipeline_mode = #tpu.pipeline_mode<synchronous>, transform_indices = @transform_8, window_bounds = array<i64: 1, 32>}, {pipeline_mode = #tpu.pipeline_mode<synchronous>, transform_indices = @transform_9, window_bounds = array<i64: 1, 32>}, {transform_indices = @transform_10, window_bounds = array<i64: 16, 16>}]} {
    %c0 = arith.constant 0 : index
    %c0_0 = arith.constant 0 : index
    %c0_1 = arith.constant 0 : index
    %0 = vector.load %arg1[%c0, %c0_0, %c0_1] : memref<16x16x32xf32, #tpu.memory_space<vmem>>, vector<16x16x32xf32>
    %1 = vector.shape_cast %0 : vector<16x16x32xf32> to vector<256x32xf32>
    %c0_2 = arith.constant 0 : index
    %c0_3 = arith.constant 0 : index
    %2 = vector.load %arg2[%c0_2, %c0_3] : memref<16x32xf32, #tpu.memory_space<vmem>>, vector<16x32xf32>
    %c0_4 = arith.constant 0 : index
    %c0_5 = arith.constant 0 : index
    %3 = vector.load %arg3[%c0_4, %c0_5] : memref<16x32xf32, #tpu.memory_space<vmem>>, vector<16x32xf32>
    %c0_6 = arith.constant 0 : index
    %c0_7 = arith.constant 0 : index
    %4 = vector.load %arg4[%c0_6, %c0_7] : memref<32x32xf32, #tpu.memory_space<vmem>>, vector<32x32xf32>
    %cst = arith.constant dense<0.000000e+00> : vector<256x32xf32>
    %5 = tpu.matmul %1, %4, %cst {dimension_numbers = #tpu.dot_dimension_numbers<[1], [0], [0], [1], [0, 0, 1, 1], [], []>} : vector<256x32xf32>, vector<32x32xf32>, vector<256x32xf32> -> vector<256x32xf32>
    %c0_8 = arith.constant 0 : index
    %c0_9 = arith.constant 0 : index
    %6 = vector.load %arg5[%c0_8, %c0_9] : memref<1x32xf32, #tpu.memory_space<vmem>>, vector<1x32xf32>
    %7 = vector.broadcast %6 : vector<1x32xf32> to vector<256x32xf32>
    %8 = arith.addf %5, %7 : vector<256x32xf32>
    %cst_10 = arith.constant 0.000000e+00 : f32
    %9 = vector.broadcast %cst_10 : f32 to vector<256x32xf32>
    %10 = arith.maximumf %8, %9 : vector<256x32xf32>
    %c0_11 = arith.constant 0 : index
    %c0_12 = arith.constant 0 : index
    %11 = vector.load %arg6[%c0_11, %c0_12] : memref<32x32xf32, #tpu.memory_space<vmem>>, vector<32x32xf32>
    %cst_13 = arith.constant dense<0.000000e+00> : vector<16x32xf32>
    %12 = tpu.matmul %2, %11, %cst_13 {dimension_numbers = #tpu.dot_dimension_numbers<[1], [0], [0], [1], [0, 0, 1, 1], [], []>} : vector<16x32xf32>, vector<32x32xf32>, vector<16x32xf32> -> vector<16x32xf32>
    %c0_14 = arith.constant 0 : index
    %c0_15 = arith.constant 0 : index
    %13 = vector.load %arg7[%c0_14, %c0_15] : memref<1x32xf32, #tpu.memory_space<vmem>>, vector<1x32xf32>
    %14 = vector.broadcast %13 : vector<1x32xf32> to vector<16x32xf32>
    %15 = arith.addf %12, %14 : vector<16x32xf32>
    %cst_16 = arith.constant 0.000000e+00 : f32
    %16 = vector.broadcast %cst_16 : f32 to vector<16x32xf32>
    %17 = arith.maximumf %15, %16 : vector<16x32xf32>
    %c0_17 = arith.constant 0 : index
    %c0_18 = arith.constant 0 : index
    %18 = vector.load %arg8[%c0_17, %c0_18] : memref<32x32xf32, #tpu.memory_space<vmem>>, vector<32x32xf32>
    %cst_19 = arith.constant dense<0.000000e+00> : vector<16x32xf32>
    %19 = tpu.matmul %3, %18, %cst_19 {dimension_numbers = #tpu.dot_dimension_numbers<[1], [0], [0], [1], [0, 0, 1, 1], [], []>} : vector<16x32xf32>, vector<32x32xf32>, vector<16x32xf32> -> vector<16x32xf32>
    %c0_20 = arith.constant 0 : index
    %c0_21 = arith.constant 0 : index
    %20 = vector.load %arg9[%c0_20, %c0_21] : memref<1x32xf32, #tpu.memory_space<vmem>>, vector<1x32xf32>
    %21 = vector.broadcast %20 : vector<1x32xf32> to vector<16x32xf32>
    %22 = arith.addf %19, %21 : vector<16x32xf32>
    %cst_22 = arith.constant 0.000000e+00 : f32
    %23 = vector.broadcast %cst_22 : f32 to vector<16x32xf32>
    %24 = arith.maximumf %22, %23 : vector<16x32xf32>
    %25 = arith.mulf %17, %24 : vector<16x32xf32>
    %c0_23 = arith.constant 0 : index
    %c0_24 = arith.constant 0 : index
    %26 = vector.load %arg10[%c0_23, %c0_24] : memref<1x32xf32, #tpu.memory_space<vmem>>, vector<1x32xf32>
    %27 = vector.broadcast %26 : vector<1x32xf32> to vector<16x32xf32>
    %28 = arith.mulf %25, %27 : vector<16x32xf32>
    %29 = vector.shape_cast %10 : vector<256x32xf32> to vector<16x16x32xf32>
    %30 = vector.shape_cast %28 : vector<16x32xf32> to vector<16x1x32xf32>
    %31 = vector.broadcast %30 : vector<16x1x32xf32> to vector<16x16x32xf32>
    %32 = arith.mulf %29, %31 : vector<16x16x32xf32>
    %cst_25 = arith.constant dense<0.000000e+00> : vector<16x16xf32>
    %33 = vector.multi_reduction <add>, %32, %cst_25 [2] : vector<16x16x32xf32> to vector<16x16xf32>
    %cst_26 = arith.constant dense<0xFF800000> : vector<16xf32>
    %34 = vector.multi_reduction <maximumf>, %33, %cst_26 [1] : vector<16x16xf32> to vector<16xf32>
    %35 = vector.shape_cast %34 : vector<16xf32> to vector<16x1xf32>
    %36 = vector.broadcast %35 : vector<16x1xf32> to vector<16x16xf32>
    %37 = arith.subf %33, %36 : vector<16x16xf32>
    %38 = math.exp %37 : vector<16x16xf32>
    %cst_27 = arith.constant dense<0.000000e+00> : vector<16xf32>
    %39 = vector.multi_reduction <add>, %38, %cst_27 [1] : vector<16x16xf32> to vector<16xf32>
    %40 = vector.shape_cast %39 : vector<16xf32> to vector<16x1xf32>
    %41 = vector.broadcast %40 : vector<16x1xf32> to vector<16x16xf32>
    %42 = arith.divf %38, %41 : vector<16x16xf32>
    %c0_28 = arith.constant 0 : index
    %c0_29 = arith.constant 0 : index
    %43 = vector.load %arg11[%c0_28, %c0_29] : memref<16x16xf32, #tpu.memory_space<vmem>>, vector<16x16xf32>
    tpu.vector_store %arg11[%c0_28, %c0_29], %42 {strides = array<i32>} : memref<16x16xf32, #tpu.memory_space<vmem>>, vector<16x16xf32>,
    return
  }
  func.func @transform_0(%arg0: i32) -> (i32, i32, i32) {
    %c0_i32 = arith.constant 0 : i32
    %c0_i32_0 = arith.constant 0 : i32
    %c0_i32_1 = arith.constant 0 : i32
    return %arg0, %c0_i32, %c0_i32_0 : i32, i32, i32
  }
  func.func @transform_1(%arg0: i32) -> (i32, i32) {
    %c0_i32 = arith.constant 0 : i32
    %c0_i32_0 = arith.constant 0 : i32
    return %arg0, %c0_i32 : i32, i32
  }
  func.func @transform_2(%arg0: i32) -> (i32, i32) {
    %c0_i32 = arith.constant 0 : i32
    %c0_i32_0 = arith.constant 0 : i32
    return %arg0, %c0_i32 : i32, i32
  }
  func.func @transform_3(%arg0: i32) -> (i32, i32) {
    %c0_i32 = arith.constant 0 : i32
    %c0_i32_0 = arith.constant 0 : i32
    %c0_i32_1 = arith.constant 0 : i32
    return %c0_i32, %c0_i32_0 : i32, i32
  }
  func.func @transform_4(%arg0: i32) -> (i32, i32) {
    %c0_i32 = arith.constant 0 : i32
    %c0_i32_0 = arith.constant 0 : i32
    %c0_i32_1 = arith.constant 0 : i32
    return %c0_i32, %c0_i32_0 : i32, i32
  }
  func.func @transform_5(%arg0: i32) -> (i32, i32) {
    %c0_i32 = arith.constant 0 : i32
    %c0_i32_0 = arith.constant 0 : i32
    %c0_i32_1 = arith.constant 0 : i32
    return %c0_i32, %c0_i32_0 : i32, i32
  }
  func.func @transform_6(%arg0: i32) -> (i32, i32) {
    %c0_i32 = arith.constant 0 : i32
    %c0_i32_0 = arith.constant 0 : i32
    %c0_i32_1 = arith.constant 0 : i32
    return %c0_i32, %c0_i32_0 : i32, i32
  }
  func.func @transform_7(%arg0: i32) -> (i32, i32) {
    %c0_i32 = arith.constant 0 : i32
    %c0_i32_0 = arith.constant 0 : i32
    %c0_i32_1 = arith.constant 0 : i32
    return %c0_i32, %c0_i32_0 : i32, i32
  }
  func.func @transform_8(%arg0: i32) -> (i32, i32) {
    %c0_i32 = arith.constant 0 : i32
    %c0_i32_0 = arith.constant 0 : i32
    %c0_i32_1 = arith.constant 0 : i32
    return %c0_i32, %c0_i32_0 : i32, i32
  }
  func.func @transform_9(%arg0: i32) -> (i32, i32) {
    %c0_i32 = arith.constant 0 : i32
    %c0_i32_0 = arith.constant 0 : i32
    %c0_i32_1 = arith.constant 0 : i32
    return %c0_i32, %c0_i32_0 : i32, i32
  }
  func.func @transform_10(%arg0: i32) -> (i32, i32) {
    %c0_i32 = arith.constant 0 : i32
    %c0_i32_0 = arith.constant 0 : i32
    return %arg0, %c0_i32 : i32, i32
  }
}

</mosaic_0001>

<llo_original>
// kernel: tpu_custom_call.1
$region0: #{tpu_custom_call.1}
  #allocation0 [shape = 'u32[]', space=smem, size = 0x4, offset = 0x4, fixed_abs, tag = 'smem constant byte address 0x4 - core index']
  #allocation1 [shape = 'u32[144,128]{1,0:T(1,128)}', space=vmem, size = 0x12000, scoped, tag = 'internal scratch']
  %s0 = inlined_call_operand.hbm [shape: f32[32,16,32], index: 0, kind: input, shape index: {}]
  %s1 = inlined_call_operand.hbm [shape: f32[32,32], index: 1, kind: input, shape index: {}]
  %s2 = inlined_call_operand.hbm [shape: f32[32,32], index: 2, kind: input, shape index: {}]
  %s3 = inlined_call_operand.hbm [shape: f32[32,32], index: 3, kind: input, shape index: {}]
  %s4 = inlined_call_operand.hbm [shape: f32[1,32], index: 4, kind: input, shape index: {}]
  %s5 = inlined_call_operand.hbm [shape: f32[32,32], index: 5, kind: input, shape index: {}]
  %s6 = inlined_call_operand.hbm [shape: f32[1,32], index: 6, kind: input, shape index: {}]
  %s7 = inlined_call_operand.hbm [shape: f32[32,32], index: 7, kind: input, shape index: {}]
  %s8 = inlined_call_operand.hbm [shape: f32[1,32], index: 8, kind: input, shape index: {}]
  %s9 = inlined_call_operand.hbm [shape: f32[1,32], index: 9, kind: input, shape index: {}]
  %s10 = inlined_call_operand.hbm [shape: f32[32,16], index: 10, kind: output, shape index: {}]
  %s11 = sld [smem:[#allocation0]]
  $region113: #{tpu_custom_call.1} parent=0
    _
  %s13 = ssub.s32 1, %s11
  %s14 = scalar_select 0, %s13, %s11
  $region1: #{tpu_custom_call.1} parent=0
    #allocation2 [shape = 'u8[262144]{0}', space=vmem, size = 0x40000, scoped, tag = 'input window, operand 0']
    #allocation3 [shape = 's32[2]{0}', space=sflag, size = 0x8, scoped, tag = 'scoped memory for tpu_custom_call.1']
    #allocation4 [shape = 's32[2]{0}', space=sflag, size = 0x8, scoped, tag = 'scoped memory for tpu_custom_call.1']
    #allocation5 [shape = 'u8[16384]{0}', space=vmem, size = 0x4000, scoped, tag = 'input window, operand 1']
    #allocation6 [shape = 's32[2]{0}', space=sflag, size = 0x8, scoped, tag = 'scoped memory for tpu_custom_call.1']
    #allocation7 [shape = 'u8[16384]{0}', space=vmem, size = 0x4000, scoped, tag = 'input window, operand 2']
    #allocation8 [shape = 'u8[16384]{0}', space=vmem, size = 0x4000, scoped, tag = 'input window, operand 3, single buffered']
    #allocation9 [shape = 's32[1]{0}', space=sflag, size = 0x4, scoped, tag = 'scoped memory for tpu_custom_call.1']
    #allocation10 [shape = 'u8[512]{0}', space=vmem, size = 0x400, scoped, tag = 'input window, operand 4, single buffered']
    #allocation11 [shape = 'u8[16384]{0}', space=vmem, size = 0x4000, scoped, tag = 'input window, operand 5, single buffered']
    #allocation12 [shape = 's32[1]{0}', space=sflag, size = 0x4, scoped, tag = 'scoped memory for tpu_custom_call.1']
    #allocation13 [shape = 'u8[512]{0}', space=vmem, size = 0x400, scoped, tag = 'input window, operand 6, single buffered']
    #allocation14 [shape = 'u8[16384]{0}', space=vmem, size = 0x4000, scoped, tag = 'input window, operand 7, single buffered']
    #allocation15 [shape = 's32[1]{0}', space=sflag, size = 0x4, scoped, tag = 'scoped memory for tpu_custom_call.1']
    #allocation16 [shape = 'u8[512]{0}', space=vmem, size = 0x400, scoped, tag = 'input window, operand 8, single buffered']
    #allocation17 [shape = 'u8[512]{0}', space=vmem, size = 0x400, scoped, tag = 'input window, operand 9, single buffered']
    #allocation18 [shape = 's32[1]{0}', space=sflag, size = 0x4, scoped, tag = 'scoped memory for tpu_custom_call.1']
    #allocation19 [shape = 'u8[16384]{0}', space=vmem, size = 0x4000, scoped, tag = 'output window, operand 0']
    %15 = vsyncpa [#allocation3], 0
    %s16 = scalar_lea.sflag [#allocation3], 1
    %17 = vsyncpa %s16, 0
    %18 = vsyncpa [#allocation6], 0
    %s19 = scalar_lea.sflag [#allocation6], 1
    %20 = vsyncpa %s19, 0
    %21 = vsyncpa [#allocation9], 0
    %22 = vsyncpa [#allocation12], 0
    %23 = vsyncpa [#allocation15], 0
    %24 = vsyncpa [#allocation18], 0
    %25 = vsyncpa [#allocation4], 0
    %s26 = scalar_lea.sflag [#allocation4], 1
    %27 = vsyncpa %s26, 0
    loop: start=0, step=1, limit=4
    $region2: #{tpu_custom_call.1} parent=1 // loop_pre_header
      _
    $region3: #{tpu_custom_call.1} parent=1 // loop_header
      %s29 = sphi 0, %s33
      %p30 = scmp.ge.s32.totalorder %s29, 4
      %s39 = sphi 0, %s41
      %s42 = sphi 0, %s39
      %s43 = sphi 0, %s42
      %s59 = sphi 0, %s43
      %s65 = sphi 0, %s67
      %s68 = sphi 0, %s65
      %s69 = sphi 0, %s68
      %s85 = sphi 0, %s69
      %s91 = sphi 0, %s93
      %s94 = sphi 0, %s91
      %s95 = sphi 0, %s94
      %s111 = sphi 0, %s95
      %s115 = sphi 0, %s115
      %s117 = sphi 0, %s115
      %s118 = sphi 0, %s117
      %s132 = sphi 0, %s118
      %s136 = sphi 0, %s136
      %s138 = sphi 0, %s136
      %s139 = sphi 0, %s138
      %s153 = sphi 0, %s139
      %s157 = sphi 0, %s157
      %s159 = sphi 0, %s157
      %s160 = sphi 0, %s159
      %s174 = sphi 0, %s160
      %s178 = sphi 0, %s178
      %s180 = sphi 0, %s178
      %s181 = sphi 0, %s180
      %s195 = sphi 0, %s181
      %s199 = sphi 0, %s199
      %s201 = sphi 0, %s199
      %s202 = sphi 0, %s201
      %s216 = sphi 0, %s202
      %s220 = sphi 0, %s220
      %s222 = sphi 0, %s220
      %s223 = sphi 0, %s222
      %s237 = sphi 0, %s223
      %s241 = sphi 0, %s241
      %s243 = sphi 0, %s241
      %s244 = sphi 0, %s243
      %s258 = sphi 0, %s244
      %s264 = sphi 0, %s266
      %s267 = sphi 0, %s264
      %s268 = sphi 0, %s267
      %s284 = sphi 0, %s268
    $region4: #{tpu_custom_call.1} parent=1 // loop_header_branch
      %32 = sbr.rel (%p30) target = $region8
    $region5: #{tpu_custom_call.1} parent=1 // loop_body
      %s34 = ssub.s32 %s29, 1
      %s35 = ssub.s32 %s29, 2
      %s36 = sadd.s32 %s29, 1
      %s37 = ssub.s32 %s29, %s36
      %p38 = scmp.eq.s32.totalorder %s37, 0
      %s40 = sadd.s32 %s39, 1
      %s41 = scalar_select %p38, %s39, %s40
      %p44 = pneg %p38
      %p45 = scmp.eq.s32.totalorder %s29, 1
      %p46 = por %p44, %p45
      %p47 = scmp.ne.s32.totalorder %s39, %s42
      %p48 = scmp.eq.s32.totalorder %s29, 0
      %p49 = por %p47, %p48
      %p50 = scmp.ne.s32.totalorder %s39, %s42
      %p51 = scmp.eq.s32.totalorder %s34, 1
      %p52 = por %p50, %p51
      %p53 = scmp.ne.s32.totalorder %s42, %s43
      %p54 = scmp.eq.s32.totalorder %s34, 0
      %p55 = por %p53, %p54
      %p56 = scmp.ne.s32.totalorder %s42, %s43
      %p57 = scmp.eq.s32.totalorder %s35, 1
      %p58 = por %p56, %p57
      %p60 = scmp.ne.s32.totalorder %s43, %s59
      %p61 = scmp.eq.s32.totalorder %s35, 0
      %p62 = por %p60, %p61
      %s63 = ssub.s32 %s29, %s36
      %p64 = scmp.eq.s32.totalorder %s63, 0
      %s66 = sadd.s32 %s65, 1
      %s67 = scalar_select %p64, %s65, %s66
      %p70 = pneg %p64
      %p71 = scmp.eq.s32.totalorder %s29, 1
      %p72 = por %p70, %p71
      %p73 = scmp.ne.s32.totalorder %s65, %s68
      %p74 = scmp.eq.s32.totalorder %s29, 0
      %p75 = por %p73, %p74
      %p76 = scmp.ne.s32.totalorder %s65, %s68
      %p77 = scmp.eq.s32.totalorder %s34, 1
      %p78 = por %p76, %p77
      %p79 = scmp.ne.s32.totalorder %s68, %s69
      %p80 = scmp.eq.s32.totalorder %s34, 0
      %p81 = por %p79, %p80
      %p82 = scmp.ne.s32.totalorder %s68, %s69
      %p83 = scmp.eq.s32.totalorder %s35, 1
      %p84 = por %p82, %p83
      %p86 = scmp.ne.s32.totalorder %s69, %s85
      %p87 = scmp.eq.s32.totalorder %s35, 0
      %p88 = por %p86, %p87
      %s89 = ssub.s32 %s29, %s36
      %p90 = scmp.eq.s32.totalorder %s89, 0
      %s92 = sadd.s32 %s91, 1
      %s93 = scalar_select %p90, %s91, %s92
      %p96 = pneg %p90
      %p97 = scmp.eq.s32.totalorder %s29, 1
      %p98 = por %p96, %p97
      %p99 = scmp.ne.s32.totalorder %s91, %s94
      %p100 = scmp.eq.s32.totalorder %s29, 0
      %p101 = por %p99, %p100
      %p102 = scmp.ne.s32.totalorder %s91, %s94
      %p103 = scmp.eq.s32.totalorder %s34, 1
      %p104 = por %p102, %p103
      %p105 = scmp.ne.s32.totalorder %s94, %s95
      %p106 = scmp.eq.s32.totalorder %s34, 0
      %p107 = por %p105, %p106
      %p108 = scmp.ne.s32.totalorder %s94, %s95
      %p109 = scmp.eq.s32.totalorder %s35, 1
      %p110 = por %p108, %p109
      %p112 = scmp.ne.s32.totalorder %s95, %s111
      %p113 = scmp.eq.s32.totalorder %s35, 0
      %p114 = por %p112, %p113
      %s116 = sadd.s32 %s115, 1
      %p119 = scmp.eq.s32.totalorder %s29, 1
      %p120 = scmp.ne.s32.totalorder %s115, %s117
      %p121 = scmp.eq.s32.totalorder %s29, 0
      %p122 = por %p120, %p121
      %p123 = scmp.ne.s32.totalorder %s115, %s117
      %p124 = scmp.eq.s32.totalorder %s34, 1
      %p125 = por %p123, %p124
      %p126 = scmp.ne.s32.totalorder %s117, %s118
      %p127 = scmp.eq.s32.totalorder %s34, 0
      %p128 = por %p126, %p127
      %p129 = scmp.ne.s32.totalorder %s117, %s118
      %p130 = scmp.eq.s32.totalorder %s35, 1
      %p131 = por %p129, %p130
      %p133 = scmp.ne.s32.totalorder %s118, %s132
      %p134 = scmp.eq.s32.totalorder %s35, 0
      %p135 = por %p133, %p134
      %s137 = sadd.s32 %s136, 1
      %p140 = scmp.eq.s32.totalorder %s29, 1
      %p141 = scmp.ne.s32.totalorder %s136, %s138
      %p142 = scmp.eq.s32.totalorder %s29, 0
      %p143 = por %p141, %p142
      %p144 = scmp.ne.s32.totalorder %s136, %s138
      %p145 = scmp.eq.s32.totalorder %s34, 1
      %p146 = por %p144, %p145
      %p147 = scmp.ne.s32.totalorder %s138, %s139
      %p148 = scmp.eq.s32.totalorder %s34, 0
      %p149 = por %p147, %p148
      %p150 = scmp.ne.s32.totalorder %s138, %s139
      %p151 = scmp.eq.s32.totalorder %s35, 1
      %p152 = por %p150, %p151
      %p154 = scmp.ne.s32.totalorder %s139, %s153
      %p155 = scmp.eq.s32.totalorder %s35, 0
      %p156 = por %p154, %p155
      %s158 = sadd.s32 %s157, 1
      %p161 = scmp.eq.s32.totalorder %s29, 1
      %p162 = scmp.ne.s32.totalorder %s157, %s159
      %p163 = scmp.eq.s32.totalorder %s29, 0
      %p164 = por %p162, %p163
      %p165 = scmp.ne.s32.totalorder %s157, %s159
      %p166 = scmp.eq.s32.totalorder %s34, 1
      %p167 = por %p165, %p166
      %p168 = scmp.ne.s32.totalorder %s159, %s160
      %p169 = scmp.eq.s32.totalorder %s34, 0
      %p170 = por %p168, %p169
      %p171 = scmp.ne.s32.totalorder %s159, %s160
      %p172 = scmp.eq.s32.totalorder %s35, 1
      %p173 = por %p171, %p172
      %p175 = scmp.ne.s32.totalorder %s160, %s174
      %p176 = scmp.eq.s32.totalorder %s35, 0
      %p177 = por %p175, %p176
      %s179 = sadd.s32 %s178, 1
      %p182 = scmp.eq.s32.totalorder %s29, 1
      %p183 = scmp.ne.s32.totalorder %s178, %s180
      %p184 = scmp.eq.s32.totalorder %s29, 0
      %p185 = por %p183, %p184
      %p186 = scmp.ne.s32.totalorder %s178, %s180
      %p187 = scmp.eq.s32.totalorder %s34, 1
      %p188 = por %p186, %p187
      %p189 = scmp.ne.s32.totalorder %s180, %s181
      %p190 = scmp.eq.s32.totalorder %s34, 0
      %p191 = por %p189, %p190
      %p192 = scmp.ne.s32.totalorder %s180, %s181
      %p193 = scmp.eq.s32.totalorder %s35, 1
      %p194 = por %p192, %p193
      %p196 = scmp.ne.s32.totalorder %s181, %s195
      %p197 = scmp.eq.s32.totalorder %s35, 0
      %p198 = por %p196, %p197
      %s200 = sadd.s32 %s199, 1
      %p203 = scmp.eq.s32.totalorder %s29, 1
      %p204 = scmp.ne.s32.totalorder %s199, %s201
      %p205 = scmp.eq.s32.totalorder %s29, 0
      %p206 = por %p204, %p205
      %p207 = scmp.ne.s32.totalorder %s199, %s201
      %p208 = scmp.eq.s32.totalorder %s34, 1
      %p209 = por %p207, %p208
      %p210 = scmp.ne.s32.totalorder %s201, %s202
      %p211 = scmp.eq.s32.totalorder %s34, 0
      %p212 = por %p210, %p211
      %p213 = scmp.ne.s32.totalorder %s201, %s202
      %p214 = scmp.eq.s32.totalorder %s35, 1
      %p215 = por %p213, %p214
      %p217 = scmp.ne.s32.totalorder %s202, %s216
      %p218 = scmp.eq.s32.totalorder %s35, 0
      %p219 = por %p217, %p218
      %s221 = sadd.s32 %s220, 1
      %p224 = scmp.eq.s32.totalorder %s29, 1
      %p225 = scmp.ne.s32.totalorder %s220, %s222
      %p226 = scmp.eq.s32.totalorder %s29, 0
      %p227 = por %p225, %p226
      %p228 = scmp.ne.s32.totalorder %s220, %s222
      %p229 = scmp.eq.s32.totalorder %s34, 1
      %p230 = por %p228, %p229
      %p231 = scmp.ne.s32.totalorder %s222, %s223
      %p232 = scmp.eq.s32.totalorder %s34, 0
      %p233 = por %p231, %p232
      %p234 = scmp.ne.s32.totalorder %s222, %s223
      %p235 = scmp.eq.s32.totalorder %s35, 1
      %p236 = por %p234, %p235
      %p238 = scmp.ne.s32.totalorder %s223, %s237
      %p239 = scmp.eq.s32.totalorder %s35, 0
      %p240 = por %p238, %p239
      %s242 = sadd.s32 %s241, 1
      %p245 = scmp.eq.s32.totalorder %s29, 1
      %p246 = scmp.ne.s32.totalorder %s241, %s243
      %p247 = scmp.eq.s32.totalorder %s29, 0
      %p248 = por %p246, %p247
      %p249 = scmp.ne.s32.totalorder %s241, %s243
      %p250 = scmp.eq.s32.totalorder %s34, 1
      %p251 = por %p249, %p250
      %p252 = scmp.ne.s32.totalorder %s243, %s244
      %p253 = scmp.eq.s32.totalorder %s34, 0
      %p254 = por %p252, %p253
      %p255 = scmp.ne.s32.totalorder %s243, %s244
      %p256 = scmp.eq.s32.totalorder %s35, 1
      %p257 = por %p255, %p256
      %p259 = scmp.ne.s32.totalorder %s244, %s258
      %p260 = scmp.eq.s32.totalorder %s35, 0
      %p261 = por %p259, %p260
      %s262 = ssub.s32 %s29, %s36
      %p263 = scmp.eq.s32.totalorder %s262, 0
      %s265 = sadd.s32 %s264, 1
      %s266 = scalar_select %p263, %s264, %s265
      %p269 = pneg %p263
      %p270 = scmp.eq.s32.totalorder %s29, 1
      %p271 = por %p269, %p270
      %p272 = scmp.ne.s32.totalorder %s264, %s267
      %p273 = scmp.eq.s32.totalorder %s29, 0
      %p274 = por %p272, %p273
      %p275 = scmp.ne.s32.totalorder %s264, %s267
      %p276 = scmp.eq.s32.totalorder %s34, 1
      %p277 = por %p275, %p276
      %p278 = scmp.ne.s32.totalorder %s267, %s268
      %p279 = scmp.eq.s32.totalorder %s34, 0
      %p280 = por %p278, %p279
      %p281 = scmp.ne.s32.totalorder %s267, %s268
      %p282 = scmp.eq.s32.totalorder %s35, 1
      %p283 = por %p281, %p282
      %p285 = scmp.ne.s32.totalorder %s268, %s284
      %p286 = scmp.eq.s32.totalorder %s35, 0
      %p287 = por %p285, %p286
      %p288 = scmp.le.s32.totalorder 1, %s29
      %p289 = scmp.lt.s32.totalorder %s29, 3
      %p290 = pnand %p288, %p289
      %p291 = pneg %p290
      // Predicated region
      $region9: #{tpu_custom_call.1} parent=5 // pred_check
        _
      $region10: #{tpu_custom_call.1} parent=5 // pred_check_branch
        %293 = sbr.rel (%p290) target = $region12
      $region11: #{tpu_custom_call.1} parent=5 // pred_region
        %s294 = ssub.s32 %s29, 1
        // Predicated region
        $region13: #{tpu_custom_call.1} parent=11 // pred_check
          %p295 = pneg %p128
        $region14: #{tpu_custom_call.1} parent=11 // pred_check_branch
          %297 = sbr.rel (%p295) target = $region16
        $region15: #{tpu_custom_call.1} parent=11 // pred_region
          %s299 = ssub.s32 512, 512
          %300 = vsyncadd [#allocation9], %s299
          %s301 = sshll.u32 [#allocation8], 4
          %s302 = int_to_ptr.vmem [resolvable:$true] %s301
          %307 = dma.hbm_to_vmem [thread:$0]  %s3, 512, %s302, [#allocation9], 128, 128, 8
        $region16: #{tpu_custom_call.1} parent=11 // pred_fallthru
          _
        // Predicated region
        $region17: #{tpu_custom_call.1} parent=11 // pred_check
          %p308 = pneg %p149
        $region18: #{tpu_custom_call.1} parent=11 // pred_check_branch
          %310 = sbr.rel (%p308) target = $region20
        $region19: #{tpu_custom_call.1} parent=11 // pred_region
          %s312 = ssub.s32 16, 16
          %313 = vsyncadd [#allocation9], %s312
          %s315 = sshll.u32 [#allocation10], 4
          %s316 = int_to_ptr.vmem [resolvable:$true] %s315
          %318 = dma.hbm_to_vmem [thread:$0]  %s4, 16, %s316, [#allocation9]
        $region20: #{tpu_custom_call.1} parent=11 // pred_fallthru
          _
        // Predicated region
        $region21: #{tpu_custom_call.1} parent=11 // pred_check
          %p319 = pneg %p170
        $region22: #{tpu_custom_call.1} parent=11 // pred_check_branch
          %321 = sbr.rel (%p319) target = $region24
        $region23: #{tpu_custom_call.1} parent=11 // pred_region
          %s323 = ssub.s32 512, 512
          %324 = vsyncadd [#allocation12], %s323
          %s325 = sshll.u32 [#allocation11], 4
          %s326 = int_to_ptr.vmem [resolvable:$true] %s325
          %331 = dma.hbm_to_vmem [thread:$0]  %s5, 512, %s326, [#allocation12], 128, 128, 8
        $region24: #{tpu_custom_call.1} parent=11 // pred_fallthru
          _
        // Predicated region
        $region25: #{tpu_custom_call.1} parent=11 // pred_check
          %p332 = pneg %p191
        $region26: #{tpu_custom_call.1} parent=11 // pred_check_branch
          %334 = sbr.rel (%p332) target = $region28
        $region27: #{tpu_custom_call.1} parent=11 // pred_region
          %s336 = ssub.s32 16, 16
          %337 = vsyncadd [#allocation12], %s336
          %s339 = sshll.u32 [#allocation13], 4
          %s340 = int_to_ptr.vmem [resolvable:$true] %s339
          %342 = dma.hbm_to_vmem [thread:$0]  %s6, 16, %s340, [#allocation12]
        $region28: #{tpu_custom_call.1} parent=11 // pred_fallthru
          _
        // Predicated region
        $region29: #{tpu_custom_call.1} parent=11 // pred_check
          %p343 = pneg %p212
        $region30: #{tpu_custom_call.1} parent=11 // pred_check_branch
          %345 = sbr.rel (%p343) target = $region32
        $region31: #{tpu_custom_call.1} parent=11 // pred_region
          %s347 = ssub.s32 512, 512
          %348 = vsyncadd [#allocation15], %s347
          %s349 = sshll.u32 [#allocation14], 4
          %s350 = int_to_ptr.vmem [resolvable:$true] %s349
          %355 = dma.hbm_to_vmem [thread:$0]  %s7, 512, %s350, [#allocation15], 128, 128, 8
        $region32: #{tpu_custom_call.1} parent=11 // pred_fallthru
          _
        // Predicated region
        $region33: #{tpu_custom_call.1} parent=11 // pred_check
          %p356 = pneg %p233
        $region34: #{tpu_custom_call.1} parent=11 // pred_check_branch
          %358 = sbr.rel (%p356) target = $region36
        $region35: #{tpu_custom_call.1} parent=11 // pred_region
          %s360 = ssub.s32 16, 16
          %361 = vsyncadd [#allocation15], %s360
          %s363 = sshll.u32 [#allocation16], 4
          %s364 = int_to_ptr.vmem [resolvable:$true] %s363
          %366 = dma.hbm_to_vmem [thread:$0]  %s8, 16, %s364, [#allocation15]
        $region36: #{tpu_custom_call.1} parent=11 // pred_fallthru
          _
        // Predicated region
        $region37: #{tpu_custom_call.1} parent=11 // pred_check
          %p367 = pneg %p254
        $region38: #{tpu_custom_call.1} parent=11 // pred_check_branch
          %369 = sbr.rel (%p367) target = $region40
        $region39: #{tpu_custom_call.1} parent=11 // pred_region
          %s371 = ssub.s32 16, 16
          %372 = vsyncadd [#allocation18], %s371
          %s374 = sshll.u32 [#allocation17], 4
          %s375 = int_to_ptr.vmem [resolvable:$true] %s374
          %377 = dma.hbm_to_vmem [thread:$0]  %s9, 16, %s375, [#allocation18]
        $region40: #{tpu_custom_call.1} parent=11 // pred_fallthru
          _
      $region12: #{tpu_custom_call.1} parent=5 // pred_fallthru
        _
      %p378 = scmp.lt.s32.totalorder %s29, 2
      // Predicated region
      $region41: #{tpu_custom_call.1} parent=5 // pred_check
        %p379 = pneg %p378
      $region42: #{tpu_custom_call.1} parent=5 // pred_check_branch
        %381 = sbr.rel (%p379) target = $region44
      $region43: #{tpu_custom_call.1} parent=5 // pred_region
        // Predicated region
        $region45: #{tpu_custom_call.1} parent=43 // pred_check
          %p382 = pneg %p49
        $region46: #{tpu_custom_call.1} parent=43 // pred_check_branch
          %384 = sbr.rel (%p382) target = $region48
        $region47: #{tpu_custom_call.1} parent=43 // pred_region
          %s385 = sand.u32 %s39, 1
          %s386 = scalar_lea.sflag [#allocation3], %s385
          %s387 = sand.u32 %s39, 1
          %s388 = smul.addr %s387, 256
          %s389 = scalar_lea.vmem [#allocation2], %s388
          %s390 = smul.u32 16, %s29
          %s392 = ssub.s32 4096, 4096
          %393 = vsyncadd %s386, %s392
          %s394 = smul.addr %s390, 2
          %s395 = smul.addr %s394, 128
          %s396 = scalar_lea.hbm %s0, %s395
          %s397 = sshll.u32 %s389, 4
          %s398 = int_to_ptr.vmem [resolvable:$true] %s397
          %403 = dma.hbm_to_vmem [thread:$0]  %s396, 4096, %s398, %s386, 128, 128, 8
        $region48: #{tpu_custom_call.1} parent=43 // pred_fallthru
          _
        // Predicated region
        $region49: #{tpu_custom_call.1} parent=43 // pred_check
          %p404 = pneg %p75
        $region50: #{tpu_custom_call.1} parent=43 // pred_check_branch
          %406 = sbr.rel (%p404) target = $region52
        $region51: #{tpu_custom_call.1} parent=43 // pred_region
          %s407 = sand.u32 %s29, 1
          %s408 = scalar_lea.sflag [#allocation6], %s407
          %s409 = sand.u32 %s65, 1
          %s410 = smul.addr %s409, 16
          %s411 = scalar_lea.vmem [#allocation5], %s410
          %s412 = smul.u32 2, %s29
          %s414 = ssub.s32 256, 256
          %415 = vsyncadd %s408, %s414
          %s416 = smul.addr %s412, 128
          %s417 = scalar_lea.hbm %s1, %s416
          %s418 = sshll.u32 %s411, 4
          %s419 = int_to_ptr.vmem [resolvable:$true] %s418
          %424 = dma.hbm_to_vmem [thread:$0]  %s417, 256, %s419, %s408, 128, 128, 8
        $region52: #{tpu_custom_call.1} parent=43 // pred_fallthru
          _
        // Predicated region
        $region53: #{tpu_custom_call.1} parent=43 // pred_check
          %p425 = pneg %p101
        $region54: #{tpu_custom_call.1} parent=43 // pred_check_branch
          %427 = sbr.rel (%p425) target = $region56
        $region55: #{tpu_custom_call.1} parent=43 // pred_region
          %s428 = sand.u32 %s29, 1
          %s429 = scalar_lea.sflag [#allocation6], %s428
          %s430 = sand.u32 %s91, 1
          %s431 = smul.addr %s430, 16
          %s432 = scalar_lea.vmem [#allocation7], %s431
          %s433 = smul.u32 2, %s29
          %s435 = ssub.s32 256, 256
          %436 = vsyncadd %s429, %s435
          %s437 = smul.addr %s433, 128
          %s438 = scalar_lea.hbm %s2, %s437
          %s439 = sshll.u32 %s432, 4
          %s440 = int_to_ptr.vmem [resolvable:$true] %s439
          %445 = dma.hbm_to_vmem [thread:$0]  %s438, 256, %s440, %s429, 128, 128, 8
        $region56: #{tpu_custom_call.1} parent=43 // pred_fallthru
          _
      $region44: #{tpu_custom_call.1} parent=5 // pred_fallthru
        _
      %p446 = scmp.le.s32.totalorder 1, %s29
      %p447 = scmp.lt.s32.totalorder %s29, 3
      %p448 = pnand %p446, %p447
      %p449 = pneg %p448
      // Predicated region
      $region57: #{tpu_custom_call.1} parent=5 // pred_check
        _
      $region58: #{tpu_custom_call.1} parent=5 // pred_check_branch
        %451 = sbr.rel (%p448) target = $region60
      $region59: #{tpu_custom_call.1} parent=5 // pred_region
        %s452 = ssub.s32 %s29, 1
        %s453 = sand.u32 %s42, 1
        %s454 = scalar_lea.sflag [#allocation3], %s453
        %s455 = sand.u32 %s42, 1
        %s456 = smul.addr %s455, 256
        %s457 = scalar_lea.vmem [#allocation2], %s456
        // Predicated region
        $region61: #{tpu_custom_call.1} parent=59 // pred_check
          %p458 = pneg %p55
        $region62: #{tpu_custom_call.1} parent=59 // pred_check_branch
          %460 = sbr.rel (%p458) target = $region64
        $region63: #{tpu_custom_call.1} parent=59 // pred_region
          %461 = dma.done %s454, 4096
        $region64: #{tpu_custom_call.1} parent=59 // pred_fallthru
          _
        %s462 = sand.u32 %s34, 1
        %s463 = scalar_lea.sflag [#allocation6], %s462
        %s464 = sand.u32 %s68, 1
        %s465 = smul.addr %s464, 16
        %s466 = scalar_lea.vmem [#allocation5], %s465
        // Predicated region
        $region65: #{tpu_custom_call.1} parent=59 // pred_check
          %p467 = pneg %p81
        $region66: #{tpu_custom_call.1} parent=59 // pred_check_branch
          %469 = sbr.rel (%p467) target = $region68
        $region67: #{tpu_custom_call.1} parent=59 // pred_region
          %470 = dma.done %s463, 256
        $region68: #{tpu_custom_call.1} parent=59 // pred_fallthru
          _
        %s471 = sand.u32 %s34, 1
        %s472 = scalar_lea.sflag [#allocation6], %s471
        %s473 = sand.u32 %s94, 1
        %s474 = smul.addr %s473, 16
        %s475 = scalar_lea.vmem [#allocation7], %s474
        // Predicated region
        $region69: #{tpu_custom_call.1} parent=59 // pred_check
          %p476 = pneg %p107
        $region70: #{tpu_custom_call.1} parent=59 // pred_check_branch
          %478 = sbr.rel (%p476) target = $region72
        $region71: #{tpu_custom_call.1} parent=59 // pred_region
          %479 = dma.done %s472, 256
        $region72: #{tpu_custom_call.1} parent=59 // pred_fallthru
          _
        // Predicated region
        $region73: #{tpu_custom_call.1} parent=59 // pred_check
          %p480 = pneg %p128
        $region74: #{tpu_custom_call.1} parent=59 // pred_check_branch
          %482 = sbr.rel (%p480) target = $region76
        $region75: #{tpu_custom_call.1} parent=59 // pred_region
          %483 = dma.done [#allocation9], 512
        $region76: #{tpu_custom_call.1} parent=59 // pred_fallthru
          _
        // Predicated region
        $region77: #{tpu_custom_call.1} parent=59 // pred_check
          %p484 = pneg %p149
        $region78: #{tpu_custom_call.1} parent=59 // pred_check_branch
          %486 = sbr.rel (%p484) target = $region80
        $region79: #{tpu_custom_call.1} parent=59 // pred_region
          %487 = dma.done [#allocation9], 16
        $region80: #{tpu_custom_call.1} parent=59 // pred_fallthru
          _
        // Predicated region
        $region81: #{tpu_custom_call.1} parent=59 // pred_check
          %p488 = pneg %p170
        $region82: #{tpu_custom_call.1} parent=59 // pred_check_branch
          %490 = sbr.rel (%p488) target = $region84
        $region83: #{tpu_custom_call.1} parent=59 // pred_region
          %491 = dma.done [#allocation12], 512
        $region84: #{tpu_custom_call.1} parent=59 // pred_fallthru
          _
        // Predicated region
        $region85: #{tpu_custom_call.1} parent=59 // pred_check
          %p492 = pneg %p191
        $region86: #{tpu_custom_call.1} parent=59 // pred_check_branch
          %494 = sbr.rel (%p492) target = $region88
        $region87: #{tpu_custom_call.1} parent=59 // pred_region
          %495 = dma.done [#allocation12], 16
        $region88: #{tpu_custom_call.1} parent=59 // pred_fallthru
          _
        // Predicated region
        $region89: #{tpu_custom_call.1} parent=59 // pred_check
          %p496 = pneg %p212
        $region90: #{tpu_custom_call.1} parent=59 // pred_check_branch
          %498 = sbr.rel (%p496) target = $region92
        $region91: #{tpu_custom_call.1} parent=59 // pred_region
          %499 = dma.done [#allocation15], 512
        $region92: #{tpu_custom_call.1} parent=59 // pred_fallthru
          _
        // Predicated region
        $region93: #{tpu_custom_call.1} parent=59 // pred_check
          %p500 = pneg %p233
        $region94: #{tpu_custom_call.1} parent=59 // pred_check_branch
          %502 = sbr.rel (%p500) target = $region96
        $region95: #{tpu_custom_call.1} parent=59 // pred_region
          %503 = dma.done [#allocation15], 16
        $region96: #{tpu_custom_call.1} parent=59 // pred_fallthru
          _
        // Predicated region
        $region97: #{tpu_custom_call.1} parent=59 // pred_check
          %p504 = pneg %p254
        $region98: #{tpu_custom_call.1} parent=59 // pred_check_branch
          %506 = sbr.rel (%p504) target = $region100
        $region99: #{tpu_custom_call.1} parent=59 // pred_region
          %507 = dma.done [#allocation18], 16
        $region100: #{tpu_custom_call.1} parent=59 // pred_fallthru
          _
        %s508 = sand.u32 %s42, 1
        %s509 = scalar_lea.sflag [#allocation3], %s508
        %s510 = sand.u32 %s42, 1
        %s511 = smul.addr %s510, 256
        %s512 = scalar_lea.vmem [#allocation2], %s511
        %p513 = pneg %p55
        %p514 = pneg %p52
        %s515 = sand.u32 %s34, 1
        %s516 = scalar_lea.sflag [#allocation6], %s515
        %s517 = sand.u32 %s68, 1
        %s518 = smul.addr %s517, 16
        %s519 = scalar_lea.vmem [#allocation5], %s518
        %p520 = pneg %p81
        %p521 = pneg %p78
        %s522 = sand.u32 %s34, 1
        %s523 = scalar_lea.sflag [#allocation6], %s522
        %s524 = sand.u32 %s94, 1
        %s525 = smul.addr %s524, 16
        %s526 = scalar_lea.vmem [#allocation7], %s525
        %p527 = pneg %p107
        %p528 = pneg %p104
        %p529 = pneg %p128
        %p530 = pneg %p125
        %p531 = pneg %p149
        %p532 = pneg %p146
        %p533 = pneg %p170
        %p534 = pneg %p167
        %p535 = pneg %p191
        %p536 = pneg %p188
        %p537 = pneg %p212
        %p538 = pneg %p209
        %p539 = pneg %p233
        %p540 = pneg %p230
        %p541 = pneg %p254
        %p542 = pneg %p251
        %p543 = pneg %p280
        %p544 = pneg %p277
        %s545 = sand.u32 %s267, 1
        %s546 = scalar_lea.sflag [#allocation4], %s545
        %s547 = sand.u32 %s267, 1
        %s548 = smul.addr %s547, 16
        %s549 = scalar_lea.vmem [#allocation19], %s548
        %s550 = smul.u32 16, %s34
        %s551 = smul.u32 2, %s34
        %s552 = smul.u32 2, %s34
        %s553 = smul.u32 2, %s34
        %v554 = vld [vmem:[%s457] sm:$0xff]
        %v555 = vld [vmem:[%s457 + $0x8] sm:$0xff]
        %v556 = vld [vmem:[%s457 + $0x10] sm:$0xff]
        %v557 = vld [vmem:[%s457 + $0x18] sm:$0xff]
        %v558 = vld [vmem:[%s457 + $0x20] sm:$0xff]
        %v559 = vld [vmem:[%s457 + $0x28] sm:$0xff]
        %v560 = vld [vmem:[%s457 + $0x30] sm:$0xff]
        %v561 = vld [vmem:[%s457 + $0x38] sm:$0xff]
        %v562 = vld [vmem:[%s457 + $0x40] sm:$0xff]
        %v563 = vld [vmem:[%s457 + $0x48] sm:$0xff]
        %v564 = vld [vmem:[%s457 + $0x50] sm:$0xff]
        %v565 = vld [vmem:[%s457 + $0x58] sm:$0xff]
        %v566 = vld [vmem:[%s457 + $0x60] sm:$0xff]
        %v567 = vld [vmem:[%s457 + $0x68] sm:$0xff]
        %v568 = vld [vmem:[%s457 + $0x70] sm:$0xff]
        %v569 = vld [vmem:[%s457 + $0x78] sm:$0xff]
        %v570 = vld [vmem:[%s457 + $0x80] sm:$0xff]
        %v571 = vld [vmem:[%s457 + $0x88] sm:$0xff]
        %v572 = vld [vmem:[%s457 + $0x90] sm:$0xff]
        %v573 = vld [vmem:[%s457 + $0x98] sm:$0xff]
        %v574 = vld [vmem:[%s457 + $0xa0] sm:$0xff]
        %v575 = vld [vmem:[%s457 + $0xa8] sm:$0xff]
        %v576 = vld [vmem:[%s457 + $0xb0] sm:$0xff]
        %v577 = vld [vmem:[%s457 + $0xb8] sm:$0xff]
        %v578 = vld [vmem:[%s457 + $0xc0] sm:$0xff]
        %v579 = vld [vmem:[%s457 + $0xc8] sm:$0xff]
        %v580 = vld [vmem:[%s457 + $0xd0] sm:$0xff]
        %v581 = vld [vmem:[%s457 + $0xd8] sm:$0xff]
        %v582 = vld [vmem:[%s457 + $0xe0] sm:$0xff]
        %v583 = vld [vmem:[%s457 + $0xe8] sm:$0xff]
        %v584 = vld [vmem:[%s457 + $0xf0] sm:$0xff]
        %v585 = vld [vmem:[%s457 + $0xf8] sm:$0xff]
        %v586 = vld [vmem:[%s466] sm:$0xff]
        %v587 = vld [vmem:[%s466 + $0x8] sm:$0xff]
        %v588 = vld [vmem:[%s475] sm:$0xff]
        %v589 = vld [vmem:[%s475 + $0x8] sm:$0xff]
        %v590 = vld [vmem:[#allocation8] sm:$0xff]
        %v591 = vld [vmem:[#allocation8 + $0x8] sm:$0xff]
        %v592 = vld [vmem:[#allocation8 + $0x10] sm:$0xff]
        %v593 = vld [vmem:[#allocation8 + $0x18] sm:$0xff]
        %v594 = vld [vmem:[#allocation10] sm:$0x1]
        %v596 = vlaneseq
        %v597 = vshrl.u32 %v596, 7
        %v598 = vsub.s32 0, %v597
        %v599 = vrot.slane %v594, %v598
        %vm601 = vcmask 261120
        %v603 = vsel %vm601, %v554, 0
        %v606 = vsel %vm601, %v555, 0
        %v609 = vsel %vm601, %v556, 0
        %v612 = vsel %vm601, %v557, 0
        %v615 = vsel %vm601, %v558, 0
        %v618 = vsel %vm601, %v559, 0
        %v621 = vsel %vm601, %v560, 0
        %v624 = vsel %vm601, %v561, 0
        %v627 = vsel %vm601, %v562, 0
        %v630 = vsel %vm601, %v563, 0
        %v633 = vsel %vm601, %v564, 0
        %v636 = vsel %vm601, %v565, 0
        %v639 = vsel %vm601, %v566, 0
        %v642 = vsel %vm601, %v567, 0
        %v645 = vsel %vm601, %v568, 0
        %v648 = vsel %vm601, %v569, 0
        %v651 = vsel %vm601, %v570, 0
        %v654 = vsel %vm601, %v571, 0
        %v657 = vsel %vm601, %v572, 0
        %v660 = vsel %vm601, %v573, 0
        %v663 = vsel %vm601, %v574, 0
        %v666 = vsel %vm601, %v575, 0
        %v669 = vsel %vm601, %v576, 0
        %v672 = vsel %vm601, %v577, 0
        %v675 = vsel %vm601, %v578, 0
        %v678 = vsel %vm601, %v579, 0
        %v681 = vsel %vm601, %v580, 0
        %v684 = vsel %vm601, %v581, 0
        %v687 = vsel %vm601, %v582, 0
        %v690 = vsel %vm601, %v583, 0
        %v693 = vsel %vm601, %v584, 0
        %v696 = vsel %vm601, %v585, 0
        %698 = vmatprep.subr.mxu0 0.0
        %699 = vmatpush1.msra.mxu0 %v590
        %700 = vmatprep.subr.mxu0 0.0
        %701 = vmatpush1.msra.mxu0 %v591
        %702 = vmatprep.subr.mxu0 0.0
        %703 = vmatpush1.msra.mxu0 %v592
        %704 = vmatprep.subr.mxu0 0.0
        %705 = vmatpush1.msra.mxu0 %v593
        %706 = vmatprep.subr.mxu0 0.0
        %707 = vmatpush1.msra.mxu0 0.0
        %708 = vmatprep.subr.mxu0 0.0
        %709 = vmatpush1.msra.mxu0 0.0
        %710 = vmatprep.subr.mxu0 0.0
        %711 = vmatpush1.msra.mxu0 0.0
        %712 = vmatprep.subr.mxu0 0.0
        %713 = vmatpush1.msra.mxu0 0.0
        %714 = vmatprep.subr.mxu0 0.0
        %715 = vmatpush1.msra.mxu0 0.0
        %716 = vmatprep.subr.mxu0 0.0
        %717 = vmatpush1.msra.mxu0 0.0
        %718 = vmatprep.subr.mxu0 0.0
        %719 = vmatpush1.msra.mxu0 0.0
        %720 = vmatprep.subr.mxu0 0.0
        %721 = vmatpush1.msra.mxu0 0.0
        %722 = vmatprep.subr.mxu0 0.0
        %723 = vmatpush1.msra.mxu0 0.0
        %724 = vmatprep.subr.mxu0 0.0
        %725 = vmatpush1.msra.mxu0 0.0
        %726 = vmatprep.subr.mxu0 0.0
        %727 = vmatpush1.msra.mxu0 0.0
        %728 = vmatprep.subr.mxu0 0.0
        %729 = vmatpush1.msra.mxu0 0.0
        %730 = vmatprep.subr.mxu0 0.0
        %731 = vmatpush1.msra.mxu0 0.0
        %732 = vmatprep.subr.mxu0 0.0
        %733 = vmatpush1.msra.mxu0 0.0
        %734 = vmatprep.subr.mxu0 0.0
        %735 = vmatpush1.msra.mxu0 0.0
        %736 = vmatprep.subr.mxu0 0.0
        %737 = vmatpush1.msra.mxu0 0.0
        %738 = vmatprep.subr.mxu0 0.0
        %739 = vmatpush1.msra.mxu0 0.0
        %740 = vmatprep.subr.mxu0 0.0
        %741 = vmatpush1.msra.mxu0 0.0
        %742 = vmatprep.subr.mxu0 0.0
        %743 = vmatpush1.msra.mxu0 0.0
        %744 = vmatprep.subr.mxu0 0.0
        %745 = vmatpush1.msra.mxu0 0.0
        %746 = vmatprep.subr.mxu0 0.0
        %747 = vmatpush1.msra.mxu0 0.0
        %748 = vmatprep.subr.mxu0 0.0
        %749 = vmatpush1.msra.mxu0 0.0
        %750 = vmatprep.subr.mxu0 0.0
        %751 = vmatpush1.msra.mxu0 0.0
        %752 = vmatprep.subr.mxu0 0.0
        %753 = vmatpush1.msra.mxu0 0.0
        %754 = vmatprep.subr.mxu0 0.0
        %755 = vmatpush1.msra.mxu0 0.0
        %756 = vmatprep.subr.mxu0 0.0
        %757 = vmatpush1.msra.mxu0 0.0
        %758 = vmatprep.subr.mxu0 0.0
        %759 = vmatpush1.msra.mxu0 0.0
        %760 = vmatprep.subr.mxu0 0.0
        %761 = vmatpush1.msra.mxu0 0.0
        %762 = vmatprep.mubr.f32.mxu0 0.0
        %763 = vmatmul.mubr.f32.gmra.mrb[0].mxu0 %v603
        %v764 = vpop.f32.mrb[0].mxu0
        %v765 = vadd.f32 %v599, %v764
        %v766 = vpop.f32.mrb[0].mxu0
        %767 = vmatprep.mubr.f32.mxu0 0.0
        %768 = vmatmul.mubr.f32.gmra.mrb[0].mxu0 %v606
        %v769 = vpop.f32.mrb[0].mxu0
        %v770 = vadd.f32 %v599, %v769
        %v771 = vpop.f32.mrb[0].mxu0
        %772 = vmatprep.mubr.f32.mxu0 0.0
        %773 = vmatmul.mubr.f32.gmra.mrb[0].mxu0 %v609
        %v774 = vpop.f32.mrb[0].mxu0
        %v775 = vadd.f32 %v599, %v774
        %v776 = vpop.f32.mrb[0].mxu0
        %777 = vmatprep.mubr.f32.mxu0 0.0
        %778 = vmatmul.mubr.f32.gmra.mrb[0].mxu0 %v612
        %v779 = vpop.f32.mrb[0].mxu0
        %v780 = vadd.f32 %v599, %v779
        %v781 = vpop.f32.mrb[0].mxu0
        %782 = vmatprep.mubr.f32.mxu0 0.0
        %783 = vmatmul.mubr.f32.gmra.mrb[0].mxu0 %v615
        %v784 = vpop.f32.mrb[0].mxu0
        %v785 = vadd.f32 %v599, %v784
        %v786 = vpop.f32.mrb[0].mxu0
        %787 = vmatprep.mubr.f32.mxu0 0.0
        %788 = vmatmul.mubr.f32.gmra.mrb[0].mxu0 %v618
        %v789 = vpop.f32.mrb[0].mxu0
        %v790 = vadd.f32 %v599, %v789
        %v791 = vpop.f32.mrb[0].mxu0
        %792 = vmatprep.mubr.f32.mxu0 0.0
        %793 = vmatmul.mubr.f32.gmra.mrb[0].mxu0 %v621
        %v794 = vpop.f32.mrb[0].mxu0
        %v795 = vadd.f32 %v599, %v794
        %v796 = vpop.f32.mrb[0].mxu0
        %797 = vmatprep.mubr.f32.mxu0 0.0
        %798 = vmatmul.mubr.f32.gmra.mrb[0].mxu0 %v624
        %v799 = vpop.f32.mrb[0].mxu0
        %v800 = vadd.f32 %v599, %v799
        %v801 = vpop.f32.mrb[0].mxu0
        %802 = vmatprep.mubr.f32.mxu0 0.0
        %803 = vmatmul.mubr.f32.gmra.mrb[0].mxu0 %v627
        %v804 = vpop.f32.mrb[0].mxu0
        %v805 = vadd.f32 %v599, %v804
        %v806 = vpop.f32.mrb[0].mxu0
        %807 = vmatprep.mubr.f32.mxu0 0.0
        %808 = vmatmul.mubr.f32.gmra.mrb[0].mxu0 %v630
        %v809 = vpop.f32.mrb[0].mxu0
        %v810 = vadd.f32 %v599, %v809
        %v811 = vpop.f32.mrb[0].mxu0
        %812 = vmatprep.mubr.f32.mxu0 0.0
        %813 = vmatmul.mubr.f32.gmra.mrb[0].mxu0 %v633
        %v814 = vpop.f32.mrb[0].mxu0
        %v815 = vadd.f32 %v599, %v814
        %v816 = vpop.f32.mrb[0].mxu0
        %817 = vmatprep.mubr.f32.mxu0 0.0
        %818 = vmatmul.mubr.f32.gmra.mrb[0].mxu0 %v636
        %v819 = vpop.f32.mrb[0].mxu0
        %v820 = vadd.f32 %v599, %v819
        %v821 = vpop.f32.mrb[0].mxu0
        %822 = vmatprep.mubr.f32.mxu0 0.0
        %823 = vmatmul.mubr.f32.gmra.mrb[0].mxu0 %v639
        %v824 = vpop.f32.mrb[0].mxu0
        %v825 = vadd.f32 %v599, %v824
        %v826 = vpop.f32.mrb[0].mxu0
        %827 = vmatprep.mubr.f32.mxu0 0.0
        %828 = vmatmul.mubr.f32.gmra.mrb[0].mxu0 %v642
        %v829 = vpop.f32.mrb[0].mxu0
        %v830 = vadd.f32 %v599, %v829
        %v831 = vpop.f32.mrb[0].mxu0
        %832 = vmatprep.mubr.f32.mxu0 0.0
        %833 = vmatmul.mubr.f32.gmra.mrb[0].mxu0 %v645
        %v834 = vpop.f32.mrb[0].mxu0
        %v835 = vadd.f32 %v599, %v834
        %v836 = vpop.f32.mrb[0].mxu0
        %837 = vmatprep.mubr.f32.mxu0 0.0
        %838 = vmatmul.mubr.f32.gmra.mrb[0].mxu0 %v648
        %v839 = vpop.f32.mrb[0].mxu0
        %v840 = vadd.f32 %v599, %v839
        %v841 = vpop.f32.mrb[0].mxu0
        %842 = vmatprep.mubr.f32.mxu0 0.0
        %843 = vmatmul.mubr.f32.gmra.mrb[0].mxu0 %v651
        %v844 = vpop.f32.mrb[0].mxu0
        %v845 = vadd.f32 %v599, %v844
        %v846 = vpop.f32.mrb[0].mxu0
        %847 = vmatprep.mubr.f32.mxu0 0.0
        %848 = vmatmul.mubr.f32.gmra.mrb[0].mxu0 %v654
        %v849 = vpop.f32.mrb[0].mxu0
        %v850 = vadd.f32 %v599, %v849
        %v851 = vpop.f32.mrb[0].mxu0
        %852 = vmatprep.mubr.f32.mxu0 0.0
        %853 = vmatmul.mubr.f32.gmra.mrb[0].mxu0 %v657
        %v854 = vpop.f32.mrb[0].mxu0
        %v855 = vadd.f32 %v599, %v854
        %v856 = vpop.f32.mrb[0].mxu0
        %857 = vmatprep.mubr.f32.mxu0 0.0
        %858 = vmatmul.mubr.f32.gmra.mrb[0].mxu0 %v660
        %v859 = vpop.f32.mrb[0].mxu0
        %v860 = vadd.f32 %v599, %v859
        %v861 = vpop.f32.mrb[0].mxu0
        %862 = vmatprep.mubr.f32.mxu0 0.0
        %863 = vmatmul.mubr.f32.gmra.mrb[0].mxu0 %v663
        %v864 = vpop.f32.mrb[0].mxu0
        %v865 = vadd.f32 %v599, %v864
        %v866 = vpop.f32.mrb[0].mxu0
        %867 = vmatprep.mubr.f32.mxu0 0.0
        %868 = vmatmul.mubr.f32.gmra.mrb[0].mxu0 %v666
        %v869 = vpop.f32.mrb[0].mxu0
        %v870 = vadd.f32 %v599, %v869
        %v871 = vpop.f32.mrb[0].mxu0
        %872 = vmatprep.mubr.f32.mxu0 0.0
        %873 = vmatmul.mubr.f32.gmra.mrb[0].mxu0 %v669
        %v874 = vpop.f32.mrb[0].mxu0
        %v875 = vadd.f32 %v599, %v874
        %v876 = vpop.f32.mrb[0].mxu0
        %877 = vmatprep.mubr.f32.mxu0 0.0
        %878 = vmatmul.mubr.f32.gmra.mrb[0].mxu0 %v672
        %v879 = vpop.f32.mrb[0].mxu0
        %v880 = vadd.f32 %v599, %v879
        %v881 = vpop.f32.mrb[0].mxu0
        %882 = vmatprep.mubr.f32.mxu0 0.0
        %883 = vmatmul.mubr.f32.gmra.mrb[0].mxu0 %v675
        %v884 = vpop.f32.mrb[0].mxu0
        %v885 = vadd.f32 %v599, %v884
        %v886 = vpop.f32.mrb[0].mxu0
        %887 = vmatprep.mubr.f32.mxu0 0.0
        %888 = vmatmul.mubr.f32.gmra.mrb[0].mxu0 %v678
        %v889 = vpop.f32.mrb[0].mxu0
        %v890 = vadd.f32 %v599, %v889
        %v891 = vpop.f32.mrb[0].mxu0
        %892 = vmatprep.mubr.f32.mxu0 0.0
        %893 = vmatmul.mubr.f32.gmra.mrb[0].mxu0 %v681
        %v894 = vpop.f32.mrb[0].mxu0
        %v895 = vadd.f32 %v599, %v894
        %v896 = vpop.f32.mrb[0].mxu0
        %897 = vmatprep.mubr.f32.mxu0 0.0
        %898 = vmatmul.mubr.f32.gmra.mrb[0].mxu0 %v684
        %v899 = vpop.f32.mrb[0].mxu0
        %v900 = vadd.f32 %v599, %v899
        %v901 = vpop.f32.mrb[0].mxu0
        %902 = vmatprep.mubr.f32.mxu0 0.0
        %903 = vmatmul.mubr.f32.gmra.mrb[0].mxu0 %v687
        %v904 = vpop.f32.mrb[0].mxu0
        %v905 = vadd.f32 %v599, %v904
        %v906 = vpop.f32.mrb[0].mxu0
        %907 = vmatprep.mubr.f32.mxu0 0.0
        %908 = vmatmul.mubr.f32.gmra.mrb[0].mxu0 %v690
        %v909 = vpop.f32.mrb[0].mxu0
        %v910 = vadd.f32 %v599, %v909
        %v911 = vpop.f32.mrb[0].mxu0
        %912 = vmatprep.mubr.f32.mxu0 0.0
        %913 = vmatmul.mubr.f32.gmra.mrb[0].mxu0 %v693
        %v914 = vpop.f32.mrb[0].mxu0
        %v915 = vadd.f32 %v599, %v914
        %v916 = vpop.f32.mrb[0].mxu0
        %917 = vmatprep.mubr.f32.mxu0 0.0
        %918 = vmatmul.mubr.f32.gmra.mrb[0].mxu0 %v696
        %v919 = vpop.f32.mrb[0].mxu0
        %v920 = vadd.f32 %v599, %v919
        %v921 = vpop.f32.mrb[0].mxu0
        %922 = vdwg.mxu0
        %v923 = vmax.f32 %v765, 0.0
        %v924 = vmax.f32 %v770, 0.0
        %v925 = vmax.f32 %v775, 0.0
        %v926 = vmax.f32 %v780, 0.0
        %v927 = vmax.f32 %v785, 0.0
        %v928 = vmax.f32 %v790, 0.0
        %v929 = vmax.f32 %v795, 0.0
        %v930 = vmax.f32 %v800, 0.0
        %v931 = vmax.f32 %v805, 0.0
        %v932 = vmax.f32 %v810, 0.0
        %v933 = vmax.f32 %v815, 0.0
        %v934 = vmax.f32 %v820, 0.0
        %v935 = vmax.f32 %v825, 0.0
        %v936 = vmax.f32 %v830, 0.0
        %v937 = vmax.f32 %v835, 0.0
        %v938 = vmax.f32 %v840, 0.0
        %v939 = vmax.f32 %v845, 0.0
        %v940 = vmax.f32 %v850, 0.0
        %v941 = vmax.f32 %v855, 0.0
        %v942 = vmax.f32 %v860, 0.0
        %v943 = vmax.f32 %v865, 0.0
        %v944 = vmax.f32 %v870, 0.0
        %v945 = vmax.f32 %v875, 0.0
        %v946 = vmax.f32 %v880, 0.0
        %v947 = vmax.f32 %v885, 0.0
        %v948 = vmax.f32 %v890, 0.0
        %v949 = vmax.f32 %v895, 0.0
        %v950 = vmax.f32 %v900, 0.0
        %v951 = vmax.f32 %v905, 0.0
        %v952 = vmax.f32 %v910, 0.0
        %v953 = vmax.f32 %v915, 0.0
        %v954 = vmax.f32 %v920, 0.0
        %v955 = vld [vmem:[#allocation11] sm:$0xff]
        %v956 = vld [vmem:[#allocation11 + $0x8] sm:$0xff]
        %v957 = vld [vmem:[#allocation11 + $0x10] sm:$0xff]
        %v958 = vld [vmem:[#allocation11 + $0x18] sm:$0xff]
        %v959 = vld [vmem:[#allocation13] sm:$0x1]
        %v961 = vlaneseq
        %v962 = vshrl.u32 %v961, 7
        %v963 = vsub.s32 0, %v962
        %v964 = vrot.slane %v959, %v963
        %v967 = vsel %vm601, %v586, 0
        %v970 = vsel %vm601, %v587, 0
        %972 = vmatprep.subr.mxu0 0.0
        %973 = vmatpush1.msra.mxu0 %v955
        %974 = vmatprep.subr.mxu0 0.0
        %975 = vmatpush1.msra.mxu0 %v956
        %976 = vmatprep.subr.mxu0 0.0
        %977 = vmatpush1.msra.mxu0 %v957
        %978 = vmatprep.subr.mxu0 0.0
        %979 = vmatpush1.msra.mxu0 %v958
        %980 = vmatprep.subr.mxu0 0.0
        %981 = vmatpush1.msra.mxu0 0.0
        %982 = vmatprep.subr.mxu0 0.0
        %983 = vmatpush1.msra.mxu0 0.0
        %984 = vmatprep.subr.mxu0 0.0
        %985 = vmatpush1.msra.mxu0 0.0
        %986 = vmatprep.subr.mxu0 0.0
        %987 = vmatpush1.msra.mxu0 0.0
        %988 = vmatprep.subr.mxu0 0.0
        %989 = vmatpush1.msra.mxu0 0.0
        %990 = vmatprep.subr.mxu0 0.0
        %991 = vmatpush1.msra.mxu0 0.0
        %992 = vmatprep.subr.mxu0 0.0
        %993 = vmatpush1.msra.mxu0 0.0
        %994 = vmatprep.subr.mxu0 0.0
        %995 = vmatpush1.msra.mxu0 0.0
        %996 = vmatprep.subr.mxu0 0.0
        %997 = vmatpush1.msra.mxu0 0.0
        %998 = vmatprep.subr.mxu0 0.0
        %999 = vmatpush1.msra.mxu0 0.0
        %1000 = vmatprep.subr.mxu0 0.0
        %1001 = vmatpush1.msra.mxu0 0.0
        %1002 = vmatprep.subr.mxu0 0.0
        %1003 = vmatpush1.msra.mxu0 0.0
        %1004 = vmatprep.subr.mxu0 0.0
        %1005 = vmatpush1.msra.mxu0 0.0
        %1006 = vmatprep.subr.mxu0 0.0
        %1007 = vmatpush1.msra.mxu0 0.0
        %1008 = vmatprep.subr.mxu0 0.0
        %1009 = vmatpush1.msra.mxu0 0.0
        %1010 = vmatprep.subr.mxu0 0.0
        %1011 = vmatpush1.msra.mxu0 0.0
        %1012 = vmatprep.subr.mxu0 0.0
        %1013 = vmatpush1.msra.mxu0 0.0
        %1014 = vmatprep.subr.mxu0 0.0
        %1015 = vmatpush1.msra.mxu0 0.0
        %1016 = vmatprep.subr.mxu0 0.0
        %1017 = vmatpush1.msra.mxu0 0.0
        %1018 = vmatprep.subr.mxu0 0.0
        %1019 = vmatpush1.msra.mxu0 0.0
        %1020 = vmatprep.subr.mxu0 0.0
        %1021 = vmatpush1.msra.mxu0 0.0
        %1022 = vmatprep.subr.mxu0 0.0
        %1023 = vmatpush1.msra.mxu0 0.0
        %1024 = vmatprep.subr.mxu0 0.0
        %1025 = vmatpush1.msra.mxu0 0.0
        %1026 = vmatprep.subr.mxu0 0.0
        %1027 = vmatpush1.msra.mxu0 0.0
        %1028 = vmatprep.subr.mxu0 0.0
        %1029 = vmatpush1.msra.mxu0 0.0
        %1030 = vmatprep.subr.mxu0 0.0
        %1031 = vmatpush1.msra.mxu0 0.0
        %1032 = vmatprep.subr.mxu0 0.0
        %1033 = vmatpush1.msra.mxu0 0.0
        %1034 = vmatprep.subr.mxu0 0.0
        %1035 = vmatpush1.msra.mxu0 0.0
        %1036 = vmatprep.mubr.f32.mxu0 0.0
        %1037 = vmatmul.mubr.f32.gmra.mrb[0].mxu0 %v967
        %v1038 = vpop.f32.mrb[0].mxu0
        %v1039 = vadd.f32 %v964, %v1038
        %v1040 = vpop.f32.mrb[0].mxu0
        %1041 = vmatprep.mubr.f32.mxu0 0.0
        %1042 = vmatmul.mubr.f32.gmra.mrb[0].mxu0 %v970
        %v1043 = vpop.f32.mrb[0].mxu0
        %v1044 = vadd.f32 %v964, %v1043
        %v1045 = vpop.f32.mrb[0].mxu0
        %1046 = vdwg.mxu0
        %v1047 = vmax.f32 %v1039, 0.0
        %v1048 = vmax.f32 %v1044, 0.0
        %v1049 = vld [vmem:[#allocation14] sm:$0xff]
        %v1050 = vld [vmem:[#allocation14 + $0x8] sm:$0xff]
        %v1051 = vld [vmem:[#allocation14 + $0x10] sm:$0xff]
        %v1052 = vld [vmem:[#allocation14 + $0x18] sm:$0xff]
        %v1053 = vld [vmem:[#allocation16] sm:$0x1]
        %v1055 = vlaneseq
        %v1056 = vshrl.u32 %v1055, 7
        %v1057 = vsub.s32 0, %v1056
        %v1058 = vrot.slane %v1053, %v1057
        %v1061 = vsel %vm601, %v588, 0
        %v1064 = vsel %vm601, %v589, 0
        %1066 = vmatprep.subr.mxu0 0.0
        %1067 = vmatpush1.msra.mxu0 %v1049
        %1068 = vmatprep.subr.mxu0 0.0
        %1069 = vmatpush1.msra.mxu0 %v1050
        %1070 = vmatprep.subr.mxu0 0.0
        %1071 = vmatpush1.msra.mxu0 %v1051
        %1072 = vmatprep.subr.mxu0 0.0
        %1073 = vmatpush1.msra.mxu0 %v1052
        %1074 = vmatprep.subr.mxu0 0.0
        %1075 = vmatpush1.msra.mxu0 0.0
        %1076 = vmatprep.subr.mxu0 0.0
        %1077 = vmatpush1.msra.mxu0 0.0
        %1078 = vmatprep.subr.mxu0 0.0
        %1079 = vmatpush1.msra.mxu0 0.0
        %1080 = vmatprep.subr.mxu0 0.0
        %1081 = vmatpush1.msra.mxu0 0.0
        %1082 = vmatprep.subr.mxu0 0.0
        %1083 = vmatpush1.msra.mxu0 0.0
        %1084 = vmatprep.subr.mxu0 0.0
        %1085 = vmatpush1.msra.mxu0 0.0
        %1086 = vmatprep.subr.mxu0 0.0
        %1087 = vmatpush1.msra.mxu0 0.0
        %1088 = vmatprep.subr.mxu0 0.0
        %1089 = vmatpush1.msra.mxu0 0.0
        %1090 = vmatprep.subr.mxu0 0.0
        %1091 = vmatpush1.msra.mxu0 0.0
        %1092 = vmatprep.subr.mxu0 0.0
        %1093 = vmatpush1.msra.mxu0 0.0
        %1094 = vmatprep.subr.mxu0 0.0
        %1095 = vmatpush1.msra.mxu0 0.0
        %1096 = vmatprep.subr.mxu0 0.0
        %1097 = vmatpush1.msra.mxu0 0.0
        %1098 = vmatprep.subr.mxu0 0.0
        %1099 = vmatpush1.msra.mxu0 0.0
        %1100 = vmatprep.subr.mxu0 0.0
        %1101 = vmatpush1.msra.mxu0 0.0
        %1102 = vmatprep.subr.mxu0 0.0
        %1103 = vmatpush1.msra.mxu0 0.0
        %1104 = vmatprep.subr.mxu0 0.0
        %1105 = vmatpush1.msra.mxu0 0.0
        %1106 = vmatprep.subr.mxu0 0.0
        %1107 = vmatpush1.msra.mxu0 0.0
        %1108 = vmatprep.subr.mxu0 0.0
        %1109 = vmatpush1.msra.mxu0 0.0
        %1110 = vmatprep.subr.mxu0 0.0
        %1111 = vmatpush1.msra.mxu0 0.0
        %1112 = vmatprep.subr.mxu0 0.0
        %1113 = vmatpush1.msra.mxu0 0.0
        %1114 = vmatprep.subr.mxu0 0.0
        %1115 = vmatpush1.msra.mxu0 0.0
        %1116 = vmatprep.subr.mxu0 0.0
        %1117 = vmatpush1.msra.mxu0 0.0
        %1118 = vmatprep.subr.mxu0 0.0
        %1119 = vmatpush1.msra.mxu0 0.0
        %1120 = vmatprep.subr.mxu0 0.0
        %1121 = vmatpush1.msra.mxu0 0.0
        %1122 = vmatprep.subr.mxu0 0.0
        %1123 = vmatpush1.msra.mxu0 0.0
        %1124 = vmatprep.subr.mxu0 0.0
        %1125 = vmatpush1.msra.mxu0 0.0
        %1126 = vmatprep.subr.mxu0 0.0
        %1127 = vmatpush1.msra.mxu0 0.0
        %1128 = vmatprep.subr.mxu0 0.0
        %1129 = vmatpush1.msra.mxu0 0.0
        %1130 = vmatprep.mubr.f32.mxu0 0.0
        %1131 = vmatmul.mubr.f32.gmra.mrb[0].mxu0 %v1061
        %v1132 = vpop.f32.mrb[0].mxu0
        %v1133 = vadd.f32 %v1058, %v1132
        %v1134 = vpop.f32.mrb[0].mxu0
        %1135 = vmatprep.mubr.f32.mxu0 0.0
        %1136 = vmatmul.mubr.f32.gmra.mrb[0].mxu0 %v1064
        %v1137 = vpop.f32.mrb[0].mxu0
        %v1138 = vadd.f32 %v1058, %v1137
        %v1139 = vpop.f32.mrb[0].mxu0
        %1140 = vdwg.mxu0
        %v1141 = vmax.f32 %v1133, 0.0
        %v1142 = vmax.f32 %v1138, 0.0
        %v1143 = vmul.f32 %v1047, %v1141
        %v1144 = vmul.f32 %v1048, %v1142
        %v1145 = vld [vmem:[#allocation17] sm:$0x1]
        %v1147 = vlaneseq
        %v1148 = vshrl.u32 %v1147, 7
        %v1149 = vsub.s32 0, %v1148
        %v1150 = vrot.slane %v1145, %v1149
        %v1152 = vmul.f32 %v1143, %v1150
        %v1153 = vmul.f32 %v1144, %v1150
        %v1156 = vcombine.high %v1152, %v1152
        %v1158 = vunpack.c.l.s4 1966171168
        %v1159 = vunpack.c.0.s8 %v1158
        %v1160 = vlaneseq
        %v1161 = vshrl.u32 %v1160, 7
        %v1162 = vsub.s32 %v1159, %v1161
        %v1163 = vrot.slane %v1152, %v1162
        %v1165 = vunpack.c.l.s4 1966171168
        %v1166 = vunpack.c.0.s8 %v1165
        %v1167 = vlaneseq
        %v1168 = vshrl.u32 %v1167, 7
        %v1169 = vsub.s32 %v1166, %v1168
        %v1170 = vrot.slane %v1156, %v1169
        %v1171 = vcombine.high %v1163, %v1163
        %v1172 = vcombine.high %v1170, %v1170
        %v1174 = vunpack.c.l.s4 1966171168
        %v1175 = vunpack.c.0.s8 %v1174
        %v1176 = vlaneseq
        %v1177 = vshrl.u32 %v1176, 7
        %v1178 = vsub.s32 %v1175, %v1177
        %v1179 = vrot.slane %v1163, %v1178
        %v1181 = vunpack.c.l.s4 1966171168
        %v1182 = vunpack.c.0.s8 %v1181
        %v1183 = vlaneseq
        %v1184 = vshrl.u32 %v1183, 7
        %v1185 = vsub.s32 %v1182, %v1184
        %v1186 = vrot.slane %v1170, %v1185
        %v1188 = vunpack.c.l.s4 1966171168
        %v1189 = vunpack.c.0.s8 %v1188
        %v1190 = vlaneseq
        %v1191 = vshrl.u32 %v1190, 7
        %v1192 = vsub.s32 %v1189, %v1191
        %v1193 = vrot.slane %v1171, %v1192
        %v1195 = vunpack.c.l.s4 1966171168
        %v1196 = vunpack.c.0.s8 %v1195
        %v1197 = vlaneseq
        %v1198 = vshrl.u32 %v1197, 7
        %v1199 = vsub.s32 %v1196, %v1198
        %v1200 = vrot.slane %v1172, %v1199
        %v1201 = vcombine.high %v1179, %v1179
        %v1202 = vcombine.high %v1186, %v1186
        %v1203 = vcombine.high %v1193, %v1193
        %v1204 = vcombine.high %v1200, %v1200
        %v1205 = vcombine.high %v1153, %v1153
        %v1207 = vunpack.c.l.s4 1966171168
        %v1208 = vunpack.c.0.s8 %v1207
        %v1209 = vlaneseq
        %v1210 = vshrl.u32 %v1209, 7
        %v1211 = vsub.s32 %v1208, %v1210
        %v1212 = vrot.slane %v1153, %v1211
        %v1214 = vunpack.c.l.s4 1966171168
        %v1215 = vunpack.c.0.s8 %v1214
        %v1216 = vlaneseq
        %v1217 = vshrl.u32 %v1216, 7
        %v1218 = vsub.s32 %v1215, %v1217
        %v1219 = vrot.slane %v1205, %v1218
        %v1220 = vcombine.high %v1212, %v1212
        %v1221 = vcombine.high %v1219, %v1219
        %v1223 = vunpack.c.l.s4 1966171168
        %v1224 = vunpack.c.0.s8 %v1223
        %v1225 = vlaneseq
        %v1226 = vshrl.u32 %v1225, 7
        %v1227 = vsub.s32 %v1224, %v1226
        %v1228 = vrot.slane %v1212, %v1227
        %v1230 = vunpack.c.l.s4 1966171168
        %v1231 = vunpack.c.0.s8 %v1230
        %v1232 = vlaneseq
        %v1233 = vshrl.u32 %v1232, 7
        %v1234 = vsub.s32 %v1231, %v1233
        %v1235 = vrot.slane %v1219, %v1234
        %v1237 = vunpack.c.l.s4 1966171168
        %v1238 = vunpack.c.0.s8 %v1237
        %v1239 = vlaneseq
        %v1240 = vshrl.u32 %v1239, 7
        %v1241 = vsub.s32 %v1238, %v1240
        %v1242 = vrot.slane %v1220, %v1241
        %v1244 = vunpack.c.l.s4 1966171168
        %v1245 = vunpack.c.0.s8 %v1244
        %v1246 = vlaneseq
        %v1247 = vshrl.u32 %v1246, 7
        %v1248 = vsub.s32 %v1245, %v1247
        %v1249 = vrot.slane %v1221, %v1248
        %v1250 = vcombine.high %v1228, %v1228
        %v1251 = vcombine.high %v1235, %v1235
        %v1252 = vcombine.high %v1242, %v1242
        %v1253 = vcombine.high %v1249, %v1249
        %v1254 = vlaneseq
        %v1255 = vshrl.u32 %v1254, 7
        %v1256 = vsub.s32 0, %v1255
        %v1257 = vrot.slane %v1179, %v1256
        %v1258 = vlaneseq
        %v1259 = vshrl.u32 %v1258, 7
        %v1260 = vsub.s32 0, %v1259
        %v1261 = vrot.slane %v1193, %v1260
        %v1262 = vlaneseq
        %v1263 = vshrl.u32 %v1262, 7
        %v1264 = vsub.s32 0, %v1263
        %v1265 = vrot.slane %v1201, %v1264
        %v1266 = vlaneseq
        %v1267 = vshrl.u32 %v1266, 7
        %v1268 = vsub.s32 0, %v1267
        %v1269 = vrot.slane %v1203, %v1268
        %v1270 = vlaneseq
        %v1271 = vshrl.u32 %v1270, 7
        %v1272 = vsub.s32 0, %v1271
        %v1273 = vrot.slane %v1186, %v1272
        %v1274 = vlaneseq
        %v1275 = vshrl.u32 %v1274, 7
        %v1276 = vsub.s32 0, %v1275
        %v1277 = vrot.slane %v1200, %v1276
        %v1278 = vlaneseq
        %v1279 = vshrl.u32 %v1278, 7
        %v1280 = vsub.s32 0, %v1279
        %v1281 = vrot.slane %v1202, %v1280
        %v1282 = vlaneseq
        %v1283 = vshrl.u32 %v1282, 7
        %v1284 = vsub.s32 0, %v1283
        %v1285 = vrot.slane %v1204, %v1284
        %v1286 = vlaneseq
        %v1287 = vshrl.u32 %v1286, 7
        %v1288 = vsub.s32 0, %v1287
        %v1289 = vrot.slane %v1228, %v1288
        %v1290 = vlaneseq
        %v1291 = vshrl.u32 %v1290, 7
        %v1292 = vsub.s32 0, %v1291
        %v1293 = vrot.slane %v1242, %v1292
        %v1294 = vlaneseq
        %v1295 = vshrl.u32 %v1294, 7
        %v1296 = vsub.s32 0, %v1295
        %v1297 = vrot.slane %v1250, %v1296
        %v1298 = vlaneseq
        %v1299 = vshrl.u32 %v1298, 7
        %v1300 = vsub.s32 0, %v1299
        %v1301 = vrot.slane %v1252, %v1300
        %v1302 = vlaneseq
        %v1303 = vshrl.u32 %v1302, 7
        %v1304 = vsub.s32 0, %v1303
        %v1305 = vrot.slane %v1235, %v1304
        %v1306 = vlaneseq
        %v1307 = vshrl.u32 %v1306, 7
        %v1308 = vsub.s32 0, %v1307
        %v1309 = vrot.slane %v1249, %v1308
        %v1310 = vlaneseq
        %v1311 = vshrl.u32 %v1310, 7
        %v1312 = vsub.s32 0, %v1311
        %v1313 = vrot.slane %v1251, %v1312
        %v1314 = vlaneseq
        %v1315 = vshrl.u32 %v1314, 7
        %v1316 = vsub.s32 0, %v1315
        %v1317 = vrot.slane %v1253, %v1316
        %v1334 = vmul.f32 %v923, %v1257
        %v1335 = vmul.f32 %v924, %v1257
        %v1336 = vmul.f32 %v925, %v1261
        %v1337 = vmul.f32 %v926, %v1261
        %v1338 = vmul.f32 %v927, %v1265
        %v1339 = vmul.f32 %v928, %v1265
        %v1340 = vmul.f32 %v929, %v1269
        %v1341 = vmul.f32 %v930, %v1269
        %v1342 = vmul.f32 %v931, %v1273
        %v1343 = vmul.f32 %v932, %v1273
        %v1344 = vmul.f32 %v933, %v1277
        %v1345 = vmul.f32 %v934, %v1277
        %v1346 = vmul.f32 %v935, %v1281
        %v1347 = vmul.f32 %v936, %v1281
        %v1348 = vmul.f32 %v937, %v1285
        %v1349 = vmul.f32 %v938, %v1285
        %v1350 = vmul.f32 %v939, %v1289
        %v1351 = vmul.f32 %v940, %v1289
        %v1352 = vmul.f32 %v941, %v1293
        %v1353 = vmul.f32 %v942, %v1293
        %v1354 = vmul.f32 %v943, %v1297
        %v1355 = vmul.f32 %v944, %v1297
        %v1356 = vmul.f32 %v945, %v1301
        %v1357 = vmul.f32 %v946, %v1301
        %v1358 = vmul.f32 %v947, %v1305
        %v1359 = vmul.f32 %v948, %v1305
        %v1360 = vmul.f32 %v949, %v1309
        %v1361 = vmul.f32 %v950, %v1309
        %v1362 = vmul.f32 %v951, %v1313
        %v1363 = vmul.f32 %v952, %v1313
        %v1364 = vmul.f32 %v953, %v1317
        %v1365 = vmul.f32 %v954, %v1317
        %v1366 = vsel %vm601, %v1334, 0.0
        %1367 = vadd.xlane.f32.xlu0 %v1366
        %v1368 = vpop.xlane.xlu0 %1367
        %v1369 = vsel %vm601, %v1335, 0.0
        %1370 = vadd.xlane.f32.xlu0 %v1369
        %v1371 = vpop.xlane.xlu0 %1370
        %v1372 = vsel %vm601, %v1336, 0.0
        %1373 = vadd.xlane.f32.xlu0 %v1372
        %v1374 = vpop.xlane.xlu0 %1373
        %v1375 = vsel %vm601, %v1337, 0.0
        %1376 = vadd.xlane.f32.xlu0 %v1375
        %v1377 = vpop.xlane.xlu0 %1376
        %v1378 = vsel %vm601, %v1338, 0.0
        %1379 = vadd.xlane.f32.xlu0 %v1378
        %v1380 = vpop.xlane.xlu0 %1379
        %v1381 = vsel %vm601, %v1339, 0.0
        %1382 = vadd.xlane.f32.xlu0 %v1381
        %v1383 = vpop.xlane.xlu0 %1382
        %v1384 = vsel %vm601, %v1340, 0.0
        %1385 = vadd.xlane.f32.xlu0 %v1384
        %v1386 = vpop.xlane.xlu0 %1385
        %v1387 = vsel %vm601, %v1341, 0.0
        %1388 = vadd.xlane.f32.xlu0 %v1387
        %v1389 = vpop.xlane.xlu0 %1388
        %v1390 = vsel %vm601, %v1342, 0.0
        %1391 = vadd.xlane.f32.xlu0 %v1390
        %v1392 = vpop.xlane.xlu0 %1391
        %v1393 = vsel %vm601, %v1343, 0.0
        %1394 = vadd.xlane.f32.xlu0 %v1393
        %v1395 = vpop.xlane.xlu0 %1394
        %v1396 = vsel %vm601, %v1344, 0.0
        %1397 = vadd.xlane.f32.xlu0 %v1396
        %v1398 = vpop.xlane.xlu0 %1397
        %v1399 = vsel %vm601, %v1345, 0.0
        %1400 = vadd.xlane.f32.xlu0 %v1399
        %v1401 = vpop.xlane.xlu0 %1400
        %v1402 = vsel %vm601, %v1346, 0.0
        %1403 = vadd.xlane.f32.xlu0 %v1402
        %v1404 = vpop.xlane.xlu0 %1403
        %v1405 = vsel %vm601, %v1347, 0.0
        %1406 = vadd.xlane.f32.xlu0 %v1405
        %v1407 = vpop.xlane.xlu0 %1406
        %v1408 = vsel %vm601, %v1348, 0.0
        %1409 = vadd.xlane.f32.xlu0 %v1408
        %v1410 = vpop.xlane.xlu0 %1409
        %v1411 = vsel %vm601, %v1349, 0.0
        %1412 = vadd.xlane.f32.xlu0 %v1411
        %v1413 = vpop.xlane.xlu0 %1412
        %v1414 = vsel %vm601, %v1350, 0.0
        %1415 = vadd.xlane.f32.xlu0 %v1414
        %v1416 = vpop.xlane.xlu0 %1415
        %v1417 = vsel %vm601, %v1351, 0.0
        %1418 = vadd.xlane.f32.xlu0 %v1417
        %v1419 = vpop.xlane.xlu0 %1418
        %v1420 = vsel %vm601, %v1352, 0.0
        %1421 = vadd.xlane.f32.xlu0 %v1420
        %v1422 = vpop.xlane.xlu0 %1421
        %v1423 = vsel %vm601, %v1353, 0.0
        %1424 = vadd.xlane.f32.xlu0 %v1423
        %v1425 = vpop.xlane.xlu0 %1424
        %v1426 = vsel %vm601, %v1354, 0.0
        %1427 = vadd.xlane.f32.xlu0 %v1426
        %v1428 = vpop.xlane.xlu0 %1427
        %v1429 = vsel %vm601, %v1355, 0.0
        %1430 = vadd.xlane.f32.xlu0 %v1429
        %v1431 = vpop.xlane.xlu0 %1430
        %v1432 = vsel %vm601, %v1356, 0.0
        %1433 = vadd.xlane.f32.xlu0 %v1432
        %v1434 = vpop.xlane.xlu0 %1433
        %v1435 = vsel %vm601, %v1357, 0.0
        %1436 = vadd.xlane.f32.xlu0 %v1435
        %v1437 = vpop.xlane.xlu0 %1436
        %v1438 = vsel %vm601, %v1358, 0.0
        %1439 = vadd.xlane.f32.xlu0 %v1438
        %v1440 = vpop.xlane.xlu0 %1439
        %v1441 = vsel %vm601, %v1359, 0.0
        %1442 = vadd.xlane.f32.xlu0 %v1441
        %v1443 = vpop.xlane.xlu0 %1442
        %v1444 = vsel %vm601, %v1360, 0.0
        %1445 = vadd.xlane.f32.xlu0 %v1444
        %v1446 = vpop.xlane.xlu0 %1445
        %v1447 = vsel %vm601, %v1361, 0.0
        %1448 = vadd.xlane.f32.xlu0 %v1447
        %v1449 = vpop.xlane.xlu0 %1448
        %v1450 = vsel %vm601, %v1362, 0.0
        %1451 = vadd.xlane.f32.xlu0 %v1450
        %v1452 = vpop.xlane.xlu0 %1451
        %v1453 = vsel %vm601, %v1363, 0.0
        %1454 = vadd.xlane.f32.xlu0 %v1453
        %v1455 = vpop.xlane.xlu0 %1454
        %v1456 = vsel %vm601, %v1364, 0.0
        %1457 = vadd.xlane.f32.xlu0 %v1456
        %v1458 = vpop.xlane.xlu0 %1457
        %v1459 = vsel %vm601, %v1365, 0.0
        %1460 = vadd.xlane.f32.xlu0 %v1459
        %v1461 = vpop.xlane.xlu0 %1460
        %v1494 = vlaneseq
        %v1495 = vand.u32 %v1494, 127
        %v1496 = vlaneseq
        %v1497 = vshrl.u32 %v1496, 7
        %v1498 = vsub.s32 %v1495, %v1497
        %v1499 = vrot.slane %v1368, %v1498
        %v1500 = vadd.s32 %v1495, 4294967288
        %v1501 = vlaneseq
        %v1502 = vshrl.u32 %v1501, 7
        %v1503 = vsub.s32 %v1500, %v1502
        %v1504 = vrot.slane %v1371, %v1503
        %vm1505 = vcmask 130112
        %v1506 = vsel %vm1505, %v1504, %v1499
        %v1507 = vlaneseq
        %v1508 = vshrl.u32 %v1507, 7
        %v1509 = vsub.s32 %v1495, %v1508
        %v1510 = vrot.slane %v1374, %v1509
        %v1511 = vlaneseq
        %v1512 = vshrl.u32 %v1511, 7
        %v1513 = vsub.s32 %v1500, %v1512
        %v1514 = vrot.slane %v1377, %v1513
        %v1515 = vsel %vm1505, %v1514, %v1510
        %v1516 = vlaneseq
        %v1517 = vshrl.u32 %v1516, 7
        %v1518 = vsub.s32 %v1495, %v1517
        %v1519 = vrot.slane %v1380, %v1518
        %v1520 = vlaneseq
        %v1521 = vshrl.u32 %v1520, 7
        %v1522 = vsub.s32 %v1500, %v1521
        %v1523 = vrot.slane %v1383, %v1522
        %v1524 = vsel %vm1505, %v1523, %v1519
        %v1525 = vlaneseq
        %v1526 = vshrl.u32 %v1525, 7
        %v1527 = vsub.s32 %v1495, %v1526
        %v1528 = vrot.slane %v1386, %v1527
        %v1529 = vlaneseq
        %v1530 = vshrl.u32 %v1529, 7
        %v1531 = vsub.s32 %v1500, %v1530
        %v1532 = vrot.slane %v1389, %v1531
        %v1533 = vsel %vm1505, %v1532, %v1528
        %v1534 = vlaneseq
        %v1535 = vshrl.u32 %v1534, 7
        %v1536 = vsub.s32 %v1495, %v1535
        %v1537 = vrot.slane %v1392, %v1536
        %v1538 = vlaneseq
        %v1539 = vshrl.u32 %v1538, 7
        %v1540 = vsub.s32 %v1500, %v1539
        %v1541 = vrot.slane %v1395, %v1540
        %v1542 = vsel %vm1505, %v1541, %v1537
        %v1543 = vlaneseq
        %v1544 = vshrl.u32 %v1543, 7
        %v1545 = vsub.s32 %v1495, %v1544
        %v1546 = vrot.slane %v1398, %v1545
        %v1547 = vlaneseq
        %v1548 = vshrl.u32 %v1547, 7
        %v1549 = vsub.s32 %v1500, %v1548
        %v1550 = vrot.slane %v1401, %v1549
        %v1551 = vsel %vm1505, %v1550, %v1546
        %v1552 = vlaneseq
        %v1553 = vshrl.u32 %v1552, 7
        %v1554 = vsub.s32 %v1495, %v1553
        %v1555 = vrot.slane %v1404, %v1554
        %v1556 = vlaneseq
        %v1557 = vshrl.u32 %v1556, 7
        %v1558 = vsub.s32 %v1500, %v1557
        %v1559 = vrot.slane %v1407, %v1558
        %v1560 = vsel %vm1505, %v1559, %v1555
        %v1561 = vlaneseq
        %v1562 = vshrl.u32 %v1561, 7
        %v1563 = vsub.s32 %v1495, %v1562
        %v1564 = vrot.slane %v1410, %v1563
        %v1565 = vlaneseq
        %v1566 = vshrl.u32 %v1565, 7
        %v1567 = vsub.s32 %v1500, %v1566
        %v1568 = vrot.slane %v1413, %v1567
        %v1569 = vsel %vm1505, %v1568, %v1564
        %v1570 = vlaneseq
        %v1571 = vshrl.u32 %v1570, 7
        %v1572 = vsub.s32 %v1495, %v1571
        %v1573 = vrot.slane %v1416, %v1572
        %v1574 = vlaneseq
        %v1575 = vshrl.u32 %v1574, 7
        %v1576 = vsub.s32 %v1500, %v1575
        %v1577 = vrot.slane %v1419, %v1576
        %v1578 = vsel %vm1505, %v1577, %v1573
        %v1579 = vlaneseq
        %v1580 = vshrl.u32 %v1579, 7
        %v1581 = vsub.s32 %v1495, %v1580
        %v1582 = vrot.slane %v1422, %v1581
        %v1583 = vlaneseq
        %v1584 = vshrl.u32 %v1583, 7
        %v1585 = vsub.s32 %v1500, %v1584
        %v1586 = vrot.slane %v1425, %v1585
        %v1587 = vsel %vm1505, %v1586, %v1582
        %v1588 = vlaneseq
        %v1589 = vshrl.u32 %v1588, 7
        %v1590 = vsub.s32 %v1495, %v1589
        %v1591 = vrot.slane %v1428, %v1590
        %v1592 = vlaneseq
        %v1593 = vshrl.u32 %v1592, 7
        %v1594 = vsub.s32 %v1500, %v1593
        %v1595 = vrot.slane %v1431, %v1594
        %v1596 = vsel %vm1505, %v1595, %v1591
        %v1597 = vlaneseq
        %v1598 = vshrl.u32 %v1597, 7
        %v1599 = vsub.s32 %v1495, %v1598
        %v1600 = vrot.slane %v1434, %v1599
        %v1601 = vlaneseq
        %v1602 = vshrl.u32 %v1601, 7
        %v1603 = vsub.s32 %v1500, %v1602
        %v1604 = vrot.slane %v1437, %v1603
        %v1605 = vsel %vm1505, %v1604, %v1600
        %v1606 = vlaneseq
        %v1607 = vshrl.u32 %v1606, 7
        %v1608 = vsub.s32 %v1495, %v1607
        %v1609 = vrot.slane %v1440, %v1608
        %v1610 = vlaneseq
        %v1611 = vshrl.u32 %v1610, 7
        %v1612 = vsub.s32 %v1500, %v1611
        %v1613 = vrot.slane %v1443, %v1612
        %v1614 = vsel %vm1505, %v1613, %v1609
        %v1615 = vlaneseq
        %v1616 = vshrl.u32 %v1615, 7
        %v1617 = vsub.s32 %v1495, %v1616
        %v1618 = vrot.slane %v1446, %v1617
        %v1619 = vlaneseq
        %v1620 = vshrl.u32 %v1619, 7
        %v1621 = vsub.s32 %v1500, %v1620
        %v1622 = vrot.slane %v1449, %v1621
        %v1623 = vsel %vm1505, %v1622, %v1618
        %v1624 = vlaneseq
        %v1625 = vshrl.u32 %v1624, 7
        %v1626 = vsub.s32 %v1495, %v1625
        %v1627 = vrot.slane %v1452, %v1626
        %v1628 = vlaneseq
        %v1629 = vshrl.u32 %v1628, 7
        %v1630 = vsub.s32 %v1500, %v1629
        %v1631 = vrot.slane %v1455, %v1630
        %v1632 = vsel %vm1505, %v1631, %v1627
        %v1633 = vlaneseq
        %v1634 = vshrl.u32 %v1633, 7
        %v1635 = vsub.s32 %v1495, %v1634
        %v1636 = vrot.slane %v1458, %v1635
        %v1637 = vlaneseq
        %v1638 = vshrl.u32 %v1637, 7
        %v1639 = vsub.s32 %v1500, %v1638
        %v1640 = vrot.slane %v1461, %v1639
        %v1641 = vsel %vm1505, %v1640, %v1636
        %vm1642 = vcmask 1041409
        %v1643 = vsel %vm1642, %v1515, %v1506
        %vm1644 = vcmask 1042434
        %v1645 = vsel %vm1644, %v1524, %v1643
        %vm1646 = vcmask 1043459
        %v1647 = vsel %vm1646, %v1533, %v1645
        %vm1648 = vcmask 1044484
        %v1649 = vsel %vm1648, %v1542, %v1647
        %vm1650 = vcmask 1045509
        %v1651 = vsel %vm1650, %v1551, %v1649
        %vm1652 = vcmask 1046534
        %v1653 = vsel %vm1652, %v1560, %v1651
        %vm1654 = vcmask 1047559
        %v1655 = vsel %vm1654, %v1569, %v1653
        %v1656 = vsel %vm1642, %v1587, %v1578
        %v1657 = vsel %vm1644, %v1596, %v1656
        %v1658 = vsel %vm1646, %v1605, %v1657
        %v1659 = vsel %vm1648, %v1614, %v1658
        %v1660 = vsel %vm1650, %v1623, %v1659
        %v1661 = vsel %vm1652, %v1632, %v1660
        %v1662 = vsel %vm1654, %v1641, %v1661
        %vm1665 = vcmask 130048
        %v1666 = vsel %vm1665, %v1655, -inf
        %1667 = vmax.xlane.f32.xlu0 %v1666
        %v1668 = vpop.xlane.xlu0 %1667
        %v1669 = vsel %vm1665, %v1662, -inf
        %1670 = vmax.xlane.f32.xlu0 %v1669
        %v1671 = vpop.xlane.xlu0 %1670
        %v1674 = vlaneseq
        %v1675 = vshrl.u32 %v1674, 7
        %v1676 = vsub.s32 0, %v1675
        %v1677 = vrot.slane %v1668, %v1676
        %v1678 = vlaneseq
        %v1679 = vshrl.u32 %v1678, 7
        %v1680 = vsub.s32 1, %v1679
        %v1681 = vrot.slane %v1668, %v1680
        %v1682 = vlaneseq
        %v1683 = vshrl.u32 %v1682, 7
        %v1684 = vsub.s32 2, %v1683
        %v1685 = vrot.slane %v1668, %v1684
        %v1686 = vlaneseq
        %v1687 = vshrl.u32 %v1686, 7
        %v1688 = vsub.s32 3, %v1687
        %v1689 = vrot.slane %v1668, %v1688
        %v1690 = vlaneseq
        %v1691 = vshrl.u32 %v1690, 7
        %v1692 = vsub.s32 4, %v1691
        %v1693 = vrot.slane %v1668, %v1692
        %v1694 = vlaneseq
        %v1695 = vshrl.u32 %v1694, 7
        %v1696 = vsub.s32 5, %v1695
        %v1697 = vrot.slane %v1668, %v1696
        %v1698 = vlaneseq
        %v1699 = vshrl.u32 %v1698, 7
        %v1700 = vsub.s32 6, %v1699
        %v1701 = vrot.slane %v1668, %v1700
        %v1702 = vlaneseq
        %v1703 = vshrl.u32 %v1702, 7
        %v1704 = vsub.s32 7, %v1703
        %v1705 = vrot.slane %v1668, %v1704
        %v1706 = vlaneseq
        %v1707 = vshrl.u32 %v1706, 7
        %v1708 = vsub.s32 0, %v1707
        %v1709 = vrot.slane %v1671, %v1708
        %v1710 = vlaneseq
        %v1711 = vshrl.u32 %v1710, 7
        %v1712 = vsub.s32 1, %v1711
        %v1713 = vrot.slane %v1671, %v1712
        %v1714 = vlaneseq
        %v1715 = vshrl.u32 %v1714, 7
        %v1716 = vsub.s32 2, %v1715
        %v1717 = vrot.slane %v1671, %v1716
        %v1718 = vlaneseq
        %v1719 = vshrl.u32 %v1718, 7
        %v1720 = vsub.s32 3, %v1719
        %v1721 = vrot.slane %v1671, %v1720
        %v1722 = vlaneseq
        %v1723 = vshrl.u32 %v1722, 7
        %v1724 = vsub.s32 4, %v1723
        %v1725 = vrot.slane %v1671, %v1724
        %v1726 = vlaneseq
        %v1727 = vshrl.u32 %v1726, 7
        %v1728 = vsub.s32 5, %v1727
        %v1729 = vrot.slane %v1671, %v1728
        %v1730 = vlaneseq
        %v1731 = vshrl.u32 %v1730, 7
        %v1732 = vsub.s32 6, %v1731
        %v1733 = vrot.slane %v1671, %v1732
        %v1734 = vlaneseq
        %v1735 = vshrl.u32 %v1734, 7
        %v1736 = vsub.s32 7, %v1735
        %v1737 = vrot.slane %v1671, %v1736
        %v1754 = vsub.f32 %v1368, %v1677
        %v1755 = vsub.f32 %v1371, %v1677
        %v1756 = vsub.f32 %v1374, %v1681
        %v1757 = vsub.f32 %v1377, %v1681
        %v1758 = vsub.f32 %v1380, %v1685
        %v1759 = vsub.f32 %v1383, %v1685
        %v1760 = vsub.f32 %v1386, %v1689
        %v1761 = vsub.f32 %v1389, %v1689
        %v1762 = vsub.f32 %v1392, %v1693
        %v1763 = vsub.f32 %v1395, %v1693
        %v1764 = vsub.f32 %v1398, %v1697
        %v1765 = vsub.f32 %v1401, %v1697
        %v1766 = vsub.f32 %v1404, %v1701
        %v1767 = vsub.f32 %v1407, %v1701
        %v1768 = vsub.f32 %v1410, %v1705
        %v1769 = vsub.f32 %v1413, %v1705
        %v1770 = vsub.f32 %v1416, %v1709
        %v1771 = vsub.f32 %v1419, %v1709
        %v1772 = vsub.f32 %v1422, %v1713
        %v1773 = vsub.f32 %v1425, %v1713
        %v1774 = vsub.f32 %v1428, %v1717
        %v1775 = vsub.f32 %v1431, %v1717
        %v1776 = vsub.f32 %v1434, %v1721
        %v1777 = vsub.f32 %v1437, %v1721
        %v1778 = vsub.f32 %v1440, %v1725
        %v1779 = vsub.f32 %v1443, %v1725
        %v1780 = vsub.f32 %v1446, %v1729
        %v1781 = vsub.f32 %v1449, %v1729
        %v1782 = vsub.f32 %v1452, %v1733
        %v1783 = vsub.f32 %v1455, %v1733
        %v1784 = vsub.f32 %v1458, %v1737
        %v1785 = vsub.f32 %v1461, %v1737
        %v1786 = vmul.f32 %v1754, 1.442695
        %v1787 = vpow.pop %v1786
        %v1788 = vmul.f32 %v1755, 1.442695
        %v1789 = vpow.pop %v1788
        %v1790 = vmul.f32 %v1756, 1.442695
        %v1791 = vpow.pop %v1790
        %v1792 = vmul.f32 %v1757, 1.442695
        %v1793 = vpow.pop %v1792
        %v1794 = vmul.f32 %v1758, 1.442695
        %v1795 = vpow.pop %v1794
        %v1796 = vmul.f32 %v1759, 1.442695
        %v1797 = vpow.pop %v1796
        %v1798 = vmul.f32 %v1760, 1.442695
        %v1799 = vpow.pop %v1798
        %v1800 = vmul.f32 %v1761, 1.442695
        %v1801 = vpow.pop %v1800
        %v1802 = vmul.f32 %v1762, 1.442695
        %v1803 = vpow.pop %v1802
        %v1804 = vmul.f32 %v1763, 1.442695
        %v1805 = vpow.pop %v1804
        %v1806 = vmul.f32 %v1764, 1.442695
        %v1807 = vpow.pop %v1806
        %v1808 = vmul.f32 %v1765, 1.442695
        %v1809 = vpow.pop %v1808
        %v1810 = vmul.f32 %v1766, 1.442695
        %v1811 = vpow.pop %v1810
        %v1812 = vmul.f32 %v1767, 1.442695
        %v1813 = vpow.pop %v1812
        %v1814 = vmul.f32 %v1768, 1.442695
        %v1815 = vpow.pop %v1814
        %v1816 = vmul.f32 %v1769, 1.442695
        %v1817 = vpow.pop %v1816
        %v1818 = vmul.f32 %v1770, 1.442695
        %v1819 = vpow.pop %v1818
        %v1820 = vmul.f32 %v1771, 1.442695
        %v1821 = vpow.pop %v1820
        %v1822 = vmul.f32 %v1772, 1.442695
        %v1823 = vpow.pop %v1822
        %v1824 = vmul.f32 %v1773, 1.442695
        %v1825 = vpow.pop %v1824
        %v1826 = vmul.f32 %v1774, 1.442695
        %v1827 = vpow.pop %v1826
        %v1828 = vmul.f32 %v1775, 1.442695
        %v1829 = vpow.pop %v1828
        %v1830 = vmul.f32 %v1776, 1.442695
        %v1831 = vpow.pop %v1830
        %v1832 = vmul.f32 %v1777, 1.442695
        %v1833 = vpow.pop %v1832
        %v1834 = vmul.f32 %v1778, 1.442695
        %v1835 = vpow.pop %v1834
        %v1836 = vmul.f32 %v1779, 1.442695
        %v1837 = vpow.pop %v1836
        %v1838 = vmul.f32 %v1780, 1.442695
        %v1839 = vpow.pop %v1838
        %v1840 = vmul.f32 %v1781, 1.442695
        %v1841 = vpow.pop %v1840
        %v1842 = vmul.f32 %v1782, 1.442695
        %v1843 = vpow.pop %v1842
        %v1844 = vmul.f32 %v1783, 1.442695
        %v1845 = vpow.pop %v1844
        %v1846 = vmul.f32 %v1784, 1.442695
        %v1847 = vpow.pop %v1846
        %v1848 = vmul.f32 %v1785, 1.442695
        %v1849 = vpow.pop %v1848
        %1882 = vset.pattern.permute.xlu0 0
        %1883 = vperm.xlu0 %1882, %v1787
        %v1884 = vpop.permute.xlu0 %1883
        %1885 = vset.pattern.permute.xlu0 0
        %1886 = vperm.xlu0 %1885, %v1789
        %v1887 = vpop.permute.xlu0 %1886
        %1888 = vset.pattern.permute.xlu0 0
        %1889 = vperm.xlu0 %1888, %v1791
        %v1890 = vpop.permute.xlu0 %1889
        %1891 = vset.pattern.permute.xlu0 0
        %1892 = vperm.xlu0 %1891, %v1793
        %v1893 = vpop.permute.xlu0 %1892
        %1894 = vset.pattern.permute.xlu0 0
        %1895 = vperm.xlu0 %1894, %v1795
        %v1896 = vpop.permute.xlu0 %1895
        %1897 = vset.pattern.permute.xlu0 0
        %1898 = vperm.xlu0 %1897, %v1797
        %v1899 = vpop.permute.xlu0 %1898
        %1900 = vset.pattern.permute.xlu0 0
        %1901 = vperm.xlu0 %1900, %v1799
        %v1902 = vpop.permute.xlu0 %1901
        %1903 = vset.pattern.permute.xlu0 0
        %1904 = vperm.xlu0 %1903, %v1801
        %v1905 = vpop.permute.xlu0 %1904
        %1906 = vset.pattern.permute.xlu0 0
        %1907 = vperm.xlu0 %1906, %v1803
        %v1908 = vpop.permute.xlu0 %1907
        %1909 = vset.pattern.permute.xlu0 0
        %1910 = vperm.xlu0 %1909, %v1805
        %v1911 = vpop.permute.xlu0 %1910
        %1912 = vset.pattern.permute.xlu0 0
        %1913 = vperm.xlu0 %1912, %v1807
        %v1914 = vpop.permute.xlu0 %1913
        %1915 = vset.pattern.permute.xlu0 0
        %1916 = vperm.xlu0 %1915, %v1809
        %v1917 = vpop.permute.xlu0 %1916
        %1918 = vset.pattern.permute.xlu0 0
        %1919 = vperm.xlu0 %1918, %v1811
        %v1920 = vpop.permute.xlu0 %1919
        %1921 = vset.pattern.permute.xlu0 0
        %1922 = vperm.xlu0 %1921, %v1813
        %v1923 = vpop.permute.xlu0 %1922
        %1924 = vset.pattern.permute.xlu0 0
        %1925 = vperm.xlu0 %1924, %v1815
        %v1926 = vpop.permute.xlu0 %1925
        %1927 = vset.pattern.permute.xlu0 0
        %1928 = vperm.xlu0 %1927, %v1817
        %v1929 = vpop.permute.xlu0 %1928
        %1930 = vset.pattern.permute.xlu0 0
        %1931 = vperm.xlu0 %1930, %v1819
        %v1932 = vpop.permute.xlu0 %1931
        %1933 = vset.pattern.permute.xlu0 0
        %1934 = vperm.xlu0 %1933, %v1821
        %v1935 = vpop.permute.xlu0 %1934
        %1936 = vset.pattern.permute.xlu0 0
        %1937 = vperm.xlu0 %1936, %v1823
        %v1938 = vpop.permute.xlu0 %1937
        %1939 = vset.pattern.permute.xlu0 0
        %1940 = vperm.xlu0 %1939, %v1825
        %v1941 = vpop.permute.xlu0 %1940
        %1942 = vset.pattern.permute.xlu0 0
        %1943 = vperm.xlu0 %1942, %v1827
        %v1944 = vpop.permute.xlu0 %1943
        %1945 = vset.pattern.permute.xlu0 0
        %1946 = vperm.xlu0 %1945, %v1829
        %v1947 = vpop.permute.xlu0 %1946
        %1948 = vset.pattern.permute.xlu0 0
        %1949 = vperm.xlu0 %1948, %v1831
        %v1950 = vpop.permute.xlu0 %1949
        %1951 = vset.pattern.permute.xlu0 0
        %1952 = vperm.xlu0 %1951, %v1833
        %v1953 = vpop.permute.xlu0 %1952
        %1954 = vset.pattern.permute.xlu0 0
        %1955 = vperm.xlu0 %1954, %v1835
        %v1956 = vpop.permute.xlu0 %1955
        %1957 = vset.pattern.permute.xlu0 0
        %1958 = vperm.xlu0 %1957, %v1837
        %v1959 = vpop.permute.xlu0 %1958
        %1960 = vset.pattern.permute.xlu0 0
        %1961 = vperm.xlu0 %1960, %v1839
        %v1962 = vpop.permute.xlu0 %1961
        %1963 = vset.pattern.permute.xlu0 0
        %1964 = vperm.xlu0 %1963, %v1841
        %v1965 = vpop.permute.xlu0 %1964
        %1966 = vset.pattern.permute.xlu0 0
        %1967 = vperm.xlu0 %1966, %v1843
        %v1968 = vpop.permute.xlu0 %1967
        %1969 = vset.pattern.permute.xlu0 0
        %1970 = vperm.xlu0 %1969, %v1845
        %v1971 = vpop.permute.xlu0 %1970
        %1972 = vset.pattern.permute.xlu0 0
        %1973 = vperm.xlu0 %1972, %v1847
        %v1974 = vpop.permute.xlu0 %1973
        %1975 = vset.pattern.permute.xlu0 0
        %1976 = vperm.xlu0 %1975, %v1849
        %v1977 = vpop.permute.xlu0 %1976
        %v1978 = vlaneseq
        %v1979 = vshrl.u32 %v1978, 7
        %v1980 = vsub.s32 %v1495, %v1979
        %v1981 = vrot.slane %v1884, %v1980
        %v1982 = vlaneseq
        %v1983 = vshrl.u32 %v1982, 7
        %v1984 = vsub.s32 %v1500, %v1983
        %v1985 = vrot.slane %v1887, %v1984
        %v1986 = vsel %vm1505, %v1985, %v1981
        %v1987 = vlaneseq
        %v1988 = vshrl.u32 %v1987, 7
        %v1989 = vsub.s32 %v1495, %v1988
        %v1990 = vrot.slane %v1890, %v1989
        %v1991 = vlaneseq
        %v1992 = vshrl.u32 %v1991, 7
        %v1993 = vsub.s32 %v1500, %v1992
        %v1994 = vrot.slane %v1893, %v1993
        %v1995 = vsel %vm1505, %v1994, %v1990
        %v1996 = vlaneseq
        %v1997 = vshrl.u32 %v1996, 7
        %v1998 = vsub.s32 %v1495, %v1997
        %v1999 = vrot.slane %v1896, %v1998
        %v2000 = vlaneseq
        %v2001 = vshrl.u32 %v2000, 7
        %v2002 = vsub.s32 %v1500, %v2001
        %v2003 = vrot.slane %v1899, %v2002
        %v2004 = vsel %vm1505, %v2003, %v1999
        %v2005 = vlaneseq
        %v2006 = vshrl.u32 %v2005, 7
        %v2007 = vsub.s32 %v1495, %v2006
        %v2008 = vrot.slane %v1902, %v2007
        %v2009 = vlaneseq
        %v2010 = vshrl.u32 %v2009, 7
        %v2011 = vsub.s32 %v1500, %v2010
        %v2012 = vrot.slane %v1905, %v2011
        %v2013 = vsel %vm1505, %v2012, %v2008
        %v2014 = vlaneseq
        %v2015 = vshrl.u32 %v2014, 7
        %v2016 = vsub.s32 %v1495, %v2015
        %v2017 = vrot.slane %v1908, %v2016
        %v2018 = vlaneseq
        %v2019 = vshrl.u32 %v2018, 7
        %v2020 = vsub.s32 %v1500, %v2019
        %v2021 = vrot.slane %v1911, %v2020
        %v2022 = vsel %vm1505, %v2021, %v2017
        %v2023 = vlaneseq
        %v2024 = vshrl.u32 %v2023, 7
        %v2025 = vsub.s32 %v1495, %v2024
        %v2026 = vrot.slane %v1914, %v2025
        %v2027 = vlaneseq
        %v2028 = vshrl.u32 %v2027, 7
        %v2029 = vsub.s32 %v1500, %v2028
        %v2030 = vrot.slane %v1917, %v2029
        %v2031 = vsel %vm1505, %v2030, %v2026
        %v2032 = vlaneseq
        %v2033 = vshrl.u32 %v2032, 7
        %v2034 = vsub.s32 %v1495, %v2033
        %v2035 = vrot.slane %v1920, %v2034
        %v2036 = vlaneseq
        %v2037 = vshrl.u32 %v2036, 7
        %v2038 = vsub.s32 %v1500, %v2037
        %v2039 = vrot.slane %v1923, %v2038
        %v2040 = vsel %vm1505, %v2039, %v2035
        %v2041 = vlaneseq
        %v2042 = vshrl.u32 %v2041, 7
        %v2043 = vsub.s32 %v1495, %v2042
        %v2044 = vrot.slane %v1926, %v2043
        %v2045 = vlaneseq
        %v2046 = vshrl.u32 %v2045, 7
        %v2047 = vsub.s32 %v1500, %v2046
        %v2048 = vrot.slane %v1929, %v2047
        %v2049 = vsel %vm1505, %v2048, %v2044
        %v2050 = vlaneseq
        %v2051 = vshrl.u32 %v2050, 7
        %v2052 = vsub.s32 %v1495, %v2051
        %v2053 = vrot.slane %v1932, %v2052
        %v2054 = vlaneseq
        %v2055 = vshrl.u32 %v2054, 7
        %v2056 = vsub.s32 %v1500, %v2055
        %v2057 = vrot.slane %v1935, %v2056
        %v2058 = vsel %vm1505, %v2057, %v2053
        %v2059 = vlaneseq
        %v2060 = vshrl.u32 %v2059, 7
        %v2061 = vsub.s32 %v1495, %v2060
        %v2062 = vrot.slane %v1938, %v2061
        %v2063 = vlaneseq
        %v2064 = vshrl.u32 %v2063, 7
        %v2065 = vsub.s32 %v1500, %v2064
        %v2066 = vrot.slane %v1941, %v2065
        %v2067 = vsel %vm1505, %v2066, %v2062
        %v2068 = vlaneseq
        %v2069 = vshrl.u32 %v2068, 7
        %v2070 = vsub.s32 %v1495, %v2069
        %v2071 = vrot.slane %v1944, %v2070
        %v2072 = vlaneseq
        %v2073 = vshrl.u32 %v2072, 7
        %v2074 = vsub.s32 %v1500, %v2073
        %v2075 = vrot.slane %v1947, %v2074
        %v2076 = vsel %vm1505, %v2075, %v2071
        %v2077 = vlaneseq
        %v2078 = vshrl.u32 %v2077, 7
        %v2079 = vsub.s32 %v1495, %v2078
        %v2080 = vrot.slane %v1950, %v2079
        %v2081 = vlaneseq
        %v2082 = vshrl.u32 %v2081, 7
        %v2083 = vsub.s32 %v1500, %v2082
        %v2084 = vrot.slane %v1953, %v2083
        %v2085 = vsel %vm1505, %v2084, %v2080
        %v2086 = vlaneseq
        %v2087 = vshrl.u32 %v2086, 7
        %v2088 = vsub.s32 %v1495, %v2087
        %v2089 = vrot.slane %v1956, %v2088
        %v2090 = vlaneseq
        %v2091 = vshrl.u32 %v2090, 7
        %v2092 = vsub.s32 %v1500, %v2091
        %v2093 = vrot.slane %v1959, %v2092
        %v2094 = vsel %vm1505, %v2093, %v2089
        %v2095 = vlaneseq
        %v2096 = vshrl.u32 %v2095, 7
        %v2097 = vsub.s32 %v1495, %v2096
        %v2098 = vrot.slane %v1962, %v2097
        %v2099 = vlaneseq
        %v2100 = vshrl.u32 %v2099, 7
        %v2101 = vsub.s32 %v1500, %v2100
        %v2102 = vrot.slane %v1965, %v2101
        %v2103 = vsel %vm1505, %v2102, %v2098
        %v2104 = vlaneseq
        %v2105 = vshrl.u32 %v2104, 7
        %v2106 = vsub.s32 %v1495, %v2105
        %v2107 = vrot.slane %v1968, %v2106
        %v2108 = vlaneseq
        %v2109 = vshrl.u32 %v2108, 7
        %v2110 = vsub.s32 %v1500, %v2109
        %v2111 = vrot.slane %v1971, %v2110
        %v2112 = vsel %vm1505, %v2111, %v2107
        %v2113 = vlaneseq
        %v2114 = vshrl.u32 %v2113, 7
        %v2115 = vsub.s32 %v1495, %v2114
        %v2116 = vrot.slane %v1974, %v2115
        %v2117 = vlaneseq
        %v2118 = vshrl.u32 %v2117, 7
        %v2119 = vsub.s32 %v1500, %v2118
        %v2120 = vrot.slane %v1977, %v2119
        %v2121 = vsel %vm1505, %v2120, %v2116
        %v2122 = vsel %vm1642, %v1995, %v1986
        %v2123 = vsel %vm1644, %v2004, %v2122
        %v2124 = vsel %vm1646, %v2013, %v2123
        %v2125 = vsel %vm1648, %v2022, %v2124
        %v2126 = vsel %vm1650, %v2031, %v2125
        %v2127 = vsel %vm1652, %v2040, %v2126
        %v2128 = vsel %vm1654, %v2049, %v2127
        %v2129 = vsel %vm1642, %v2067, %v2058
        %v2130 = vsel %vm1644, %v2076, %v2129
        %v2131 = vsel %vm1646, %v2085, %v2130
        %v2132 = vsel %vm1648, %v2094, %v2131
        %v2133 = vsel %vm1650, %v2103, %v2132
        %v2134 = vsel %vm1652, %v2112, %v2133
        %v2135 = vsel %vm1654, %v2121, %v2134
        %v2138 = vsel %vm1665, %v2128, 0.0
        %2139 = vadd.xlane.f32.xlu0 %v2138
        %v2140 = vpop.xlane.xlu0 %2139
        %v2141 = vsel %vm1665, %v2135, 0.0
        %2142 = vadd.xlane.f32.xlu0 %v2141
        %v2143 = vpop.xlane.xlu0 %2142
        %v2146 = vlaneseq
        %v2147 = vshrl.u32 %v2146, 7
        %v2148 = vsub.s32 0, %v2147
        %v2149 = vrot.slane %v2140, %v2148
        %v2150 = vlaneseq
        %v2151 = vshrl.u32 %v2150, 7
        %v2152 = vsub.s32 1, %v2151
        %v2153 = vrot.slane %v2140, %v2152
        %v2154 = vlaneseq
        %v2155 = vshrl.u32 %v2154, 7
        %v2156 = vsub.s32 2, %v2155
        %v2157 = vrot.slane %v2140, %v2156
        %v2158 = vlaneseq
        %v2159 = vshrl.u32 %v2158, 7
        %v2160 = vsub.s32 3, %v2159
        %v2161 = vrot.slane %v2140, %v2160
        %v2162 = vlaneseq
        %v2163 = vshrl.u32 %v2162, 7
        %v2164 = vsub.s32 4, %v2163
        %v2165 = vrot.slane %v2140, %v2164
        %v2166 = vlaneseq
        %v2167 = vshrl.u32 %v2166, 7
        %v2168 = vsub.s32 5, %v2167
        %v2169 = vrot.slane %v2140, %v2168
        %v2170 = vlaneseq
        %v2171 = vshrl.u32 %v2170, 7
        %v2172 = vsub.s32 6, %v2171
        %v2173 = vrot.slane %v2140, %v2172
        %v2174 = vlaneseq
        %v2175 = vshrl.u32 %v2174, 7
        %v2176 = vsub.s32 7, %v2175
        %v2177 = vrot.slane %v2140, %v2176
        %v2178 = vlaneseq
        %v2179 = vshrl.u32 %v2178, 7
        %v2180 = vsub.s32 0, %v2179
        %v2181 = vrot.slane %v2143, %v2180
        %v2182 = vlaneseq
        %v2183 = vshrl.u32 %v2182, 7
        %v2184 = vsub.s32 1, %v2183
        %v2185 = vrot.slane %v2143, %v2184
        %v2186 = vlaneseq
        %v2187 = vshrl.u32 %v2186, 7
        %v2188 = vsub.s32 2, %v2187
        %v2189 = vrot.slane %v2143, %v2188
        %v2190 = vlaneseq
        %v2191 = vshrl.u32 %v2190, 7
        %v2192 = vsub.s32 3, %v2191
        %v2193 = vrot.slane %v2143, %v2192
        %v2194 = vlaneseq
        %v2195 = vshrl.u32 %v2194, 7
        %v2196 = vsub.s32 4, %v2195
        %v2197 = vrot.slane %v2143, %v2196
        %v2198 = vlaneseq
        %v2199 = vshrl.u32 %v2198, 7
        %v2200 = vsub.s32 5, %v2199
        %v2201 = vrot.slane %v2143, %v2200
        %v2202 = vlaneseq
        %v2203 = vshrl.u32 %v2202, 7
        %v2204 = vsub.s32 6, %v2203
        %v2205 = vrot.slane %v2143, %v2204
        %v2206 = vlaneseq
        %v2207 = vshrl.u32 %v2206, 7
        %v2208 = vsub.s32 7, %v2207
        %v2209 = vrot.slane %v2143, %v2208
        %v2226 = vrcp.pop %v2149
        %v2227 = vmul.f32 %v1787, %v2226
        %v2228 = vmul.f32 %v1789, %v2226
        %v2229 = vrcp.pop %v2153
        %v2230 = vmul.f32 %v1791, %v2229
        %v2231 = vmul.f32 %v1793, %v2229
        %v2232 = vrcp.pop %v2157
        %v2233 = vmul.f32 %v1795, %v2232
        %v2234 = vmul.f32 %v1797, %v2232
        %v2235 = vrcp.pop %v2161
        %v2236 = vmul.f32 %v1799, %v2235
        %v2237 = vmul.f32 %v1801, %v2235
        %v2238 = vrcp.pop %v2165
        %v2239 = vmul.f32 %v1803, %v2238
        %v2240 = vmul.f32 %v1805, %v2238
        %v2241 = vrcp.pop %v2169
        %v2242 = vmul.f32 %v1807, %v2241
        %v2243 = vmul.f32 %v1809, %v2241
        %v2244 = vrcp.pop %v2173
        %v2245 = vmul.f32 %v1811, %v2244
        %v2246 = vmul.f32 %v1813, %v2244
        %v2247 = vrcp.pop %v2177
        %v2248 = vmul.f32 %v1815, %v2247
        %v2249 = vmul.f32 %v1817, %v2247
        %v2250 = vrcp.pop %v2181
        %v2251 = vmul.f32 %v1819, %v2250
        %v2252 = vmul.f32 %v1821, %v2250
        %v2253 = vrcp.pop %v2185
        %v2254 = vmul.f32 %v1823, %v2253
        %v2255 = vmul.f32 %v1825, %v2253
        %v2256 = vrcp.pop %v2189
        %v2257 = vmul.f32 %v1827, %v2256
        %v2258 = vmul.f32 %v1829, %v2256
        %v2259 = vrcp.pop %v2193
        %v2260 = vmul.f32 %v1831, %v2259
        %v2261 = vmul.f32 %v1833, %v2259
        %v2262 = vrcp.pop %v2197
        %v2263 = vmul.f32 %v1835, %v2262
        %v2264 = vmul.f32 %v1837, %v2262
        %v2265 = vrcp.pop %v2201
        %v2266 = vmul.f32 %v1839, %v2265
        %v2267 = vmul.f32 %v1841, %v2265
        %v2268 = vrcp.pop %v2205
        %v2269 = vmul.f32 %v1843, %v2268
        %v2270 = vmul.f32 %v1845, %v2268
        %v2271 = vrcp.pop %v2209
        %v2272 = vmul.f32 %v1847, %v2271
        %v2273 = vmul.f32 %v1849, %v2271
        %2306 = vset.pattern.permute.xlu0 0
        %2307 = vperm.xlu0 %2306, %v2227
        %v2308 = vpop.permute.xlu0 %2307
        %2309 = vset.pattern.permute.xlu0 0
        %2310 = vperm.xlu0 %2309, %v2228
        %v2311 = vpop.permute.xlu0 %2310
        %2312 = vset.pattern.permute.xlu0 0
        %2313 = vperm.xlu0 %2312, %v2230
        %v2314 = vpop.permute.xlu0 %2313
        %2315 = vset.pattern.permute.xlu0 0
        %2316 = vperm.xlu0 %2315, %v2231
        %v2317 = vpop.permute.xlu0 %2316
        %2318 = vset.pattern.permute.xlu0 0
        %2319 = vperm.xlu0 %2318, %v2233
        %v2320 = vpop.permute.xlu0 %2319
        %2321 = vset.pattern.permute.xlu0 0
        %2322 = vperm.xlu0 %2321, %v2234
        %v2323 = vpop.permute.xlu0 %2322
        %2324 = vset.pattern.permute.xlu0 0
        %2325 = vperm.xlu0 %2324, %v2236
        %v2326 = vpop.permute.xlu0 %2325
        %2327 = vset.pattern.permute.xlu0 0
        %2328 = vperm.xlu0 %2327, %v2237
        %v2329 = vpop.permute.xlu0 %2328
        %2330 = vset.pattern.permute.xlu0 0
        %2331 = vperm.xlu0 %2330, %v2239
        %v2332 = vpop.permute.xlu0 %2331
        %2333 = vset.pattern.permute.xlu0 0
        %2334 = vperm.xlu0 %2333, %v2240
        %v2335 = vpop.permute.xlu0 %2334
        %2336 = vset.pattern.permute.xlu0 0
        %2337 = vperm.xlu0 %2336, %v2242
        %v2338 = vpop.permute.xlu0 %2337
        %2339 = vset.pattern.permute.xlu0 0
        %2340 = vperm.xlu0 %2339, %v2243
        %v2341 = vpop.permute.xlu0 %2340
        %2342 = vset.pattern.permute.xlu0 0
        %2343 = vperm.xlu0 %2342, %v2245
        %v2344 = vpop.permute.xlu0 %2343
        %2345 = vset.pattern.permute.xlu0 0
        %2346 = vperm.xlu0 %2345, %v2246
        %v2347 = vpop.permute.xlu0 %2346
        %2348 = vset.pattern.permute.xlu0 0
        %2349 = vperm.xlu0 %2348, %v2248
        %v2350 = vpop.permute.xlu0 %2349
        %2351 = vset.pattern.permute.xlu0 0
        %2352 = vperm.xlu0 %2351, %v2249
        %v2353 = vpop.permute.xlu0 %2352
        %2354 = vset.pattern.permute.xlu0 0
        %2355 = vperm.xlu0 %2354, %v2251
        %v2356 = vpop.permute.xlu0 %2355
        %2357 = vset.pattern.permute.xlu0 0
        %2358 = vperm.xlu0 %2357, %v2252
        %v2359 = vpop.permute.xlu0 %2358
        %2360 = vset.pattern.permute.xlu0 0
        %2361 = vperm.xlu0 %2360, %v2254
        %v2362 = vpop.permute.xlu0 %2361
        %2363 = vset.pattern.permute.xlu0 0
        %2364 = vperm.xlu0 %2363, %v2255
        %v2365 = vpop.permute.xlu0 %2364
        %2366 = vset.pattern.permute.xlu0 0
        %2367 = vperm.xlu0 %2366, %v2257
        %v2368 = vpop.permute.xlu0 %2367
        %2369 = vset.pattern.permute.xlu0 0
        %2370 = vperm.xlu0 %2369, %v2258
        %v2371 = vpop.permute.xlu0 %2370
        %2372 = vset.pattern.permute.xlu0 0
        %2373 = vperm.xlu0 %2372, %v2260
        %v2374 = vpop.permute.xlu0 %2373
        %2375 = vset.pattern.permute.xlu0 0
        %2376 = vperm.xlu0 %2375, %v2261
        %v2377 = vpop.permute.xlu0 %2376
        %2378 = vset.pattern.permute.xlu0 0
        %2379 = vperm.xlu0 %2378, %v2263
        %v2380 = vpop.permute.xlu0 %2379
        %2381 = vset.pattern.permute.xlu0 0
        %2382 = vperm.xlu0 %2381, %v2264
        %v2383 = vpop.permute.xlu0 %2382
        %2384 = vset.pattern.permute.xlu0 0
        %2385 = vperm.xlu0 %2384, %v2266
        %v2386 = vpop.permute.xlu0 %2385
        %2387 = vset.pattern.permute.xlu0 0
        %2388 = vperm.xlu0 %2387, %v2267
        %v2389 = vpop.permute.xlu0 %2388
        %2390 = vset.pattern.permute.xlu0 0
        %2391 = vperm.xlu0 %2390, %v2269
        %v2392 = vpop.permute.xlu0 %2391
        %2393 = vset.pattern.permute.xlu0 0
        %2394 = vperm.xlu0 %2393, %v2270
        %v2395 = vpop.permute.xlu0 %2394
        %2396 = vset.pattern.permute.xlu0 0
        %2397 = vperm.xlu0 %2396, %v2272
        %v2398 = vpop.permute.xlu0 %2397
        %2399 = vset.pattern.permute.xlu0 0
        %2400 = vperm.xlu0 %2399, %v2273
        %v2401 = vpop.permute.xlu0 %2400
        %v2402 = vlaneseq
        %v2403 = vshrl.u32 %v2402, 7
        %v2404 = vsub.s32 %v1495, %v2403
        %v2405 = vrot.slane %v2308, %v2404
        %v2406 = vlaneseq
        %v2407 = vshrl.u32 %v2406, 7
        %v2408 = vsub.s32 %v1500, %v2407
        %v2409 = vrot.slane %v2311, %v2408
        %v2410 = vsel %vm1505, %v2409, %v2405
        %v2411 = vlaneseq
        %v2412 = vshrl.u32 %v2411, 7
        %v2413 = vsub.s32 %v1495, %v2412
        %v2414 = vrot.slane %v2314, %v2413
        %v2415 = vlaneseq
        %v2416 = vshrl.u32 %v2415, 7
        %v2417 = vsub.s32 %v1500, %v2416
        %v2418 = vrot.slane %v2317, %v2417
        %v2419 = vsel %vm1505, %v2418, %v2414
        %v2420 = vlaneseq
        %v2421 = vshrl.u32 %v2420, 7
        %v2422 = vsub.s32 %v1495, %v2421
        %v2423 = vrot.slane %v2320, %v2422
        %v2424 = vlaneseq
        %v2425 = vshrl.u32 %v2424, 7
        %v2426 = vsub.s32 %v1500, %v2425
        %v2427 = vrot.slane %v2323, %v2426
        %v2428 = vsel %vm1505, %v2427, %v2423
        %v2429 = vlaneseq
        %v2430 = vshrl.u32 %v2429, 7
        %v2431 = vsub.s32 %v1495, %v2430
        %v2432 = vrot.slane %v2326, %v2431
        %v2433 = vlaneseq
        %v2434 = vshrl.u32 %v2433, 7
        %v2435 = vsub.s32 %v1500, %v2434
        %v2436 = vrot.slane %v2329, %v2435
        %v2437 = vsel %vm1505, %v2436, %v2432
        %v2438 = vlaneseq
        %v2439 = vshrl.u32 %v2438, 7
        %v2440 = vsub.s32 %v1495, %v2439
        %v2441 = vrot.slane %v2332, %v2440
        %v2442 = vlaneseq
        %v2443 = vshrl.u32 %v2442, 7
        %v2444 = vsub.s32 %v1500, %v2443
        %v2445 = vrot.slane %v2335, %v2444
        %v2446 = vsel %vm1505, %v2445, %v2441
        %v2447 = vlaneseq
        %v2448 = vshrl.u32 %v2447, 7
        %v2449 = vsub.s32 %v1495, %v2448
        %v2450 = vrot.slane %v2338, %v2449
        %v2451 = vlaneseq
        %v2452 = vshrl.u32 %v2451, 7
        %v2453 = vsub.s32 %v1500, %v2452
        %v2454 = vrot.slane %v2341, %v2453
        %v2455 = vsel %vm1505, %v2454, %v2450
        %v2456 = vlaneseq
        %v2457 = vshrl.u32 %v2456, 7
        %v2458 = vsub.s32 %v1495, %v2457
        %v2459 = vrot.slane %v2344, %v2458
        %v2460 = vlaneseq
        %v2461 = vshrl.u32 %v2460, 7
        %v2462 = vsub.s32 %v1500, %v2461
        %v2463 = vrot.slane %v2347, %v2462
        %v2464 = vsel %vm1505, %v2463, %v2459
        %v2465 = vlaneseq
        %v2466 = vshrl.u32 %v2465, 7
        %v2467 = vsub.s32 %v1495, %v2466
        %v2468 = vrot.slane %v2350, %v2467
        %v2469 = vlaneseq
        %v2470 = vshrl.u32 %v2469, 7
        %v2471 = vsub.s32 %v1500, %v2470
        %v2472 = vrot.slane %v2353, %v2471
        %v2473 = vsel %vm1505, %v2472, %v2468
        %v2474 = vlaneseq
        %v2475 = vshrl.u32 %v2474, 7
        %v2476 = vsub.s32 %v1495, %v2475
        %v2477 = vrot.slane %v2356, %v2476
        %v2478 = vlaneseq
        %v2479 = vshrl.u32 %v2478, 7
        %v2480 = vsub.s32 %v1500, %v2479
        %v2481 = vrot.slane %v2359, %v2480
        %v2482 = vsel %vm1505, %v2481, %v2477
        %v2483 = vlaneseq
        %v2484 = vshrl.u32 %v2483, 7
        %v2485 = vsub.s32 %v1495, %v2484
        %v2486 = vrot.slane %v2362, %v2485
        %v2487 = vlaneseq
        %v2488 = vshrl.u32 %v2487, 7
        %v2489 = vsub.s32 %v1500, %v2488
        %v2490 = vrot.slane %v2365, %v2489
        %v2491 = vsel %vm1505, %v2490, %v2486
        %v2492 = vlaneseq
        %v2493 = vshrl.u32 %v2492, 7
        %v2494 = vsub.s32 %v1495, %v2493
        %v2495 = vrot.slane %v2368, %v2494
        %v2496 = vlaneseq
        %v2497 = vshrl.u32 %v2496, 7
        %v2498 = vsub.s32 %v1500, %v2497
        %v2499 = vrot.slane %v2371, %v2498
        %v2500 = vsel %vm1505, %v2499, %v2495
        %v2501 = vlaneseq
        %v2502 = vshrl.u32 %v2501, 7
        %v2503 = vsub.s32 %v1495, %v2502
        %v2504 = vrot.slane %v2374, %v2503
        %v2505 = vlaneseq
        %v2506 = vshrl.u32 %v2505, 7
        %v2507 = vsub.s32 %v1500, %v2506
        %v2508 = vrot.slane %v2377, %v2507
        %v2509 = vsel %vm1505, %v2508, %v2504
        %v2510 = vlaneseq
        %v2511 = vshrl.u32 %v2510, 7
        %v2512 = vsub.s32 %v1495, %v2511
        %v2513 = vrot.slane %v2380, %v2512
        %v2514 = vlaneseq
        %v2515 = vshrl.u32 %v2514, 7
        %v2516 = vsub.s32 %v1500, %v2515
        %v2517 = vrot.slane %v2383, %v2516
        %v2518 = vsel %vm1505, %v2517, %v2513
        %v2519 = vlaneseq
        %v2520 = vshrl.u32 %v2519, 7
        %v2521 = vsub.s32 %v1495, %v2520
        %v2522 = vrot.slane %v2386, %v2521
        %v2523 = vlaneseq
        %v2524 = vshrl.u32 %v2523, 7
        %v2525 = vsub.s32 %v1500, %v2524
        %v2526 = vrot.slane %v2389, %v2525
        %v2527 = vsel %vm1505, %v2526, %v2522
        %v2528 = vlaneseq
        %v2529 = vshrl.u32 %v2528, 7
        %v2530 = vsub.s32 %v1495, %v2529
        %v2531 = vrot.slane %v2392, %v2530
        %v2532 = vlaneseq
        %v2533 = vshrl.u32 %v2532, 7
        %v2534 = vsub.s32 %v1500, %v2533
        %v2535 = vrot.slane %v2395, %v2534
        %v2536 = vsel %vm1505, %v2535, %v2531
        %v2537 = vlaneseq
        %v2538 = vshrl.u32 %v2537, 7
        %v2539 = vsub.s32 %v1495, %v2538
        %v2540 = vrot.slane %v2398, %v2539
        %v2541 = vlaneseq
        %v2542 = vshrl.u32 %v2541, 7
        %v2543 = vsub.s32 %v1500, %v2542
        %v2544 = vrot.slane %v2401, %v2543
        %v2545 = vsel %vm1505, %v2544, %v2540
        %v2546 = vsel %vm1642, %v2419, %v2410
        %v2547 = vsel %vm1644, %v2428, %v2546
        %v2548 = vsel %vm1646, %v2437, %v2547
        %v2549 = vsel %vm1648, %v2446, %v2548
        %v2550 = vsel %vm1650, %v2455, %v2549
        %v2551 = vsel %vm1652, %v2464, %v2550
        %v2552 = vsel %vm1654, %v2473, %v2551
        %v2553 = vsel %vm1642, %v2491, %v2482
        %v2554 = vsel %vm1644, %v2500, %v2553
        %v2555 = vsel %vm1646, %v2509, %v2554
        %v2556 = vsel %vm1648, %v2518, %v2555
        %v2557 = vsel %vm1650, %v2527, %v2556
        %v2558 = vsel %vm1652, %v2536, %v2557
        %v2559 = vsel %vm1654, %v2545, %v2558
        %2562 = vst.msk [vmem:[%s549] sm:$0xff] %vm1665, %v2552
        %2563 = vst.msk [vmem:[%s549 + $0x8] sm:$0xff] %vm1665, %v2559
        %s2564 = sand.u32 %s267, 1
        %s2565 = scalar_lea.sflag [#allocation4], %s2564
        %s2566 = sand.u32 %s267, 1
        %s2567 = smul.addr %s2566, 16
        %s2568 = scalar_lea.vmem [#allocation19], %s2567
        // Predicated region
        $region101: #{tpu_custom_call.1} parent=59 // pred_check
          %p2569 = pneg %p277
        $region102: #{tpu_custom_call.1} parent=59 // pred_check_branch
          %2571 = sbr.rel (%p2569) target = $region104
        $region103: #{tpu_custom_call.1} parent=59 // pred_region
          %s2572 = smul.u32 2, %s34
          %s2574 = ssub.s32 256, 256
          %2575 = vsyncadd %s2565, %s2574
          %s2576 = smul.addr %s2572, 128
          %s2577 = scalar_lea.hbm %s10, %s2576
          %s2578 = sshll.u32 %s2568, 4
          %s2579 = int_to_ptr.vmem [resolvable:$true] %s2578
          %2584 = dma.vmem_to_hbm [thread:$0]  %s2579, 256, %s2577, %s2565, 128, 128, 8
        $region104: #{tpu_custom_call.1} parent=59 // pred_fallthru
          _
      $region60: #{tpu_custom_call.1} parent=5 // pred_fallthru
        _
      %p2585 = scmp.le.s32.totalorder 2, %s29
      // Predicated region
      $region105: #{tpu_custom_call.1} parent=5 // pred_check
        %p2586 = pneg %p2585
      $region106: #{tpu_custom_call.1} parent=5 // pred_check_branch
        %2588 = sbr.rel (%p2586) target = $region108
      $region107: #{tpu_custom_call.1} parent=5 // pred_region
        %s2589 = ssub.s32 %s29, 2
        // Predicated region
        $region109: #{tpu_custom_call.1} parent=107 // pred_check
          %p2590 = pneg %p283
        $region110: #{tpu_custom_call.1} parent=107 // pred_check_branch
          %2592 = sbr.rel (%p2590) target = $region112
        $region111: #{tpu_custom_call.1} parent=107 // pred_region
          %s2593 = sand.u32 %s268, 1
          %s2594 = scalar_lea.sflag [#allocation4], %s2593
          %s2595 = sand.u32 %s268, 1
          %s2596 = smul.addr %s2595, 16
          %s2597 = scalar_lea.vmem [#allocation19], %s2596
          %2598 = dma.done %s2594, 256
        $region112: #{tpu_custom_call.1} parent=107 // pred_fallthru
          _
      $region108: #{tpu_custom_call.1} parent=5 // pred_fallthru
        _
    $region6: #{tpu_custom_call.1} parent=1 // loop_footer
      %s33 = sadd.s32 1, %s29
    $region7: #{tpu_custom_call.1} parent=1 // loop_footer_branch
      %28 = sbr.rel target = $region3
    $region8: #{tpu_custom_call.1} parent=1 // loop_exit
      _
    %2599 = vsyncpa [#allocation3], 1
    %s2600 = scalar_lea.sflag [#allocation3], 1
    %2601 = vsyncpa %s2600, 1
    %2602 = vsyncpa [#allocation6], 1
    %s2603 = scalar_lea.sflag [#allocation6], 1
    %2604 = vsyncpa %s2603, 1
    %2605 = vsyncpa [#allocation9], 1
    %2606 = vsyncpa [#allocation12], 1
    %2607 = vsyncpa [#allocation15], 1
    %2608 = vsyncpa [#allocation18], 1
    %2609 = vsyncpa [#allocation4], 1
    %s2610 = scalar_lea.sflag [#allocation4], 1
    %2611 = vsyncpa %s2610, 1

// kernel: tpu_custom_call.1
$region0: #{tpu_custom_call.1}
  #allocation0 [shape = 'u32[]', space=smem, size = 0x4, offset = 0x4, fixed_abs, tag = 'smem constant byte address 0x4 - core index']
  #allocation1 [shape = 'u32[144,128]{1,0:T(1,128)}', space=vmem, size = 0x12000, scoped, tag = 'internal scratch']
  %s0 = inlined_call_operand.hbm [shape: f32[32,16,32], index: 0, kind: input, shape index: {}]
  %s1 = inlined_call_operand.hbm [shape: f32[32,32], index: 1, kind: input, shape index: {}]
  %s2 = inlined_call_operand.hbm [shape: f32[32,32], index: 2, kind: input, shape index: {}]
  %s3 = inlined_call_operand.hbm [shape: f32[32,32], index: 3, kind: input, shape index: {}]
  %s4 = inlined_call_operand.hbm [shape: f32[1,32], index: 4, kind: input, shape index: {}]
  %s5 = inlined_call_operand.hbm [shape: f32[32,32], index: 5, kind: input, shape index: {}]
  %s6 = inlined_call_operand.hbm [shape: f32[1,32], index: 6, kind: input, shape index: {}]
  %s7 = inlined_call_operand.hbm [shape: f32[32,32], index: 7, kind: input, shape index: {}]
  %s8 = inlined_call_operand.hbm [shape: f32[1,32], index: 8, kind: input, shape index: {}]
  %s9 = inlined_call_operand.hbm [shape: f32[1,32], index: 9, kind: input, shape index: {}]
  %s10 = inlined_call_operand.hbm [shape: f32[32,16], index: 10, kind: output, shape index: {}]
  %s11 = sld [smem:[#allocation0]]
  $region113: #{tpu_custom_call.1} parent=0
    _
  %s13 = ssub.s32 1, %s11
  %s14 = scalar_select 0, %s13, %s11
  $region1: #{tpu_custom_call.1} parent=0
    #allocation2 [shape = 'u8[262144]{0}', space=vmem, size = 0x40000, scoped, tag = 'input window, operand 0']
    #allocation3 [shape = 's32[2]{0}', space=sflag, size = 0x8, scoped, tag = 'scoped memory for tpu_custom_call.1']
    #allocation4 [shape = 's32[2]{0}', space=sflag, size = 0x8, scoped, tag = 'scoped memory for tpu_custom_call.1']
    #allocation5 [shape = 'u8[16384]{0}', space=vmem, size = 0x4000, scoped, tag = 'input window, operand 1']
    #allocation6 [shape = 's32[2]{0}', space=sflag, size = 0x8, scoped, tag = 'scoped memory for tpu_custom_call.1']
    #allocation7 [shape = 'u8[16384]{0}', space=vmem, size = 0x4000, scoped, tag = 'input window, operand 2']
    #allocation8 [shape = 'u8[16384]{0}', space=vmem, size = 0x4000, scoped, tag = 'input window, operand 3, single buffered']
    #allocation9 [shape = 's32[1]{0}', space=sflag, size = 0x4, scoped, tag = 'scoped memory for tpu_custom_call.1']
    #allocation10 [shape = 'u8[512]{0}', space=vmem, size = 0x400, scoped, tag = 'input window, operand 4, single buffered']
    #allocation11 [shape = 'u8[16384]{0}', space=vmem, size = 0x4000, scoped, tag = 'input window, operand 5, single buffered']
    #allocation12 [shape = 's32[1]{0}', space=sflag, size = 0x4, scoped, tag = 'scoped memory for tpu_custom_call.1']
    #allocation13 [shape = 'u8[512]{0}', space=vmem, size = 0x400, scoped, tag = 'input window, operand 6, single buffered']
    #allocation14 [shape = 'u8[16384]{0}', space=vmem, size = 0x4000, scoped, tag = 'input window, operand 7, single buffered']
    #allocation15 [shape = 's32[1]{0}', space=sflag, size = 0x4, scoped, tag = 'scoped memory for tpu_custom_call.1']
    #allocation16 [shape = 'u8[512]{0}', space=vmem, size = 0x400, scoped, tag = 'input window, operand 8, single buffered']
    #allocation17 [shape = 'u8[512]{0}', space=vmem, size = 0x400, scoped, tag = 'input window, operand 9, single buffered']
    #allocation18 [shape = 's32[1]{0}', space=sflag, size = 0x4, scoped, tag = 'scoped memory for tpu_custom_call.1']
    #allocation19 [shape = 'u8[16384]{0}', space=vmem, size = 0x4000, scoped, tag = 'output window, operand 0']
    %15 = vsyncpa [#allocation3], 0
    %s16 = scalar_lea.sflag [#allocation3], 1
    %17 = vsyncpa %s16, 0
    %18 = vsyncpa [#allocation6], 0
    %s19 = scalar_lea.sflag [#allocation6], 1
    %20 = vsyncpa %s19, 0
    %21 = vsyncpa [#allocation9], 0
    %22 = vsyncpa [#allocation12], 0
    %23 = vsyncpa [#allocation15], 0
    %24 = vsyncpa [#allocation18], 0
    %25 = vsyncpa [#allocation4], 0
    %s26 = scalar_lea.sflag [#allocation4], 1
    %27 = vsyncpa %s26, 0
    loop: start=0, step=1, limit=4
    $region2: #{tpu_custom_call.1} parent=1 // loop_pre_header
      _
    $region3: #{tpu_custom_call.1} parent=1 // loop_header
      %s29 = sphi 0, %s33
      %p30 = scmp.ge.s32.totalorder %s29, 4
      %s39 = sphi 0, %s41
      %s42 = sphi 0, %s39
      %s43 = sphi 0, %s42
      %s59 = sphi 0, %s43
      %s65 = sphi 0, %s67
      %s68 = sphi 0, %s65
      %s69 = sphi 0, %s68
      %s85 = sphi 0, %s69
      %s91 = sphi 0, %s93
      %s94 = sphi 0, %s91
      %s95 = sphi 0, %s94
      %s111 = sphi 0, %s95
      %s115 = sphi 0, %s115
      %s117 = sphi 0, %s115
      %s118 = sphi 0, %s117
      %s132 = sphi 0, %s118
      %s136 = sphi 0, %s136
      %s138 = sphi 0, %s136
      %s139 = sphi 0, %s138
      %s153 = sphi 0, %s139
      %s157 = sphi 0, %s157
      %s159 = sphi 0, %s157
      %s160 = sphi 0, %s159
      %s174 = sphi 0, %s160
      %s178 = sphi 0, %s178
      %s180 = sphi 0, %s178
      %s181 = sphi 0, %s180
      %s195 = sphi 0, %s181
      %s199 = sphi 0, %s199
      %s201 = sphi 0, %s199
      %s202 = sphi 0, %s201
      %s216 = sphi 0, %s202
      %s220 = sphi 0, %s220
      %s222 = sphi 0, %s220
      %s223 = sphi 0, %s222
      %s237 = sphi 0, %s223
      %s241 = sphi 0, %s241
      %s243 = sphi 0, %s241
      %s244 = sphi 0, %s243
      %s258 = sphi 0, %s244
      %s264 = sphi 0, %s266
      %s267 = sphi 0, %s264
      %s268 = sphi 0, %s267
      %s284 = sphi 0, %s268
    $region4: #{tpu_custom_call.1} parent=1 // loop_header_branch
      %32 = sbr.rel (%p30) target = $region8
    $region5: #{tpu_custom_call.1} parent=1 // loop_body
      %s34 = ssub.s32 %s29, 1
      %s35 = ssub.s32 %s29, 2
      %s36 = sadd.s32 %s29, 1
      %s37 = ssub.s32 %s29, %s36
      %p38 = scmp.eq.s32.totalorder %s37, 0
      %s40 = sadd.s32 %s39, 1
      %s41 = scalar_select %p38, %s39, %s40
      %p44 = pneg %p38
      %p45 = scmp.eq.s32.totalorder %s29, 1
      %p46 = por %p44, %p45
      %p47 = scmp.ne.s32.totalorder %s39, %s42
      %p48 = scmp.eq.s32.totalorder %s29, 0
      %p49 = por %p47, %p48
      %p50 = scmp.ne.s32.totalorder %s39, %s42
      %p51 = scmp.eq.s32.totalorder %s34, 1
      %p52 = por %p50, %p51
      %p53 = scmp.ne.s32.totalorder %s42, %s43
      %p54 = scmp.eq.s32.totalorder %s34, 0
      %p55 = por %p53, %p54
      %p56 = scmp.ne.s32.totalorder %s42, %s43
      %p57 = scmp.eq.s32.totalorder %s35, 1
      %p58 = por %p56, %p57
      %p60 = scmp.ne.s32.totalorder %s43, %s59
      %p61 = scmp.eq.s32.totalorder %s35, 0
      %p62 = por %p60, %p61
      %s63 = ssub.s32 %s29, %s36
      %p64 = scmp.eq.s32.totalorder %s63, 0
      %s66 = sadd.s32 %s65, 1
      %s67 = scalar_select %p64, %s65, %s66
      %p70 = pneg %p64
      %p71 = scmp.eq.s32.totalorder %s29, 1
      %p72 = por %p70, %p71
      %p73 = scmp.ne.s32.totalorder %s65, %s68
      %p74 = scmp.eq.s32.totalorder %s29, 0
      %p75 = por %p73, %p74
      %p76 = scmp.ne.s32.totalorder %s65, %s68
      %p77 = scmp.eq.s32.totalorder %s34, 1
      %p78 = por %p76, %p77
      %p79 = scmp.ne.s32.totalorder %s68, %s69
      %p80 = scmp.eq.s32.totalorder %s34, 0
      %p81 = por %p79, %p80
      %p82 = scmp.ne.s32.totalorder %s68, %s69
      %p83 = scmp.eq.s32.totalorder %s35, 1
      %p84 = por %p82, %p83
      %p86 = scmp.ne.s32.totalorder %s69, %s85
      %p87 = scmp.eq.s32.totalorder %s35, 0
      %p88 = por %p86, %p87
      %s89 = ssub.s32 %s29, %s36
      %p90 = scmp.eq.s32.totalorder %s89, 0
      %s92 = sadd.s32 %s91, 1
      %s93 = scalar_select %p90, %s91, %s92
      %p96 = pneg %p90
      %p97 = scmp.eq.s32.totalorder %s29, 1
      %p98 = por %p96, %p97
      %p99 = scmp.ne.s32.totalorder %s91, %s94
      %p100 = scmp.eq.s32.totalorder %s29, 0
      %p101 = por %p99, %p100
      %p102 = scmp.ne.s32.totalorder %s91, %s94
      %p103 = scmp.eq.s32.totalorder %s34, 1
      %p104 = por %p102, %p103
      %p105 = scmp.ne.s32.totalorder %s94, %s95
      %p106 = scmp.eq.s32.totalorder %s34, 0
      %p107 = por %p105, %p106
      %p108 = scmp.ne.s32.totalorder %s94, %s95
      %p109 = scmp.eq.s32.totalorder %s35, 1
      %p110 = por %p108, %p109
      %p112 = scmp.ne.s32.totalorder %s95, %s111
      %p113 = scmp.eq.s32.totalorder %s35, 0
      %p114 = por %p112, %p113
      %s116 = sadd.s32 %s115, 1
      %p119 = scmp.eq.s32.totalorder %s29, 1
      %p120 = scmp.ne.s32.totalorder %s115, %s117
      %p121 = scmp.eq.s32.totalorder %s29, 0
      %p122 = por %p120, %p121
      %p123 = scmp.ne.s32.totalorder %s115, %s117
      %p124 = scmp.eq.s32.totalorder %s34, 1
      %p125 = por %p123, %p124
      %p126 = scmp.ne.s32.totalorder %s117, %s118
      %p127 = scmp.eq.s32.totalorder %s34, 0
      %p128 = por %p126, %p127
      %p129 = scmp.ne.s32.totalorder %s117, %s118
      %p130 = scmp.eq.s32.totalorder %s35, 1
      %p131 = por %p129, %p130
      %p133 = scmp.ne.s32.totalorder %s118, %s132
      %p134 = scmp.eq.s32.totalorder %s35, 0
      %p135 = por %p133, %p134
      %s137 = sadd.s32 %s136, 1
      %p140 = scmp.eq.s32.totalorder %s29, 1
      %p141 = scmp.ne.s32.totalorder %s136, %s138
      %p142 = scmp.eq.s32.totalorder %s29, 0
      %p143 = por %p141, %p142
      %p144 = scmp.ne.s32.totalorder %s136, %s138
      %p145 = scmp.eq.s32.totalorder %s34, 1
      %p146 = por %p144, %p145
      %p147 = scmp.ne.s32.totalorder %s138, %s139
      %p148 = scmp.eq.s32.totalorder %s34, 0
      %p149 = por %p147, %p148
      %p150 = scmp.ne.s32.totalorder %s138, %s139
      %p151 = scmp.eq.s32.totalorder %s35, 1
      %p152 = por %p150, %p151
      %p154 = scmp.ne.s32.totalorder %s139, %s153
      %p155 = scmp.eq.s32.totalorder %s35, 0
      %p156 = por %p154, %p155
      %s158 = sadd.s32 %s157, 1
      %p161 = scmp.eq.s32.totalorder %s29, 1
      %p162 = scmp.ne.s32.totalorder %s157, %s159
      %p163 = scmp.eq.s32.totalorder %s29, 0
      %p164 = por %p162, %p163
      %p165 = scmp.ne.s32.totalorder %s157, %s159
      %p166 = scmp.eq.s32.totalorder %s34, 1
      %p167 = por %p165, %p166
      %p168 = scmp.ne.s32.totalorder %s159, %s160
      %p169 = scmp.eq.s32.totalorder %s34, 0
      %p170 = por %p168, %p169
      %p171 = scmp.ne.s32.totalorder %s159, %s160
      %p172 = scmp.eq.s32.totalorder %s35, 1
      %p173 = por %p171, %p172
      %p175 = scmp.ne.s32.totalorder %s160, %s174
      %p176 = scmp.eq.s32.totalorder %s35, 0
      %p177 = por %p175, %p176
      %s179 = sadd.s32 %s178, 1
      %p182 = scmp.eq.s32.totalorder %s29, 1
      %p183 = scmp.ne.s32.totalorder %s178, %s180
      %p184 = scmp.eq.s32.totalorder %s29, 0
      %p185 = por %p183, %p184
      %p186 = scmp.ne.s32.totalorder %s178, %s180
      %p187 = scmp.eq.s32.totalorder %s34, 1
      %p188 = por %p186, %p187
      %p189 = scmp.ne.s32.totalorder %s180, %s181
      %p190 = scmp.eq.s32.totalorder %s34, 0
      %p191 = por %p189, %p190
      %p192 = scmp.ne.s32.totalorder %s180, %s181
      %p193 = scmp.eq.s32.totalorder %s35, 1
      %p194 = por %p192, %p193
      %p196 = scmp.ne.s32.totalorder %s181, %s195
      %p197 = scmp.eq.s32.totalorder %s35, 0
      %p198 = por %p196, %p197
      %s200 = sadd.s32 %s199, 1
      %p203 = scmp.eq.s32.totalorder %s29, 1
      %p204 = scmp.ne.s32.totalorder %s199, %s201
      %p205 = scmp.eq.s32.totalorder %s29, 0
      %p206 = por %p204, %p205
      %p207 = scmp.ne.s32.totalorder %s199, %s201
      %p208 = scmp.eq.s32.totalorder %s34, 1
      %p209 = por %p207, %p208
      %p210 = scmp.ne.s32.totalorder %s201, %s202
      %p211 = scmp.eq.s32.totalorder %s34, 0
      %p212 = por %p210, %p211
      %p213 = scmp.ne.s32.totalorder %s201, %s202
      %p214 = scmp.eq.s32.totalorder %s35, 1
      %p215 = por %p213, %p214
      %p217 = scmp.ne.s32.totalorder %s202, %s216
      %p218 = scmp.eq.s32.totalorder %s35, 0
      %p219 = por %p217, %p218
      %s221 = sadd.s32 %s220, 1
      %p224 = scmp.eq.s32.totalorder %s29, 1
      %p225 = scmp.ne.s32.totalorder %s220, %s222
      %p226 = scmp.eq.s32.totalorder %s29, 0
      %p227 = por %p225, %p226
      %p228 = scmp.ne.s32.totalorder %s220, %s222
      %p229 = scmp.eq.s32.totalorder %s34, 1
      %p230 = por %p228, %p229
      %p231 = scmp.ne.s32.totalorder %s222, %s223
      %p232 = scmp.eq.s32.totalorder %s34, 0
      %p233 = por %p231, %p232
      %p234 = scmp.ne.s32.totalorder %s222, %s223
      %p235 = scmp.eq.s32.totalorder %s35, 1
      %p236 = por %p234, %p235
      %p238 = scmp.ne.s32.totalorder %s223, %s237
      %p239 = scmp.eq.s32.totalorder %s35, 0
      %p240 = por %p238, %p239
      %s242 = sadd.s32 %s241, 1
      %p245 = scmp.eq.s32.totalorder %s29, 1
      %p246 = scmp.ne.s32.totalorder %s241, %s243
      %p247 = scmp.eq.s32.totalorder %s29, 0
      %p248 = por %p246, %p247
      %p249 = scmp.ne.s32.totalorder %s241, %s243
      %p250 = scmp.eq.s32.totalorder %s34, 1
      %p251 = por %p249, %p250
      %p252 = scmp.ne.s32.totalorder %s243, %s244
      %p253 = scmp.eq.s32.totalorder %s34, 0
      %p254 = por %p252, %p253
      %p255 = scmp.ne.s32.totalorder %s243, %s244
      %p256 = scmp.eq.s32.totalorder %s35, 1
      %p257 = por %p255, %p256
      %p259 = scmp.ne.s32.totalorder %s244, %s258
      %p260 = scmp.eq.s32.totalorder %s35, 0
      %p261 = por %p259, %p260
      %s262 = ssub.s32 %s29, %s36
      %p263 = scmp.eq.s32.totalorder %s262, 0
      %s265 = sadd.s32 %s264, 1
      %s266 = scalar_select %p263, %s264, %s265
      %p269 = pneg %p263
      %p270 = scmp.eq.s32.totalorder %s29, 1
      %p271 = por %p269, %p270
      %p272 = scmp.ne.s32.totalorder %s264, %s267
      %p273 = scmp.eq.s32.totalorder %s29, 0
      %p274 = por %p272, %p273
      %p275 = scmp.ne.s32.totalorder %s264, %s267
      %p276 = scmp.eq.s32.totalorder %s34, 1
      %p277 = por %p275, %p276
      %p278 = scmp.ne.s32.totalorder %s267, %s268
      %p279 = scmp.eq.s32.totalorder %s34, 0
      %p280 = por %p278, %p279
      %p281 = scmp.ne.s32.totalorder %s267, %s268
      %p282 = scmp.eq.s32.totalorder %s35, 1
      %p283 = por %p281, %p282
      %p285 = scmp.ne.s32.totalorder %s268, %s284
      %p286 = scmp.eq.s32.totalorder %s35, 0
      %p287 = por %p285, %p286
      %p288 = scmp.le.s32.totalorder 1, %s29
      %p289 = scmp.lt.s32.totalorder %s29, 3
      %p290 = pnand %p288, %p289
      %p291 = pneg %p290
      // Predicated region
      $region9: #{tpu_custom_call.1} parent=5 // pred_check
        _
      $region10: #{tpu_custom_call.1} parent=5 // pred_check_branch
        %293 = sbr.rel (%p290) target = $region12
      $region11: #{tpu_custom_call.1} parent=5 // pred_region
        %s294 = ssub.s32 %s29, 1
        // Predicated region
        $region13: #{tpu_custom_call.1} parent=11 // pred_check
          %p295 = pneg %p128
        $region14: #{tpu_custom_call.1} parent=11 // pred_check_branch
          %297 = sbr.rel (%p295) target = $region16
        $region15: #{tpu_custom_call.1} parent=11 // pred_region
          %s299 = ssub.s32 512, 512
          %300 = vsyncadd [#allocation9], %s299
          %s301 = sshll.u32 [#allocation8], 4
          %s302 = int_to_ptr.vmem [resolvable:$true] %s301
          %307 = dma.hbm_to_vmem [thread:$0]  %s3, 512, %s302, [#allocation9], 128, 128, 8
        $region16: #{tpu_custom_call.1} parent=11 // pred_fallthru
          _
        // Predicated region
        $region17: #{tpu_custom_call.1} parent=11 // pred_check
          %p308 = pneg %p149
        $region18: #{tpu_custom_call.1} parent=11 // pred_check_branch
          %310 = sbr.rel (%p308) target = $region20
        $region19: #{tpu_custom_call.1} parent=11 // pred_region
          %s312 = ssub.s32 16, 16
          %313 = vsyncadd [#allocation9], %s312
          %s315 = sshll.u32 [#allocation10], 4
          %s316 = int_to_ptr.vmem [resolvable:$true] %s315
          %318 = dma.hbm_to_vmem [thread:$0]  %s4, 16, %s316, [#allocation9]
        $region20: #{tpu_custom_call.1} parent=11 // pred_fallthru
          _
        // Predicated region
        $region21: #{tpu_custom_call.1} parent=11 // pred_check
          %p319 = pneg %p170
        $region22: #{tpu_custom_call.1} parent=11 // pred_check_branch
          %321 = sbr.rel (%p319) target = $region24
        $region23: #{tpu_custom_call.1} parent=11 // pred_region
          %s323 = ssub.s32 512, 512
          %324 = vsyncadd [#allocation12], %s323
          %s325 = sshll.u32 [#allocation11], 4
          %s326 = int_to_ptr.vmem [resolvable:$true] %s325
          %331 = dma.hbm_to_vmem [thread:$0]  %s5, 512, %s326, [#allocation12], 128, 128, 8
        $region24: #{tpu_custom_call.1} parent=11 // pred_fallthru
          _
        // Predicated region
        $region25: #{tpu_custom_call.1} parent=11 // pred_check
          %p332 = pneg %p191
        $region26: #{tpu_custom_call.1} parent=11 // pred_check_branch
          %334 = sbr.rel (%p332) target = $region28
        $region27: #{tpu_custom_call.1} parent=11 // pred_region
          %s336 = ssub.s32 16, 16
          %337 = vsyncadd [#allocation12], %s336
          %s339 = sshll.u32 [#allocation13], 4
          %s340 = int_to_ptr.vmem [resolvable:$true] %s339
          %342 = dma.hbm_to_vmem [thread:$0]  %s6, 16, %s340, [#allocation12]
        $region28: #{tpu_custom_call.1} parent=11 // pred_fallthru
          _
        // Predicated region
        $region29: #{tpu_custom_call.1} parent=11 // pred_check
          %p343 = pneg %p212
        $region30: #{tpu_custom_call.1} parent=11 // pred_check_branch
          %345 = sbr.rel (%p343) target = $region32
        $region31: #{tpu_custom_call.1} parent=11 // pred_region
          %s347 = ssub.s32 512, 512
          %348 = vsyncadd [#allocation15], %s347
          %s349 = sshll.u32 [#allocation14], 4
          %s350 = int_to_ptr.vmem [resolvable:$true] %s349
          %355 = dma.hbm_to_vmem [thread:$0]  %s7, 512, %s350, [#allocation15], 128, 128, 8
        $region32: #{tpu_custom_call.1} parent=11 // pred_fallthru
          _
        // Predicated region
        $region33: #{tpu_custom_call.1} parent=11 // pred_check
          %p356 = pneg %p233
        $region34: #{tpu_custom_call.1} parent=11 // pred_check_branch
          %358 = sbr.rel (%p356) target = $region36
        $region35: #{tpu_custom_call.1} parent=11 // pred_region
          %s360 = ssub.s32 16, 16
          %361 = vsyncadd [#allocation15], %s360
          %s363 = sshll.u32 [#allocation16], 4
          %s364 = int_to_ptr.vmem [resolvable:$true] %s363
          %366 = dma.hbm_to_vmem [thread:$0]  %s8, 16, %s364, [#allocation15]
        $region36: #{tpu_custom_call.1} parent=11 // pred_fallthru
          _
        // Predicated region
        $region37: #{tpu_custom_call.1} parent=11 // pred_check
          %p367 = pneg %p254
        $region38: #{tpu_custom_call.1} parent=11 // pred_check_branch
          %369 = sbr.rel (%p367) target = $region40
        $region39: #{tpu_custom_call.1} parent=11 // pred_region
          %s371 = ssub.s32 16, 16
          %372 = vsyncadd [#allocation18], %s371
          %s374 = sshll.u32 [#allocation17], 4
          %s375 = int_to_ptr.vmem [resolvable:$true] %s374
          %377 = dma.hbm_to_vmem [thread:$0]  %s9, 16, %s375, [#allocation18]
        $region40: #{tpu_custom_call.1} parent=11 // pred_fallthru
          _
      $region12: #{tpu_custom_call.1} parent=5 // pred_fallthru
        _
      %p378 = scmp.lt.s32.totalorder %s29, 2
      // Predicated region
      $region41: #{tpu_custom_call.1} parent=5 // pred_check
        %p379 = pneg %p378
      $region42: #{tpu_custom_call.1} parent=5 // pred_check_branch
        %381 = sbr.rel (%p379) target = $region44
      $region43: #{tpu_custom_call.1} parent=5 // pred_region
        // Predicated region
        $region45: #{tpu_custom_call.1} parent=43 // pred_check
          %p382 = pneg %p49
        $region46: #{tpu_custom_call.1} parent=43 // pred_check_branch
          %384 = sbr.rel (%p382) target = $region48
        $region47: #{tpu_custom_call.1} parent=43 // pred_region
          %s385 = sand.u32 %s39, 1
          %s386 = scalar_lea.sflag [#allocation3], %s385
          %s387 = sand.u32 %s39, 1
          %s388 = smul.addr %s387, 256
          %s389 = scalar_lea.vmem [#allocation2], %s388
          %s390 = smul.u32 16, %s29
          %s392 = ssub.s32 4096, 4096
          %393 = vsyncadd %s386, %s392
          %s394 = smul.addr %s390, 2
          %s395 = smul.addr %s394, 128
          %s396 = scalar_lea.hbm %s0, %s395
          %s397 = sshll.u32 %s389, 4
          %s398 = int_to_ptr.vmem [resolvable:$true] %s397
          %403 = dma.hbm_to_vmem [thread:$0]  %s396, 4096, %s398, %s386, 128, 128, 8
        $region48: #{tpu_custom_call.1} parent=43 // pred_fallthru
          _
        // Predicated region
        $region49: #{tpu_custom_call.1} parent=43 // pred_check
          %p404 = pneg %p75
        $region50: #{tpu_custom_call.1} parent=43 // pred_check_branch
          %406 = sbr.rel (%p404) target = $region52
        $region51: #{tpu_custom_call.1} parent=43 // pred_region
          %s407 = sand.u32 %s29, 1
          %s408 = scalar_lea.sflag [#allocation6], %s407
          %s409 = sand.u32 %s65, 1
          %s410 = smul.addr %s409, 16
          %s411 = scalar_lea.vmem [#allocation5], %s410
          %s412 = smul.u32 2, %s29
          %s414 = ssub.s32 256, 256
          %415 = vsyncadd %s408, %s414
          %s416 = smul.addr %s412, 128
          %s417 = scalar_lea.hbm %s1, %s416
          %s418 = sshll.u32 %s411, 4
          %s419 = int_to_ptr.vmem [resolvable:$true] %s418
          %424 = dma.hbm_to_vmem [thread:$0]  %s417, 256, %s419, %s408, 128, 128, 8
        $region52: #{tpu_custom_call.1} parent=43 // pred_fallthru
          _
        // Predicated region
        $region53: #{tpu_custom_call.1} parent=43 // pred_check
          %p425 = pneg %p101
        $region54: #{tpu_custom_call.1} parent=43 // pred_check_branch
          %427 = sbr.rel (%p425) target = $region56
        $region55: #{tpu_custom_call.1} parent=43 // pred_region
          %s428 = sand.u32 %s29, 1
          %s429 = scalar_lea.sflag [#allocation6], %s428
          %s430 = sand.u32 %s91, 1
          %s431 = smul.addr %s430, 16
          %s432 = scalar_lea.vmem [#allocation7], %s431
          %s433 = smul.u32 2, %s29
          %s435 = ssub.s32 256, 256
          %436 = vsyncadd %s429, %s435
          %s437 = smul.addr %s433, 128
          %s438 = scalar_lea.hbm %s2, %s437
          %s439 = sshll.u32 %s432, 4
          %s440 = int_to_ptr.vmem [resolvable:$true] %s439
          %445 = dma.hbm_to_vmem [thread:$0]  %s438, 256, %s440, %s429, 128, 128, 8
        $region56: #{tpu_custom_call.1} parent=43 // pred_fallthru
          _
      $region44: #{tpu_custom_call.1} parent=5 // pred_fallthru
        _
      %p446 = scmp.le.s32.totalorder 1, %s29
      %p447 = scmp.lt.s32.totalorder %s29, 3
      %p448 = pnand %p446, %p447
      %p449 = pneg %p448
      // Predicated region
      $region57: #{tpu_custom_call.1} parent=5 // pred_check
        _
      $region58: #{tpu_custom_call.1} parent=5 // pred_check_branch
        %451 = sbr.rel (%p448) target = $region60
      $region59: #{tpu_custom_call.1} parent=5 // pred_region
        %s452 = ssub.s32 %s29, 1
        %s453 = sand.u32 %s42, 1
        %s454 = scalar_lea.sflag [#allocation3], %s453
        %s455 = sand.u32 %s42, 1
        %s456 = smul.addr %s455, 256
        %s457 = scalar_lea.vmem [#allocation2], %s456
        // Predicated region
        $region61: #{tpu_custom_call.1} parent=59 // pred_check
          %p458 = pneg %p55
        $region62: #{tpu_custom_call.1} parent=59 // pred_check_branch
          %460 = sbr.rel (%p458) target = $region64
        $region63: #{tpu_custom_call.1} parent=59 // pred_region
          %461 = dma.done %s454, 4096
        $region64: #{tpu_custom_call.1} parent=59 // pred_fallthru
          _
        %s462 = sand.u32 %s34, 1
        %s463 = scalar_lea.sflag [#allocation6], %s462
        %s464 = sand.u32 %s68, 1
        %s465 = smul.addr %s464, 16
        %s466 = scalar_lea.vmem [#allocation5], %s465
        // Predicated region
        $region65: #{tpu_custom_call.1} parent=59 // pred_check
          %p467 = pneg %p81
        $region66: #{tpu_custom_call.1} parent=59 // pred_check_branch
          %469 = sbr.rel (%p467) target = $region68
        $region67: #{tpu_custom_call.1} parent=59 // pred_region
          %470 = dma.done %s463, 256
        $region68: #{tpu_custom_call.1} parent=59 // pred_fallthru
          _
        %s471 = sand.u32 %s34, 1
        %s472 = scalar_lea.sflag [#allocation6], %s471
        %s473 = sand.u32 %s94, 1
        %s474 = smul.addr %s473, 16
        %s475 = scalar_lea.vmem [#allocation7], %s474
        // Predicated region
        $region69: #{tpu_custom_call.1} parent=59 // pred_check
          %p476 = pneg %p107
        $region70: #{tpu_custom_call.1} parent=59 // pred_check_branch
          %478 = sbr.rel (%p476) target = $region72
        $region71: #{tpu_custom_call.1} parent=59 // pred_region
          %479 = dma.done %s472, 256
        $region72: #{tpu_custom_call.1} parent=59 // pred_fallthru
          _
        // Predicated region
        $region73: #{tpu_custom_call.1} parent=59 // pred_check
          %p480 = pneg %p128
        $region74: #{tpu_custom_call.1} parent=59 // pred_check_branch
          %482 = sbr.rel (%p480) target = $region76
        $region75: #{tpu_custom_call.1} parent=59 // pred_region
          %483 = dma.done [#allocation9], 512
        $region76: #{tpu_custom_call.1} parent=59 // pred_fallthru
          _
        // Predicated region
        $region77: #{tpu_custom_call.1} parent=59 // pred_check
          %p484 = pneg %p149
        $region78: #{tpu_custom_call.1} parent=59 // pred_check_branch
          %486 = sbr.rel (%p484) target = $region80
        $region79: #{tpu_custom_call.1} parent=59 // pred_region
          %487 = dma.done [#allocation9], 16
        $region80: #{tpu_custom_call.1} parent=59 // pred_fallthru
          _
        // Predicated region
        $region81: #{tpu_custom_call.1} parent=59 // pred_check
          %p488 = pneg %p170
        $region82: #{tpu_custom_call.1} parent=59 // pred_check_branch
          %490 = sbr.rel (%p488) target = $region84
        $region83: #{tpu_custom_call.1} parent=59 // pred_region
          %491 = dma.done [#allocation12], 512
        $region84: #{tpu_custom_call.1} parent=59 // pred_fallthru
          _
        // Predicated region
        $region85: #{tpu_custom_call.1} parent=59 // pred_check
          %p492 = pneg %p191
        $region86: #{tpu_custom_call.1} parent=59 // pred_check_branch
          %494 = sbr.rel (%p492) target = $region88
        $region87: #{tpu_custom_call.1} parent=59 // pred_region
          %495 = dma.done [#allocation12], 16
        $region88: #{tpu_custom_call.1} parent=59 // pred_fallthru
          _
        // Predicated region
        $region89: #{tpu_custom_call.1} parent=59 // pred_check
          %p496 = pneg %p212
        $region90: #{tpu_custom_call.1} parent=59 // pred_check_branch
          %498 = sbr.rel (%p496) target = $region92
        $region91: #{tpu_custom_call.1} parent=59 // pred_region
          %499 = dma.done [#allocation15], 512
        $region92: #{tpu_custom_call.1} parent=59 // pred_fallthru
          _
        // Predicated region
        $region93: #{tpu_custom_call.1} parent=59 // pred_check
          %p500 = pneg %p233
        $region94: #{tpu_custom_call.1} parent=59 // pred_check_branch
          %502 = sbr.rel (%p500) target = $region96
        $region95: #{tpu_custom_call.1} parent=59 // pred_region
          %503 = dma.done [#allocation15], 16
        $region96: #{tpu_custom_call.1} parent=59 // pred_fallthru
          _
        // Predicated region
        $region97: #{tpu_custom_call.1} parent=59 // pred_check
          %p504 = pneg %p254
        $region98: #{tpu_custom_call.1} parent=59 // pred_check_branch
          %506 = sbr.rel (%p504) target = $region100
        $region99: #{tpu_custom_call.1} parent=59 // pred_region
          %507 = dma.done [#allocation18], 16
        $region100: #{tpu_custom_call.1} parent=59 // pred_fallthru
          _
        %s508 = sand.u32 %s42, 1
        %s509 = scalar_lea.sflag [#allocation3], %s508
        %s510 = sand.u32 %s42, 1
        %s511 = smul.addr %s510, 256
        %s512 = scalar_lea.vmem [#allocation2], %s511
        %p513 = pneg %p55
        %p514 = pneg %p52
        %s515 = sand.u32 %s34, 1
        %s516 = scalar_lea.sflag [#allocation6], %s515
        %s517 = sand.u32 %s68, 1
        %s518 = smul.addr %s517, 16
        %s519 = scalar_lea.vmem [#allocation5], %s518
        %p520 = pneg %p81
        %p521 = pneg %p78
        %s522 = sand.u32 %s34, 1
        %s523 = scalar_lea.sflag [#allocation6], %s522
        %s524 = sand.u32 %s94, 1
        %s525 = smul.addr %s524, 16
        %s526 = scalar_lea.vmem [#allocation7], %s525
        %p527 = pneg %p107
        %p528 = pneg %p104
        %p529 = pneg %p128
        %p530 = pneg %p125
        %p531 = pneg %p149
        %p532 = pneg %p146
        %p533 = pneg %p170
        %p534 = pneg %p167
        %p535 = pneg %p191
        %p536 = pneg %p188
        %p537 = pneg %p212
        %p538 = pneg %p209
        %p539 = pneg %p233
        %p540 = pneg %p230
        %p541 = pneg %p254
        %p542 = pneg %p251
        %p543 = pneg %p280
        %p544 = pneg %p277
        %s545 = sand.u32 %s267, 1
        %s546 = scalar_lea.sflag [#allocation4], %s545
        %s547 = sand.u32 %s267, 1
        %s548 = smul.addr %s547, 16
        %s549 = scalar_lea.vmem [#allocation19], %s548
        %s550 = smul.u32 16, %s34
        %s551 = smul.u32 2, %s34
        %s552 = smul.u32 2, %s34
        %s553 = smul.u32 2, %s34
        %v554 = vld [vmem:[%s457] sm:$0xff]
        %v555 = vld [vmem:[%s457 + $0x8] sm:$0xff]
        %v556 = vld [vmem:[%s457 + $0x10] sm:$0xff]
        %v557 = vld [vmem:[%s457 + $0x18] sm:$0xff]
        %v558 = vld [vmem:[%s457 + $0x20] sm:$0xff]
        %v559 = vld [vmem:[%s457 + $0x28] sm:$0xff]
        %v560 = vld [vmem:[%s457 + $0x30] sm:$0xff]
        %v561 = vld [vmem:[%s457 + $0x38] sm:$0xff]
        %v562 = vld [vmem:[%s457 + $0x40] sm:$0xff]
        %v563 = vld [vmem:[%s457 + $0x48] sm:$0xff]
        %v564 = vld [vmem:[%s457 + $0x50] sm:$0xff]
        %v565 = vld [vmem:[%s457 + $0x58] sm:$0xff]
        %v566 = vld [vmem:[%s457 + $0x60] sm:$0xff]
        %v567 = vld [vmem:[%s457 + $0x68] sm:$0xff]
        %v568 = vld [vmem:[%s457 + $0x70] sm:$0xff]
        %v569 = vld [vmem:[%s457 + $0x78] sm:$0xff]
        %v570 = vld [vmem:[%s457 + $0x80] sm:$0xff]
        %v571 = vld [vmem:[%s457 + $0x88] sm:$0xff]
        %v572 = vld [vmem:[%s457 + $0x90] sm:$0xff]
        %v573 = vld [vmem:[%s457 + $0x98] sm:$0xff]
        %v574 = vld [vmem:[%s457 + $0xa0] sm:$0xff]
        %v575 = vld [vmem:[%s457 + $0xa8] sm:$0xff]
        %v576 = vld [vmem:[%s457 + $0xb0] sm:$0xff]
        %v577 = vld [vmem:[%s457 + $0xb8] sm:$0xff]
        %v578 = vld [vmem:[%s457 + $0xc0] sm:$0xff]
        %v579 = vld [vmem:[%s457 + $0xc8] sm:$0xff]
        %v580 = vld [vmem:[%s457 + $0xd0] sm:$0xff]
        %v581 = vld [vmem:[%s457 + $0xd8] sm:$0xff]
        %v582 = vld [vmem:[%s457 + $0xe0] sm:$0xff]
        %v583 = vld [vmem:[%s457 + $0xe8] sm:$0xff]
        %v584 = vld [vmem:[%s457 + $0xf0] sm:$0xff]
        %v585 = vld [vmem:[%s457 + $0xf8] sm:$0xff]
        %v586 = vld [vmem:[%s466] sm:$0xff]
        %v587 = vld [vmem:[%s466 + $0x8] sm:$0xff]
        %v588 = vld [vmem:[%s475] sm:$0xff]
        %v589 = vld [vmem:[%s475 + $0x8] sm:$0xff]
        %v590 = vld [vmem:[#allocation8] sm:$0xff]
        %v591 = vld [vmem:[#allocation8 + $0x8] sm:$0xff]
        %v592 = vld [vmem:[#allocation8 + $0x10] sm:$0xff]
        %v593 = vld [vmem:[#allocation8 + $0x18] sm:$0xff]
        %v594 = vld [vmem:[#allocation10] sm:$0x1]
        %v596 = vlaneseq
        %v597 = vshrl.u32 %v596, 7
        %v598 = vsub.s32 0, %v597
        %v599 = vrot.slane %v594, %v598
        %vm601 = vcmask 261120
        %v603 = vsel %vm601, %v554, 0
        %v606 = vsel %vm601, %v555, 0
        %v609 = vsel %vm601, %v556, 0
        %v612 = vsel %vm601, %v557, 0
        %v615 = vsel %vm601, %v558, 0
        %v618 = vsel %vm601, %v559, 0
        %v621 = vsel %vm601, %v560, 0
        %v624 = vsel %vm601, %v561, 0
        %v627 = vsel %vm601, %v562, 0
        %v630 = vsel %vm601, %v563, 0
        %v633 = vsel %vm601, %v564, 0
        %v636 = vsel %vm601, %v565, 0
        %v639 = vsel %vm601, %v566, 0
        %v642 = vsel %vm601, %v567, 0
        %v645 = vsel %vm601, %v568, 0
        %v648 = vsel %vm601, %v569, 0
        %v651 = vsel %vm601, %v570, 0
        %v654 = vsel %vm601, %v571, 0
        %v657 = vsel %vm601, %v572, 0
        %v660 = vsel %vm601, %v573, 0
        %v663 = vsel %vm601, %v574, 0
        %v666 = vsel %vm601, %v575, 0
        %v669 = vsel %vm601, %v576, 0
        %v672 = vsel %vm601, %v577, 0
        %v675 = vsel %vm601, %v578, 0
        %v678 = vsel %vm601, %v579, 0
        %v681 = vsel %vm601, %v580, 0
        %v684 = vsel %vm601, %v581, 0
        %v687 = vsel %vm601, %v582, 0
        %v690 = vsel %vm601, %v583, 0
        %v693 = vsel %vm601, %v584, 0
        %v696 = vsel %vm601, %v585, 0
        %698 = vmatprep.subr.mxu0 0.0
        %699 = vmatpush1.msra.mxu0 %v590
        %700 = vmatprep.subr.mxu0 0.0
        %701 = vmatpush1.msra.mxu0 %v591
        %702 = vmatprep.subr.mxu0 0.0
        %703 = vmatpush1.msra.mxu0 %v592
        %704 = vmatprep.subr.mxu0 0.0
        %705 = vmatpush1.msra.mxu0 %v593
        %706 = vmatprep.subr.mxu0 0.0
        %707 = vmatpush1.msra.mxu0 0.0
        %708 = vmatprep.subr.mxu0 0.0
        %709 = vmatpush1.msra.mxu0 0.0
        %710 = vmatprep.subr.mxu0 0.0
        %711 = vmatpush1.msra.mxu0 0.0
        %712 = vmatprep.subr.mxu0 0.0
        %713 = vmatpush1.msra.mxu0 0.0
        %714 = vmatprep.subr.mxu0 0.0
        %715 = vmatpush1.msra.mxu0 0.0
        %716 = vmatprep.subr.mxu0 0.0
        %717 = vmatpush1.msra.mxu0 0.0
        %718 = vmatprep.subr.mxu0 0.0
        %719 = vmatpush1.msra.mxu0 0.0
        %720 = vmatprep.subr.mxu0 0.0
        %721 = vmatpush1.msra.mxu0 0.0
        %722 = vmatprep.subr.mxu0 0.0
        %723 = vmatpush1.msra.mxu0 0.0
        %724 = vmatprep.subr.mxu0 0.0
        %725 = vmatpush1.msra.mxu0 0.0
        %726 = vmatprep.subr.mxu0 0.0
        %727 = vmatpush1.msra.mxu0 0.0
        %728 = vmatprep.subr.mxu0 0.0
        %729 = vmatpush1.msra.mxu0 0.0
        %730 = vmatprep.subr.mxu0 0.0
        %731 = vmatpush1.msra.mxu0 0.0
        %732 = vmatprep.subr.mxu0 0.0
        %733 = vmatpush1.msra.mxu0 0.0
        %734 = vmatprep.subr.mxu0 0.0
        %735 = vmatpush1.msra.mxu0 0.0
        %736 = vmatprep.subr.mxu0 0.0
        %737 = vmatpush1.msra.mxu0 0.0
        %738 = vmatprep.subr.mxu0 0.0
        %739 = vmatpush1.msra.mxu0 0.0
        %740 = vmatprep.subr.mxu0 0.0
        %741 = vmatpush1.msra.mxu0 0.0
        %742 = vmatprep.subr.mxu0 0.0
        %743 = vmatpush1.msra.mxu0 0.0
        %744 = vmatprep.subr.mxu0 0.0
        %745 = vmatpush1.msra.mxu0 0.0
        %746 = vmatprep.subr.mxu0 0.0
        %747 = vmatpush1.msra.mxu0 0.0
        %748 = vmatprep.subr.mxu0 0.0
        %749 = vmatpush1.msra.mxu0 0.0
        %750 = vmatprep.subr.mxu0 0.0
        %751 = vmatpush1.msra.mxu0 0.0
        %752 = vmatprep.subr.mxu0 0.0
        %753 = vmatpush1.msra.mxu0 0.0
        %754 = vmatprep.subr.mxu0 0.0
        %755 = vmatpush1.msra.mxu0 0.0
        %756 = vmatprep.subr.mxu0 0.0
        %757 = vmatpush1.msra.mxu0 0.0
        %758 = vmatprep.subr.mxu0 0.0
        %759 = vmatpush1.msra.mxu0 0.0
        %760 = vmatprep.subr.mxu0 0.0
        %761 = vmatpush1.msra.mxu0 0.0
        %762 = vmatprep.mubr.f32.mxu0 0.0
        %763 = vmatmul.mubr.f32.gmra.mrb[0].mxu0 %v603
        %v764 = vpop.f32.mrb[0].mxu0
        %v765 = vadd.f32 %v599, %v764
        %v766 = vpop.f32.mrb[0].mxu0
        %767 = vmatprep.mubr.f32.mxu0 0.0
        %768 = vmatmul.mubr.f32.gmra.mrb[0].mxu0 %v606
        %v769 = vpop.f32.mrb[0].mxu0
        %v770 = vadd.f32 %v599, %v769
        %v771 = vpop.f32.mrb[0].mxu0
        %772 = vmatprep.mubr.f32.mxu0 0.0
        %773 = vmatmul.mubr.f32.gmra.mrb[0].mxu0 %v609
        %v774 = vpop.f32.mrb[0].mxu0
        %v775 = vadd.f32 %v599, %v774
        %v776 = vpop.f32.mrb[0].mxu0
        %777 = vmatprep.mubr.f32.mxu0 0.0
        %778 = vmatmul.mubr.f32.gmra.mrb[0].mxu0 %v612
        %v779 = vpop.f32.mrb[0].mxu0
        %v780 = vadd.f32 %v599, %v779
        %v781 = vpop.f32.mrb[0].mxu0
        %782 = vmatprep.mubr.f32.mxu0 0.0
        %783 = vmatmul.mubr.f32.gmra.mrb[0].mxu0 %v615
        %v784 = vpop.f32.mrb[0].mxu0
        %v785 = vadd.f32 %v599, %v784
        %v786 = vpop.f32.mrb[0].mxu0
        %787 = vmatprep.mubr.f32.mxu0 0.0
        %788 = vmatmul.mubr.f32.gmra.mrb[0].mxu0 %v618
        %v789 = vpop.f32.mrb[0].mxu0
        %v790 = vadd.f32 %v599, %v789
        %v791 = vpop.f32.mrb[0].mxu0
        %792 = vmatprep.mubr.f32.mxu0 0.0
        %793 = vmatmul.mubr.f32.gmra.mrb[0].mxu0 %v621
        %v794 = vpop.f32.mrb[0].mxu0
        %v795 = vadd.f32 %v599, %v794
        %v796 = vpop.f32.mrb[0].mxu0
        %797 = vmatprep.mubr.f32.mxu0 0.0
        %798 = vmatmul.mubr.f32.gmra.mrb[0].mxu0 %v624
        %v799 = vpop.f32.mrb[0].mxu0
        %v800 = vadd.f32 %v599, %v799
        %v801 = vpop.f32.mrb[0].mxu0
        %802 = vmatprep.mubr.f32.mxu0 0.0
        %803 = vmatmul.mubr.f32.gmra.mrb[0].mxu0 %v627
        %v804 = vpop.f32.mrb[0].mxu0
        %v805 = vadd.f32 %v599, %v804
        %v806 = vpop.f32.mrb[0].mxu0
        %807 = vmatprep.mubr.f32.mxu0 0.0
        %808 = vmatmul.mubr.f32.gmra.mrb[0].mxu0 %v630
        %v809 = vpop.f32.mrb[0].mxu0
        %v810 = vadd.f32 %v599, %v809
        %v811 = vpop.f32.mrb[0].mxu0
        %812 = vmatprep.mubr.f32.mxu0 0.0
        %813 = vmatmul.mubr.f32.gmra.mrb[0].mxu0 %v633
        %v814 = vpop.f32.mrb[0].mxu0
        %v815 = vadd.f32 %v599, %v814
        %v816 = vpop.f32.mrb[0].mxu0
        %817 = vmatprep.mubr.f32.mxu0 0.0
        %818 = vmatmul.mubr.f32.gmra.mrb[0].mxu0 %v636
        %v819 = vpop.f32.mrb[0].mxu0
        %v820 = vadd.f32 %v599, %v819
        %v821 = vpop.f32.mrb[0].mxu0
        %822 = vmatprep.mubr.f32.mxu0 0.0
        %823 = vmatmul.mubr.f32.gmra.mrb[0].mxu0 %v639
        %v824 = vpop.f32.mrb[0].mxu0
        %v825 = vadd.f32 %v599, %v824
        %v826 = vpop.f32.mrb[0].mxu0
        %827 = vmatprep.mubr.f32.mxu0 0.0
        %828 = vmatmul.mubr.f32.gmra.mrb[0].mxu0 %v642
        %v829 = vpop.f32.mrb[0].mxu0
        %v830 = vadd.f32 %v599, %v829
        %v831 = vpop.f32.mrb[0].mxu0
        %832 = vmatprep.mubr.f32.mxu0 0.0
        %833 = vmatmul.mubr.f32.gmra.mrb[0].mxu0 %v645
        %v834 = vpop.f32.mrb[0].mxu0
        %v835 = vadd.f32 %v599, %v834
        %v836 = vpop.f32.mrb[0].mxu0
        %837 = vmatprep.mubr.f32.mxu0 0.0
        %838 = vmatmul.mubr.f32.gmra.mrb[0].mxu0 %v648
        %v839 = vpop.f32.mrb[0].mxu0
        %v840 = vadd.f32 %v599, %v839
        %v841 = vpop.f32.mrb[0].mxu0
        %842 = vmatprep.mubr.f32.mxu0 0.0
        %843 = vmatmul.mubr.f32.gmra.mrb[0].mxu0 %v651
        %v844 = vpop.f32.mrb[0].mxu0
        %v845 = vadd.f32 %v599, %v844
        %v846 = vpop.f32.mrb[0].mxu0
        %847 = vmatprep.mubr.f32.mxu0 0.0
        %848 = vmatmul.mubr.f32.gmra.mrb[0].mxu0 %v654
        %v849 = vpop.f32.mrb[0].mxu0
        %v850 = vadd.f32 %v599, %v849
        %v851 = vpop.f32.mrb[0].mxu0
        %852 = vmatprep.mubr.f32.mxu0 0.0
        %853 = vmatmul.mubr.f32.gmra.mrb[0].mxu0 %v657
        %v854 = vpop.f32.mrb[0].mxu0
        %v855 = vadd.f32 %v599, %v854
        %v856 = vpop.f32.mrb[0].mxu0
        %857 = vmatprep.mubr.f32.mxu0 0.0
        %858 = vmatmul.mubr.f32.gmra.mrb[0].mxu0 %v660
        %v859 = vpop.f32.mrb[0].mxu0
        %v860 = vadd.f32 %v599, %v859
        %v861 = vpop.f32.mrb[0].mxu0
        %862 = vmatprep.mubr.f32.mxu0 0.0
        %863 = vmatmul.mubr.f32.gmra.mrb[0].mxu0 %v663
        %v864 = vpop.f32.mrb[0].mxu0
        %v865 = vadd.f32 %v599, %v864
        %v866 = vpop.f32.mrb[0].mxu0
        %867 = vmatprep.mubr.f32.mxu0 0.0
        %868 = vmatmul.mubr.f32.gmra.mrb[0].mxu0 %v666
        %v869 = vpop.f32.mrb[0].mxu0
        %v870 = vadd.f32 %v599, %v869
        %v871 = vpop.f32.mrb[0].mxu0
        %872 = vmatprep.mubr.f32.mxu0 0.0
        %873 = vmatmul.mubr.f32.gmra.mrb[0].mxu0 %v669
        %v874 = vpop.f32.mrb[0].mxu0
        %v875 = vadd.f32 %v599, %v874
        %v876 = vpop.f32.mrb[0].mxu0
        %877 = vmatprep.mubr.f32.mxu0 0.0
        %878 = vmatmul.mubr.f32.gmra.mrb[0].mxu0 %v672
        %v879 = vpop.f32.mrb[0].mxu0
        %v880 = vadd.f32 %v599, %v879
        %v881 = vpop.f32.mrb[0].mxu0
        %882 = vmatprep.mubr.f32.mxu0 0.0
        %883 = vmatmul.mubr.f32.gmra.mrb[0].mxu0 %v675
        %v884 = vpop.f32.mrb[0].mxu0
        %v885 = vadd.f32 %v599, %v884
        %v886 = vpop.f32.mrb[0].mxu0
        %887 = vmatprep.mubr.f32.mxu0 0.0
        %888 = vmatmul.mubr.f32.gmra.mrb[0].mxu0 %v678
        %v889 = vpop.f32.mrb[0].mxu0
        %v890 = vadd.f32 %v599, %v889
        %v891 = vpop.f32.mrb[0].mxu0
        %892 = vmatprep.mubr.f32.mxu0 0.0
        %893 = vmatmul.mubr.f32.gmra.mrb[0].mxu0 %v681
        %v894 = vpop.f32.mrb[0].mxu0
        %v895 = vadd.f32 %v599, %v894
        %v896 = vpop.f32.mrb[0].mxu0
        %897 = vmatprep.mubr.f32.mxu0 0.0
        %898 = vmatmul.mubr.f32.gmra.mrb[0].mxu0 %v684
        %v899 = vpop.f32.mrb[0].mxu0
        %v900 = vadd.f32 %v599, %v899
        %v901 = vpop.f32.mrb[0].mxu0
        %902 = vmatprep.mubr.f32.mxu0 0.0
        %903 = vmatmul.mubr.f32.gmra.mrb[0].mxu0 %v687
        %v904 = vpop.f32.mrb[0].mxu0
        %v905 = vadd.f32 %v599, %v904
        %v906 = vpop.f32.mrb[0].mxu0
        %907 = vmatprep.mubr.f32.mxu0 0.0
        %908 = vmatmul.mubr.f32.gmra.mrb[0].mxu0 %v690
        %v909 = vpop.f32.mrb[0].mxu0
        %v910 = vadd.f32 %v599, %v909
        %v911 = vpop.f32.mrb[0].mxu0
        %912 = vmatprep.mubr.f32.mxu0 0.0
        %913 = vmatmul.mubr.f32.gmra.mrb[0].mxu0 %v693
        %v914 = vpop.f32.mrb[0].mxu0
        %v915 = vadd.f32 %v599, %v914
        %v916 = vpop.f32.mrb[0].mxu0
        %917 = vmatprep.mubr.f32.mxu0 0.0
        %918 = vmatmul.mubr.f32.gmra.mrb[0].mxu0 %v696
        %v919 = vpop.f32.mrb[0].mxu0
        %v920 = vadd.f32 %v599, %v919
        %v921 = vpop.f32.mrb[0].mxu0
        %922 = vdwg.mxu0
        %v923 = vmax.f32 %v765, 0.0
        %v924 = vmax.f32 %v770, 0.0
        %v925 = vmax.f32 %v775, 0.0
        %v926 = vmax.f32 %v780, 0.0
        %v927 = vmax.f32 %v785, 0.0
        %v928 = vmax.f32 %v790, 0.0
        %v929 = vmax.f32 %v795, 0.0
        %v930 = vmax.f32 %v800, 0.0
        %v931 = vmax.f32 %v805, 0.0
        %v932 = vmax.f32 %v810, 0.0
        %v933 = vmax.f32 %v815, 0.0
        %v934 = vmax.f32 %v820, 0.0
        %v935 = vmax.f32 %v825, 0.0
        %v936 = vmax.f32 %v830, 0.0
        %v937 = vmax.f32 %v835, 0.0
        %v938 = vmax.f32 %v840, 0.0
        %v939 = vmax.f32 %v845, 0.0
        %v940 = vmax.f32 %v850, 0.0
        %v941 = vmax.f32 %v855, 0.0
        %v942 = vmax.f32 %v860, 0.0
        %v943 = vmax.f32 %v865, 0.0
        %v944 = vmax.f32 %v870, 0.0
        %v945 = vmax.f32 %v875, 0.0
        %v946 = vmax.f32 %v880, 0.0
        %v947 = vmax.f32 %v885, 0.0
        %v948 = vmax.f32 %v890, 0.0
        %v949 = vmax.f32 %v895, 0.0
        %v950 = vmax.f32 %v900, 0.0
        %v951 = vmax.f32 %v905, 0.0
        %v952 = vmax.f32 %v910, 0.0
        %v953 = vmax.f32 %v915, 0.0
        %v954 = vmax.f32 %v920, 0.0
        %v955 = vld [vmem:[#allocation11] sm:$0xff]
        %v956 = vld [vmem:[#allocation11 + $0x8] sm:$0xff]
        %v957 = vld [vmem:[#allocation11 + $0x10] sm:$0xff]
        %v958 = vld [vmem:[#allocation11 + $0x18] sm:$0xff]
        %v959 = vld [vmem:[#allocation13] sm:$0x1]
        %v961 = vlaneseq
        %v962 = vshrl.u32 %v961, 7
        %v963 = vsub.s32 0, %v962
        %v964 = vrot.slane %v959, %v963
        %v967 = vsel %vm601, %v586, 0
        %v970 = vsel %vm601, %v587, 0
        %972 = vmatprep.subr.mxu0 0.0
        %973 = vmatpush1.msra.mxu0 %v955
        %974 = vmatprep.subr.mxu0 0.0
        %975 = vmatpush1.msra.mxu0 %v956
        %976 = vmatprep.subr.mxu0 0.0
        %977 = vmatpush1.msra.mxu0 %v957
        %978 = vmatprep.subr.mxu0 0.0
        %979 = vmatpush1.msra.mxu0 %v958
        %980 = vmatprep.subr.mxu0 0.0
        %981 = vmatpush1.msra.mxu0 0.0
        %982 = vmatprep.subr.mxu0 0.0
        %983 = vmatpush1.msra.mxu0 0.0
        %984 = vmatprep.subr.mxu0 0.0
        %985 = vmatpush1.msra.mxu0 0.0
        %986 = vmatprep.subr.mxu0 0.0
        %987 = vmatpush1.msra.mxu0 0.0
        %988 = vmatprep.subr.mxu0 0.0
        %989 = vmatpush1.msra.mxu0 0.0
        %990 = vmatprep.subr.mxu0 0.0
        %991 = vmatpush1.msra.mxu0 0.0
        %992 = vmatprep.subr.mxu0 0.0
        %993 = vmatpush1.msra.mxu0 0.0
        %994 = vmatprep.subr.mxu0 0.0
        %995 = vmatpush1.msra.mxu0 0.0
        %996 = vmatprep.subr.mxu0 0.0
        %997 = vmatpush1.msra.mxu0 0.0
        %998 = vmatprep.subr.mxu0 0.0
        %999 = vmatpush1.msra.mxu0 0.0
        %1000 = vmatprep.subr.mxu0 0.0
        %1001 = vmatpush1.msra.mxu0 0.0
        %1002 = vmatprep.subr.mxu0 0.0
        %1003 = vmatpush1.msra.mxu0 0.0
        %1004 = vmatprep.subr.mxu0 0.0
        %1005 = vmatpush1.msra.mxu0 0.0
        %1006 = vmatprep.subr.mxu0 0.0
        %1007 = vmatpush1.msra.mxu0 0.0
        %1008 = vmatprep.subr.mxu0 0.0
        %1009 = vmatpush1.msra.mxu0 0.0
        %1010 = vmatprep.subr.mxu0 0.0
        %1011 = vmatpush1.msra.mxu0 0.0
        %1012 = vmatprep.subr.mxu0 0.0
        %1013 = vmatpush1.msra.mxu0 0.0
        %1014 = vmatprep.subr.mxu0 0.0
        %1015 = vmatpush1.msra.mxu0 0.0
        %1016 = vmatprep.subr.mxu0 0.0
        %1017 = vmatpush1.msra.mxu0 0.0
        %1018 = vmatprep.subr.mxu0 0.0
        %1019 = vmatpush1.msra.mxu0 0.0
        %1020 = vmatprep.subr.mxu0 0.0
        %1021 = vmatpush1.msra.mxu0 0.0
        %1022 = vmatprep.subr.mxu0 0.0
        %1023 = vmatpush1.msra.mxu0 0.0
        %1024 = vmatprep.subr.mxu0 0.0
        %1025 = vmatpush1.msra.mxu0 0.0
        %1026 = vmatprep.subr.mxu0 0.0
        %1027 = vmatpush1.msra.mxu0 0.0
        %1028 = vmatprep.subr.mxu0 0.0
        %1029 = vmatpush1.msra.mxu0 0.0
        %1030 = vmatprep.subr.mxu0 0.0
        %1031 = vmatpush1.msra.mxu0 0.0
        %1032 = vmatprep.subr.mxu0 0.0
        %1033 = vmatpush1.msra.mxu0 0.0
        %1034 = vmatprep.subr.mxu0 0.0
        %1035 = vmatpush1.msra.mxu0 0.0
        %1036 = vmatprep.mubr.f32.mxu0 0.0
        %1037 = vmatmul.mubr.f32.gmra.mrb[0].mxu0 %v967
        %v1038 = vpop.f32.mrb[0].mxu0
        %v1039 = vadd.f32 %v964, %v1038
        %v1040 = vpop.f32.mrb[0].mxu0
        %1041 = vmatprep.mubr.f32.mxu0 0.0
        %1042 = vmatmul.mubr.f32.gmra.mrb[0].mxu0 %v970
        %v1043 = vpop.f32.mrb[0].mxu0
        %v1044 = vadd.f32 %v964, %v1043
        %v1045 = vpop.f32.mrb[0].mxu0
        %1046 = vdwg.mxu0
        %v1047 = vmax.f32 %v1039, 0.0
        %v1048 = vmax.f32 %v1044, 0.0
        %v1049 = vld [vmem:[#allocation14] sm:$0xff]
        %v1050 = vld [vmem:[#allocation14 + $0x8] sm:$0xff]
        %v1051 = vld [vmem:[#allocation14 + $0x10] sm:$0xff]
        %v1052 = vld [vmem:[#allocation14 + $0x18] sm:$0xff]
        %v1053 = vld [vmem:[#allocation16] sm:$0x1]
        %v1055 = vlaneseq
        %v1056 = vshrl.u32 %v1055, 7
        %v1057 = vsub.s32 0, %v1056
        %v1058 = vrot.slane %v1053, %v1057
        %v1061 = vsel %vm601, %v588, 0
        %v1064 = vsel %vm601, %v589, 0
        %1066 = vmatprep.subr.mxu0 0.0
        %1067 = vmatpush1.msra.mxu0 %v1049
        %1068 = vmatprep.subr.mxu0 0.0
        %1069 = vmatpush1.msra.mxu0 %v1050
        %1070 = vmatprep.subr.mxu0 0.0
        %1071 = vmatpush1.msra.mxu0 %v1051
        %1072 = vmatprep.subr.mxu0 0.0
        %1073 = vmatpush1.msra.mxu0 %v1052
        %1074 = vmatprep.subr.mxu0 0.0
        %1075 = vmatpush1.msra.mxu0 0.0
        %1076 = vmatprep.subr.mxu0 0.0
        %1077 = vmatpush1.msra.mxu0 0.0
        %1078 = vmatprep.subr.mxu0 0.0
        %1079 = vmatpush1.msra.mxu0 0.0
        %1080 = vmatprep.subr.mxu0 0.0
        %1081 = vmatpush1.msra.mxu0 0.0
        %1082 = vmatprep.subr.mxu0 0.0
        %1083 = vmatpush1.msra.mxu0 0.0
        %1084 = vmatprep.subr.mxu0 0.0
        %1085 = vmatpush1.msra.mxu0 0.0
        %1086 = vmatprep.subr.mxu0 0.0
        %1087 = vmatpush1.msra.mxu0 0.0
        %1088 = vmatprep.subr.mxu0 0.0
        %1089 = vmatpush1.msra.mxu0 0.0
        %1090 = vmatprep.subr.mxu0 0.0
        %1091 = vmatpush1.msra.mxu0 0.0
        %1092 = vmatprep.subr.mxu0 0.0
        %1093 = vmatpush1.msra.mxu0 0.0
        %1094 = vmatprep.subr.mxu0 0.0
        %1095 = vmatpush1.msra.mxu0 0.0
        %1096 = vmatprep.subr.mxu0 0.0
        %1097 = vmatpush1.msra.mxu0 0.0
        %1098 = vmatprep.subr.mxu0 0.0
        %1099 = vmatpush1.msra.mxu0 0.0
        %1100 = vmatprep.subr.mxu0 0.0
        %1101 = vmatpush1.msra.mxu0 0.0
        %1102 = vmatprep.subr.mxu0 0.0
        %1103 = vmatpush1.msra.mxu0 0.0
        %1104 = vmatprep.subr.mxu0 0.0
        %1105 = vmatpush1.msra.mxu0 0.0
        %1106 = vmatprep.subr.mxu0 0.0
        %1107 = vmatpush1.msra.mxu0 0.0
        %1108 = vmatprep.subr.mxu0 0.0
        %1109 = vmatpush1.msra.mxu0 0.0
        %1110 = vmatprep.subr.mxu0 0.0
        %1111 = vmatpush1.msra.mxu0 0.0
        %1112 = vmatprep.subr.mxu0 0.0
        %1113 = vmatpush1.msra.mxu0 0.0
        %1114 = vmatprep.subr.mxu0 0.0
        %1115 = vmatpush1.msra.mxu0 0.0
        %1116 = vmatprep.subr.mxu0 0.0
        %1117 = vmatpush1.msra.mxu0 0.0
        %1118 = vmatprep.subr.mxu0 0.0
        %1119 = vmatpush1.msra.mxu0 0.0
        %1120 = vmatprep.subr.mxu0 0.0
        %1121 = vmatpush1.msra.mxu0 0.0
        %1122 = vmatprep.subr.mxu0 0.0
        %1123 = vmatpush1.msra.mxu0 0.0
        %1124 = vmatprep.subr.mxu0 0.0
        %1125 = vmatpush1.msra.mxu0 0.0
        %1126 = vmatprep.subr.mxu0 0.0
        %1127 = vmatpush1.msra.mxu0 0.0
        %1128 = vmatprep.subr.mxu0 0.0
        %1129 = vmatpush1.msra.mxu0 0.0
        %1130 = vmatprep.mubr.f32.mxu0 0.0
        %1131 = vmatmul.mubr.f32.gmra.mrb[0].mxu0 %v1061
        %v1132 = vpop.f32.mrb[0].mxu0
        %v1133 = vadd.f32 %v1058, %v1132
        %v1134 = vpop.f32.mrb[0].mxu0
        %1135 = vmatprep.mubr.f32.mxu0 0.0
        %1136 = vmatmul.mubr.f32.gmra.mrb[0].mxu0 %v1064
        %v1137 = vpop.f32.mrb[0].mxu0
        %v1138 = vadd.f32 %v1058, %v1137
        %v1139 = vpop.f32.mrb[0].mxu0
        %1140 = vdwg.mxu0
        %v1141 = vmax.f32 %v1133, 0.0
        %v1142 = vmax.f32 %v1138, 0.0
        %v1143 = vmul.f32 %v1047, %v1141
        %v1144 = vmul.f32 %v1048, %v1142
        %v1145 = vld [vmem:[#allocation17] sm:$0x1]
        %v1147 = vlaneseq
        %v1148 = vshrl.u32 %v1147, 7
        %v1149 = vsub.s32 0, %v1148
        %v1150 = vrot.slane %v1145, %v1149
        %v1152 = vmul.f32 %v1143, %v1150
        %v1153 = vmul.f32 %v1144, %v1150
        %v1156 = vcombine.high %v1152, %v1152
        %v1158 = vunpack.c.l.s4 1966171168
        %v1159 = vunpack.c.0.s8 %v1158
        %v1160 = vlaneseq
        %v1161 = vshrl.u32 %v1160, 7
        %v1162 = vsub.s32 %v1159, %v1161
        %v1163 = vrot.slane %v1152, %v1162
        %v1165 = vunpack.c.l.s4 1966171168
        %v1166 = vunpack.c.0.s8 %v1165
        %v1167 = vlaneseq
        %v1168 = vshrl.u32 %v1167, 7
        %v1169 = vsub.s32 %v1166, %v1168
        %v1170 = vrot.slane %v1156, %v1169
        %v1171 = vcombine.high %v1163, %v1163
        %v1172 = vcombine.high %v1170, %v1170
        %v1174 = vunpack.c.l.s4 1966171168
        %v1175 = vunpack.c.0.s8 %v1174
        %v1176 = vlaneseq
        %v1177 = vshrl.u32 %v1176, 7
        %v1178 = vsub.s32 %v1175, %v1177
        %v1179 = vrot.slane %v1163, %v1178
        %v1181 = vunpack.c.l.s4 1966171168
        %v1182 = vunpack.c.0.s8 %v1181
        %v1183 = vlaneseq
        %v1184 = vshrl.u32 %v1183, 7
        %v1185 = vsub.s32 %v1182, %v1184
        %v1186 = vrot.slane %v1170, %v1185
        %v1188 = vunpack.c.l.s4 1966171168
        %v1189 = vunpack.c.0.s8 %v1188
        %v1190 = vlaneseq
        %v1191 = vshrl.u32 %v1190, 7
        %v1192 = vsub.s32 %v1189, %v1191
        %v1193 = vrot.slane %v1171, %v1192
        %v1195 = vunpack.c.l.s4 1966171168
        %v1196 = vunpack.c.0.s8 %v1195
        %v1197 = vlaneseq
        %v1198 = vshrl.u32 %v1197, 7
        %v1199 = vsub.s32 %v1196, %v1198
        %v1200 = vrot.slane %v1172, %v1199
        %v1201 = vcombine.high %v1179, %v1179
        %v1202 = vcombine.high %v1186, %v1186
        %v1203 = vcombine.high %v1193, %v1193
        %v1204 = vcombine.high %v1200, %v1200
        %v1205 = vcombine.high %v1153, %v1153
        %v1207 = vunpack.c.l.s4 1966171168
        %v1208 = vunpack.c.0.s8 %v1207
        %v1209 = vlaneseq
        %v1210 = vshrl.u32 %v1209, 7
        %v1211 = vsub.s32 %v1208, %v1210
        %v1212 = vrot.slane %v1153, %v1211
        %v1214 = vunpack.c.l.s4 1966171168
        %v1215 = vunpack.c.0.s8 %v1214
        %v1216 = vlaneseq
        %v1217 = vshrl.u32 %v1216, 7
        %v1218 = vsub.s32 %v1215, %v1217
        %v1219 = vrot.slane %v1205, %v1218
        %v1220 = vcombine.high %v1212, %v1212
        %v1221 = vcombine.high %v1219, %v1219
        %v1223 = vunpack.c.l.s4 1966171168
        %v1224 = vunpack.c.0.s8 %v1223
        %v1225 = vlaneseq
        %v1226 = vshrl.u32 %v1225, 7
        %v1227 = vsub.s32 %v1224, %v1226
        %v1228 = vrot.slane %v1212, %v1227
        %v1230 = vunpack.c.l.s4 1966171168
        %v1231 = vunpack.c.0.s8 %v1230
        %v1232 = vlaneseq
        %v1233 = vshrl.u32 %v1232, 7
        %v1234 = vsub.s32 %v1231, %v1233
        %v1235 = vrot.slane %v1219, %v1234
        %v1237 = vunpack.c.l.s4 1966171168
        %v1238 = vunpack.c.0.s8 %v1237
        %v1239 = vlaneseq
        %v1240 = vshrl.u32 %v1239, 7
        %v1241 = vsub.s32 %v1238, %v1240
        %v1242 = vrot.slane %v1220, %v1241
        %v1244 = vunpack.c.l.s4 1966171168
        %v1245 = vunpack.c.0.s8 %v1244
        %v1246 = vlaneseq
        %v1247 = vshrl.u32 %v1246, 7
        %v1248 = vsub.s32 %v1245, %v1247
        %v1249 = vrot.slane %v1221, %v1248
        %v1250 = vcombine.high %v1228, %v1228
        %v1251 = vcombine.high %v1235, %v1235
        %v1252 = vcombine.high %v1242, %v1242
        %v1253 = vcombine.high %v1249, %v1249
        %v1254 = vlaneseq
        %v1255 = vshrl.u32 %v1254, 7
        %v1256 = vsub.s32 0, %v1255
        %v1257 = vrot.slane %v1179, %v1256
        %v1258 = vlaneseq
        %v1259 = vshrl.u32 %v1258, 7
        %v1260 = vsub.s32 0, %v1259
        %v1261 = vrot.slane %v1193, %v1260
        %v1262 = vlaneseq
        %v1263 = vshrl.u32 %v1262, 7
        %v1264 = vsub.s32 0, %v1263
        %v1265 = vrot.slane %v1201, %v1264
        %v1266 = vlaneseq
        %v1267 = vshrl.u32 %v1266, 7
        %v1268 = vsub.s32 0, %v1267
        %v1269 = vrot.slane %v1203, %v1268
        %v1270 = vlaneseq
        %v1271 = vshrl.u32 %v1270, 7
        %v1272 = vsub.s32 0, %v1271
        %v1273 = vrot.slane %v1186, %v1272
        %v1274 = vlaneseq
        %v1275 = vshrl.u32 %v1274, 7
        %v1276 = vsub.s32 0, %v1275
        %v1277 = vrot.slane %v1200, %v1276
        %v1278 = vlaneseq
        %v1279 = vshrl.u32 %v1278, 7
        %v1280 = vsub.s32 0, %v1279
        %v1281 = vrot.slane %v1202, %v1280
        %v1282 = vlaneseq
        %v1283 = vshrl.u32 %v1282, 7
        %v1284 = vsub.s32 0, %v1283
        %v1285 = vrot.slane %v1204, %v1284
        %v1286 = vlaneseq
        %v1287 = vshrl.u32 %v1286, 7
        %v1288 = vsub.s32 0, %v1287
        %v1289 = vrot.slane %v1228, %v1288
        %v1290 = vlaneseq
        %v1291 = vshrl.u32 %v1290, 7
        %v1292 = vsub.s32 0, %v1291
        %v1293 = vrot.slane %v1242, %v1292
        %v1294 = vlaneseq
        %v1295 = vshrl.u32 %v1294, 7
        %v1296 = vsub.s32 0, %v1295
        %v1297 = vrot.slane %v1250, %v1296
        %v1298 = vlaneseq
        %v1299 = vshrl.u32 %v1298, 7
        %v1300 = vsub.s32 0, %v1299
        %v1301 = vrot.slane %v1252, %v1300
        %v1302 = vlaneseq
        %v1303 = vshrl.u32 %v1302, 7
        %v1304 = vsub.s32 0, %v1303
        %v1305 = vrot.slane %v1235, %v1304
        %v1306 = vlaneseq
        %v1307 = vshrl.u32 %v1306, 7
        %v1308 = vsub.s32 0, %v1307
        %v1309 = vrot.slane %v1249, %v1308
        %v1310 = vlaneseq
        %v1311 = vshrl.u32 %v1310, 7
        %v1312 = vsub.s32 0, %v1311
        %v1313 = vrot.slane %v1251, %v1312
        %v1314 = vlaneseq
        %v1315 = vshrl.u32 %v1314, 7
        %v1316 = vsub.s32 0, %v1315
        %v1317 = vrot.slane %v1253, %v1316
        %v1334 = vmul.f32 %v923, %v1257
        %v1335 = vmul.f32 %v924, %v1257
        %v1336 = vmul.f32 %v925, %v1261
        %v1337 = vmul.f32 %v926, %v1261
        %v1338 = vmul.f32 %v927, %v1265
        %v1339 = vmul.f32 %v928, %v1265
        %v1340 = vmul.f32 %v929, %v1269
        %v1341 = vmul.f32 %v930, %v1269
        %v1342 = vmul.f32 %v931, %v1273
        %v1343 = vmul.f32 %v932, %v1273
        %v1344 = vmul.f32 %v933, %v1277
        %v1345 = vmul.f32 %v934, %v1277
        %v1346 = vmul.f32 %v935, %v1281
        %v1347 = vmul.f32 %v936, %v1281
        %v1348 = vmul.f32 %v937, %v1285
        %v1349 = vmul.f32 %v938, %v1285
        %v1350 = vmul.f32 %v939, %v1289
        %v1351 = vmul.f32 %v940, %v1289
        %v1352 = vmul.f32 %v941, %v1293
        %v1353 = vmul.f32 %v942, %v1293
        %v1354 = vmul.f32 %v943, %v1297
        %v1355 = vmul.f32 %v944, %v1297
        %v1356 = vmul.f32 %v945, %v1301
        %v1357 = vmul.f32 %v946, %v1301
        %v1358 = vmul.f32 %v947, %v1305
        %v1359 = vmul.f32 %v948, %v1305
        %v1360 = vmul.f32 %v949, %v1309
        %v1361 = vmul.f32 %v950, %v1309
        %v1362 = vmul.f32 %v951, %v1313
        %v1363 = vmul.f32 %v952, %v1313
        %v1364 = vmul.f32 %v953, %v1317
        %v1365 = vmul.f32 %v954, %v1317
        %v1366 = vsel %vm601, %v1334, 0.0
        %1367 = vadd.xlane.f32.xlu0 %v1366
        %v1368 = vpop.xlane.xlu0 %1367
        %v1369 = vsel %vm601, %v1335, 0.0
        %1370 = vadd.xlane.f32.xlu0 %v1369
        %v1371 = vpop.xlane.xlu0 %1370
        %v1372 = vsel %vm601, %v1336, 0.0
        %1373 = vadd.xlane.f32.xlu0 %v1372
        %v1374 = vpop.xlane.xlu0 %1373
        %v1375 = vsel %vm601, %v1337, 0.0
        %1376 = vadd.xlane.f32.xlu0 %v1375
        %v1377 = vpop.xlane.xlu0 %1376
        %v1378 = vsel %vm601, %v1338, 0.0
        %1379 = vadd.xlane.f32.xlu0 %v1378
        %v1380 = vpop.xlane.xlu0 %1379
        %v1381 = vsel %vm601, %v1339, 0.0
        %1382 = vadd.xlane.f32.xlu0 %v1381
        %v1383 = vpop.xlane.xlu0 %1382
        %v1384 = vsel %vm601, %v1340, 0.0
        %1385 = vadd.xlane.f32.xlu0 %v1384
        %v1386 = vpop.xlane.xlu0 %1385
        %v1387 = vsel %vm601, %v1341, 0.0
        %1388 = vadd.xlane.f32.xlu0 %v1387
        %v1389 = vpop.xlane.xlu0 %1388
        %v1390 = vsel %vm601, %v1342, 0.0
        %1391 = vadd.xlane.f32.xlu0 %v1390
        %v1392 = vpop.xlane.xlu0 %1391
        %v1393 = vsel %vm601, %v1343, 0.0
        %1394 = vadd.xlane.f32.xlu0 %v1393
        %v1395 = vpop.xlane.xlu0 %1394
        %v1396 = vsel %vm601, %v1344, 0.0
        %1397 = vadd.xlane.f32.xlu0 %v1396
        %v1398 = vpop.xlane.xlu0 %1397
        %v1399 = vsel %vm601, %v1345, 0.0
        %1400 = vadd.xlane.f32.xlu0 %v1399
        %v1401 = vpop.xlane.xlu0 %1400
        %v1402 = vsel %vm601, %v1346, 0.0
        %1403 = vadd.xlane.f32.xlu0 %v1402
        %v1404 = vpop.xlane.xlu0 %1403
        %v1405 = vsel %vm601, %v1347, 0.0
        %1406 = vadd.xlane.f32.xlu0 %v1405
        %v1407 = vpop.xlane.xlu0 %1406
        %v1408 = vsel %vm601, %v1348, 0.0
        %1409 = vadd.xlane.f32.xlu0 %v1408
        %v1410 = vpop.xlane.xlu0 %1409
        %v1411 = vsel %vm601, %v1349, 0.0
        %1412 = vadd.xlane.f32.xlu0 %v1411
        %v1413 = vpop.xlane.xlu0 %1412
        %v1414 = vsel %vm601, %v1350, 0.0
        %1415 = vadd.xlane.f32.xlu0 %v1414
        %v1416 = vpop.xlane.xlu0 %1415
        %v1417 = vsel %vm601, %v1351, 0.0
        %1418 = vadd.xlane.f32.xlu0 %v1417
        %v1419 = vpop.xlane.xlu0 %1418
        %v1420 = vsel %vm601, %v1352, 0.0
        %1421 = vadd.xlane.f32.xlu0 %v1420
        %v1422 = vpop.xlane.xlu0 %1421
        %v1423 = vsel %vm601, %v1353, 0.0
        %1424 = vadd.xlane.f32.xlu0 %v1423
        %v1425 = vpop.xlane.xlu0 %1424
        %v1426 = vsel %vm601, %v1354, 0.0
        %1427 = vadd.xlane.f32.xlu0 %v1426
        %v1428 = vpop.xlane.xlu0 %1427
        %v1429 = vsel %vm601, %v1355, 0.0
        %1430 = vadd.xlane.f32.xlu0 %v1429
        %v1431 = vpop.xlane.xlu0 %1430
        %v1432 = vsel %vm601, %v1356, 0.0
        %1433 = vadd.xlane.f32.xlu0 %v1432
        %v1434 = vpop.xlane.xlu0 %1433
        %v1435 = vsel %vm601, %v1357, 0.0
        %1436 = vadd.xlane.f32.xlu0 %v1435
        %v1437 = vpop.xlane.xlu0 %1436
        %v1438 = vsel %vm601, %v1358, 0.0
        %1439 = vadd.xlane.f32.xlu0 %v1438
        %v1440 = vpop.xlane.xlu0 %1439
        %v1441 = vsel %vm601, %v1359, 0.0
        %1442 = vadd.xlane.f32.xlu0 %v1441
        %v1443 = vpop.xlane.xlu0 %1442
        %v1444 = vsel %vm601, %v1360, 0.0
        %1445 = vadd.xlane.f32.xlu0 %v1444
        %v1446 = vpop.xlane.xlu0 %1445
        %v1447 = vsel %vm601, %v1361, 0.0
        %1448 = vadd.xlane.f32.xlu0 %v1447
        %v1449 = vpop.xlane.xlu0 %1448
        %v1450 = vsel %vm601, %v1362, 0.0
        %1451 = vadd.xlane.f32.xlu0 %v1450
        %v1452 = vpop.xlane.xlu0 %1451
        %v1453 = vsel %vm601, %v1363, 0.0
        %1454 = vadd.xlane.f32.xlu0 %v1453
        %v1455 = vpop.xlane.xlu0 %1454
        %v1456 = vsel %vm601, %v1364, 0.0
        %1457 = vadd.xlane.f32.xlu0 %v1456
        %v1458 = vpop.xlane.xlu0 %1457
        %v1459 = vsel %vm601, %v1365, 0.0
        %1460 = vadd.xlane.f32.xlu0 %v1459
        %v1461 = vpop.xlane.xlu0 %1460
        %v1494 = vlaneseq
        %v1495 = vand.u32 %v1494, 127
        %v1496 = vlaneseq
        %v1497 = vshrl.u32 %v1496, 7
        %v1498 = vsub.s32 %v1495, %v1497
        %v1499 = vrot.slane %v1368, %v1498
        %v1500 = vadd.s32 %v1495, 4294967288
        %v1501 = vlaneseq
        %v1502 = vshrl.u32 %v1501, 7
        %v1503 = vsub.s32 %v1500, %v1502
        %v1504 = vrot.slane %v1371, %v1503
        %vm1505 = vcmask 130112
        %v1506 = vsel %vm1505, %v1504, %v1499
        %v1507 = vlaneseq
        %v1508 = vshrl.u32 %v1507, 7
        %v1509 = vsub.s32 %v1495, %v1508
        %v1510 = vrot.slane %v1374, %v1509
        %v1511 = vlaneseq
        %v1512 = vshrl.u32 %v1511, 7
        %v1513 = vsub.s32 %v1500, %v1512
        %v1514 = vrot.slane %v1377, %v1513
        %v1515 = vsel %vm1505, %v1514, %v1510
        %v1516 = vlaneseq
        %v1517 = vshrl.u32 %v1516, 7
        %v1518 = vsub.s32 %v1495, %v1517
        %v1519 = vrot.slane %v1380, %v1518
        %v1520 = vlaneseq
        %v1521 = vshrl.u32 %v1520, 7
        %v1522 = vsub.s32 %v1500, %v1521
        %v1523 = vrot.slane %v1383, %v1522
        %v1524 = vsel %vm1505, %v1523, %v1519
        %v1525 = vlaneseq
        %v1526 = vshrl.u32 %v1525, 7
        %v1527 = vsub.s32 %v1495, %v1526
        %v1528 = vrot.slane %v1386, %v1527
        %v1529 = vlaneseq
        %v1530 = vshrl.u32 %v1529, 7
        %v1531 = vsub.s32 %v1500, %v1530
        %v1532 = vrot.slane %v1389, %v1531
        %v1533 = vsel %vm1505, %v1532, %v1528
        %v1534 = vlaneseq
        %v1535 = vshrl.u32 %v1534, 7
        %v1536 = vsub.s32 %v1495, %v1535
        %v1537 = vrot.slane %v1392, %v1536
        %v1538 = vlaneseq
        %v1539 = vshrl.u32 %v1538, 7
        %v1540 = vsub.s32 %v1500, %v1539
        %v1541 = vrot.slane %v1395, %v1540
        %v1542 = vsel %vm1505, %v1541, %v1537
        %v1543 = vlaneseq
        %v1544 = vshrl.u32 %v1543, 7
        %v1545 = vsub.s32 %v1495, %v1544
        %v1546 = vrot.slane %v1398, %v1545
        %v1547 = vlaneseq
        %v1548 = vshrl.u32 %v1547, 7
        %v1549 = vsub.s32 %v1500, %v1548
        %v1550 = vrot.slane %v1401, %v1549
        %v1551 = vsel %vm1505, %v1550, %v1546
        %v1552 = vlaneseq
        %v1553 = vshrl.u32 %v1552, 7
        %v1554 = vsub.s32 %v1495, %v1553
        %v1555 = vrot.slane %v1404, %v1554
        %v1556 = vlaneseq
        %v1557 = vshrl.u32 %v1556, 7
        %v1558 = vsub.s32 %v1500, %v1557
        %v1559 = vrot.slane %v1407, %v1558
        %v1560 = vsel %vm1505, %v1559, %v1555
        %v1561 = vlaneseq
        %v1562 = vshrl.u32 %v1561, 7
        %v1563 = vsub.s32 %v1495, %v1562
        %v1564 = vrot.slane %v1410, %v1563
        %v1565 = vlaneseq
        %v1566 = vshrl.u32 %v1565, 7
        %v1567 = vsub.s32 %v1500, %v1566
        %v1568 = vrot.slane %v1413, %v1567
        %v1569 = vsel %vm1505, %v1568, %v1564
        %v1570 = vlaneseq
        %v1571 = vshrl.u32 %v1570, 7
        %v1572 = vsub.s32 %v1495, %v1571
        %v1573 = vrot.slane %v1416, %v1572
        %v1574 = vlaneseq
        %v1575 = vshrl.u32 %v1574, 7
        %v1576 = vsub.s32 %v1500, %v1575
        %v1577 = vrot.slane %v1419, %v1576
        %v1578 = vsel %vm1505, %v1577, %v1573
        %v1579 = vlaneseq
        %v1580 = vshrl.u32 %v1579, 7
        %v1581 = vsub.s32 %v1495, %v1580
        %v1582 = vrot.slane %v1422, %v1581
        %v1583 = vlaneseq
        %v1584 = vshrl.u32 %v1583, 7
        %v1585 = vsub.s32 %v1500, %v1584
        %v1586 = vrot.slane %v1425, %v1585
        %v1587 = vsel %vm1505, %v1586, %v1582
        %v1588 = vlaneseq
        %v1589 = vshrl.u32 %v1588, 7
        %v1590 = vsub.s32 %v1495, %v1589
        %v1591 = vrot.slane %v1428, %v1590
        %v1592 = vlaneseq
        %v1593 = vshrl.u32 %v1592, 7
        %v1594 = vsub.s32 %v1500, %v1593
        %v1595 = vrot.slane %v1431, %v1594
        %v1596 = vsel %vm1505, %v1595, %v1591
        %v1597 = vlaneseq
        %v1598 = vshrl.u32 %v1597, 7
        %v1599 = vsub.s32 %v1495, %v1598
        %v1600 = vrot.slane %v1434, %v1599
        %v1601 = vlaneseq
        %v1602 = vshrl.u32 %v1601, 7
        %v1603 = vsub.s32 %v1500, %v1602
        %v1604 = vrot.slane %v1437, %v1603
        %v1605 = vsel %vm1505, %v1604, %v1600
        %v1606 = vlaneseq
        %v1607 = vshrl.u32 %v1606, 7
        %v1608 = vsub.s32 %v1495, %v1607
        %v1609 = vrot.slane %v1440, %v1608
        %v1610 = vlaneseq
        %v1611 = vshrl.u32 %v1610, 7
        %v1612 = vsub.s32 %v1500, %v1611
        %v1613 = vrot.slane %v1443, %v1612
        %v1614 = vsel %vm1505, %v1613, %v1609
        %v1615 = vlaneseq
        %v1616 = vshrl.u32 %v1615, 7
        %v1617 = vsub.s32 %v1495, %v1616
        %v1618 = vrot.slane %v1446, %v1617
        %v1619 = vlaneseq
        %v1620 = vshrl.u32 %v1619, 7
        %v1621 = vsub.s32 %v1500, %v1620
        %v1622 = vrot.slane %v1449, %v1621
        %v1623 = vsel %vm1505, %v1622, %v1618
        %v1624 = vlaneseq
        %v1625 = vshrl.u32 %v1624, 7
        %v1626 = vsub.s32 %v1495, %v1625
        %v1627 = vrot.slane %v1452, %v1626
        %v1628 = vlaneseq
        %v1629 = vshrl.u32 %v1628, 7
        %v1630 = vsub.s32 %v1500, %v1629
        %v1631 = vrot.slane %v1455, %v1630
        %v1632 = vsel %vm1505, %v1631, %v1627
        %v1633 = vlaneseq
        %v1634 = vshrl.u32 %v1633, 7
        %v1635 = vsub.s32 %v1495, %v1634
        %v1636 = vrot.slane %v1458, %v1635
        %v1637 = vlaneseq
        %v1638 = vshrl.u32 %v1637, 7
        %v1639 = vsub.s32 %v1500, %v1638
        %v1640 = vrot.slane %v1461, %v1639
        %v1641 = vsel %vm1505, %v1640, %v1636
        %vm1642 = vcmask 1041409
        %v1643 = vsel %vm1642, %v1515, %v1506
        %vm1644 = vcmask 1042434
        %v1645 = vsel %vm1644, %v1524, %v1643
        %vm1646 = vcmask 1043459
        %v1647 = vsel %vm1646, %v1533, %v1645
        %vm1648 = vcmask 1044484
        %v1649 = vsel %vm1648, %v1542, %v1647
        %vm1650 = vcmask 1045509
        %v1651 = vsel %vm1650, %v1551, %v1649
        %vm1652 = vcmask 1046534
        %v1653 = vsel %vm1652, %v1560, %v1651
        %vm1654 = vcmask 1047559
        %v1655 = vsel %vm1654, %v1569, %v1653
        %v1656 = vsel %vm1642, %v1587, %v1578
        %v1657 = vsel %vm1644, %v1596, %v1656
        %v1658 = vsel %vm1646, %v1605, %v1657
        %v1659 = vsel %vm1648, %v1614, %v1658
        %v1660 = vsel %vm1650, %v1623, %v1659
        %v1661 = vsel %vm1652, %v1632, %v1660
        %v1662 = vsel %vm1654, %v1641, %v1661
        %vm1665 = vcmask 130048
        %v1666 = vsel %vm1665, %v1655, -inf
        %1667 = vmax.xlane.f32.xlu0 %v1666
        %v1668 = vpop.xlane.xlu0 %1667
        %v1669 = vsel %vm1665, %v1662, -inf
        %1670 = vmax.xlane.f32.xlu0 %v1669
        %v1671 = vpop.xlane.xlu0 %1670
        %v1674 = vlaneseq
        %v1675 = vshrl.u32 %v1674, 7
        %v1676 = vsub.s32 0, %v1675
        %v1677 = vrot.slane %v1668, %v1676
        %v1678 = vlaneseq
        %v1679 = vshrl.u32 %v1678, 7
        %v1680 = vsub.s32 1, %v1679
        %v1681 = vrot.slane %v1668, %v1680
        %v1682 = vlaneseq
        %v1683 = vshrl.u32 %v1682, 7
        %v1684 = vsub.s32 2, %v1683
        %v1685 = vrot.slane %v1668, %v1684
        %v1686 = vlaneseq
        %v1687 = vshrl.u32 %v1686, 7
        %v1688 = vsub.s32 3, %v1687
        %v1689 = vrot.slane %v1668, %v1688
        %v1690 = vlaneseq
        %v1691 = vshrl.u32 %v1690, 7
        %v1692 = vsub.s32 4, %v1691
        %v1693 = vrot.slane %v1668, %v1692
        %v1694 = vlaneseq
        %v1695 = vshrl.u32 %v1694, 7
        %v1696 = vsub.s32 5, %v1695
        %v1697 = vrot.slane %v1668, %v1696
        %v1698 = vlaneseq
        %v1699 = vshrl.u32 %v1698, 7
        %v1700 = vsub.s32 6, %v1699
        %v1701 = vrot.slane %v1668, %v1700
        %v1702 = vlaneseq
        %v1703 = vshrl.u32 %v1702, 7
        %v1704 = vsub.s32 7, %v1703
        %v1705 = vrot.slane %v1668, %v1704
        %v1706 = vlaneseq
        %v1707 = vshrl.u32 %v1706, 7
        %v1708 = vsub.s32 0, %v1707
        %v1709 = vrot.slane %v1671, %v1708
        %v1710 = vlaneseq
        %v1711 = vshrl.u32 %v1710, 7
        %v1712 = vsub.s32 1, %v1711
        %v1713 = vrot.slane %v1671, %v1712
        %v1714 = vlaneseq
        %v1715 = vshrl.u32 %v1714, 7
        %v1716 = vsub.s32 2, %v1715
        %v1717 = vrot.slane %v1671, %v1716
        %v1718 = vlaneseq
        %v1719 = vshrl.u32 %v1718, 7
        %v1720 = vsub.s32 3, %v1719
        %v1721 = vrot.slane %v1671, %v1720
        %v1722 = vlaneseq
        %v1723 = vshrl.u32 %v1722, 7
        %v1724 = vsub.s32 4, %v1723
        %v1725 = vrot.slane %v1671, %v1724
        %v1726 = vlaneseq
        %v1727 = vshrl.u32 %v1726, 7
        %v1728 = vsub.s32 5, %v1727
        %v1729 = vrot.slane %v1671, %v1728
        %v1730 = vlaneseq
        %v1731 = vshrl.u32 %v1730, 7
        %v1732 = vsub.s32 6, %v1731
        %v1733 = vrot.slane %v1671, %v1732
        %v1734 = vlaneseq
        %v1735 = vshrl.u32 %v1734, 7
        %v1736 = vsub.s32 7, %v1735
        %v1737 = vrot.slane %v1671, %v1736
        %v1754 = vsub.f32 %v1368, %v1677
        %v1755 = vsub.f32 %v1371, %v1677
        %v1756 = vsub.f32 %v1374, %v1681
        %v1757 = vsub.f32 %v1377, %v1681
        %v1758 = vsub.f32 %v1380, %v1685
        %v1759 = vsub.f32 %v1383, %v1685
        %v1760 = vsub.f32 %v1386, %v1689
        %v1761 = vsub.f32 %v1389, %v1689
        %v1762 = vsub.f32 %v1392, %v1693
        %v1763 = vsub.f32 %v1395, %v1693
        %v1764 = vsub.f32 %v1398, %v1697
        %v1765 = vsub.f32 %v1401, %v1697
        %v1766 = vsub.f32 %v1404, %v1701
        %v1767 = vsub.f32 %v1407, %v1701
        %v1768 = vsub.f32 %v1410, %v1705
        %v1769 = vsub.f32 %v1413, %v1705
        %v1770 = vsub.f32 %v1416, %v1709
        %v1771 = vsub.f32 %v1419, %v1709
        %v1772 = vsub.f32 %v1422, %v1713
        %v1773 = vsub.f32 %v1425, %v1713
        %v1774 = vsub.f32 %v1428, %v1717
        %v1775 = vsub.f32 %v1431, %v1717
        %v1776 = vsub.f32 %v1434, %v1721
        %v1777 = vsub.f32 %v1437, %v1721
        %v1778 = vsub.f32 %v1440, %v1725
        %v1779 = vsub.f32 %v1443, %v1725
        %v1780 = vsub.f32 %v1446, %v1729
        %v1781 = vsub.f32 %v1449, %v1729
        %v1782 = vsub.f32 %v1452, %v1733
        %v1783 = vsub.f32 %v1455, %v1733
        %v1784 = vsub.f32 %v1458, %v1737
        %v1785 = vsub.f32 %v1461, %v1737
        %v1786 = vmul.f32 %v1754, 1.442695
        %v1787 = vpow.pop %v1786
        %v1788 = vmul.f32 %v1755, 1.442695
        %v1789 = vpow.pop %v1788
        %v1790 = vmul.f32 %v1756, 1.442695
        %v1791 = vpow.pop %v1790
        %v1792 = vmul.f32 %v1757, 1.442695
        %v1793 = vpow.pop %v1792
        %v1794 = vmul.f32 %v1758, 1.442695
        %v1795 = vpow.pop %v1794
        %v1796 = vmul.f32 %v1759, 1.442695
        %v1797 = vpow.pop %v1796
        %v1798 = vmul.f32 %v1760, 1.442695
        %v1799 = vpow.pop %v1798
        %v1800 = vmul.f32 %v1761, 1.442695
        %v1801 = vpow.pop %v1800
        %v1802 = vmul.f32 %v1762, 1.442695
        %v1803 = vpow.pop %v1802
        %v1804 = vmul.f32 %v1763, 1.442695
        %v1805 = vpow.pop %v1804
        %v1806 = vmul.f32 %v1764, 1.442695
        %v1807 = vpow.pop %v1806
        %v1808 = vmul.f32 %v1765, 1.442695
        %v1809 = vpow.pop %v1808
        %v1810 = vmul.f32 %v1766, 1.442695
        %v1811 = vpow.pop %v1810
        %v1812 = vmul.f32 %v1767, 1.442695
        %v1813 = vpow.pop %v1812
        %v1814 = vmul.f32 %v1768, 1.442695
        %v1815 = vpow.pop %v1814
        %v1816 = vmul.f32 %v1769, 1.442695
        %v1817 = vpow.pop %v1816
        %v1818 = vmul.f32 %v1770, 1.442695
        %v1819 = vpow.pop %v1818
        %v1820 = vmul.f32 %v1771, 1.442695
        %v1821 = vpow.pop %v1820
        %v1822 = vmul.f32 %v1772, 1.442695
        %v1823 = vpow.pop %v1822
        %v1824 = vmul.f32 %v1773, 1.442695
        %v1825 = vpow.pop %v1824
        %v1826 = vmul.f32 %v1774, 1.442695
        %v1827 = vpow.pop %v1826
        %v1828 = vmul.f32 %v1775, 1.442695
        %v1829 = vpow.pop %v1828
        %v1830 = vmul.f32 %v1776, 1.442695
        %v1831 = vpow.pop %v1830
        %v1832 = vmul.f32 %v1777, 1.442695
        %v1833 = vpow.pop %v1832
        %v1834 = vmul.f32 %v1778, 1.442695
        %v1835 = vpow.pop %v1834
        %v1836 = vmul.f32 %v1779, 1.442695
        %v1837 = vpow.pop %v1836
        %v1838 = vmul.f32 %v1780, 1.442695
        %v1839 = vpow.pop %v1838
        %v1840 = vmul.f32 %v1781, 1.442695
        %v1841 = vpow.pop %v1840
        %v1842 = vmul.f32 %v1782, 1.442695
        %v1843 = vpow.pop %v1842
        %v1844 = vmul.f32 %v1783, 1.442695
        %v1845 = vpow.pop %v1844
        %v1846 = vmul.f32 %v1784, 1.442695
        %v1847 = vpow.pop %v1846
        %v1848 = vmul.f32 %v1785, 1.442695
        %v1849 = vpow.pop %v1848
        %1882 = vset.pattern.permute.xlu0 0
        %1883 = vperm.xlu0 %1882, %v1787
        %v1884 = vpop.permute.xlu0 %1883
        %1885 = vset.pattern.permute.xlu0 0
        %1886 = vperm.xlu0 %1885, %v1789
        %v1887 = vpop.permute.xlu0 %1886
        %1888 = vset.pattern.permute.xlu0 0
        %1889 = vperm.xlu0 %1888, %v1791
        %v1890 = vpop.permute.xlu0 %1889
        %1891 = vset.pattern.permute.xlu0 0
        %1892 = vperm.xlu0 %1891, %v1793
        %v1893 = vpop.permute.xlu0 %1892
        %1894 = vset.pattern.permute.xlu0 0
        %1895 = vperm.xlu0 %1894, %v1795
        %v1896 = vpop.permute.xlu0 %1895
        %1897 = vset.pattern.permute.xlu0 0
        %1898 = vperm.xlu0 %1897, %v1797
        %v1899 = vpop.permute.xlu0 %1898
        %1900 = vset.pattern.permute.xlu0 0
        %1901 = vperm.xlu0 %1900, %v1799
        %v1902 = vpop.permute.xlu0 %1901
        %1903 = vset.pattern.permute.xlu0 0
        %1904 = vperm.xlu0 %1903, %v1801
        %v1905 = vpop.permute.xlu0 %1904
        %1906 = vset.pattern.permute.xlu0 0
        %1907 = vperm.xlu0 %1906, %v1803
        %v1908 = vpop.permute.xlu0 %1907
        %1909 = vset.pattern.permute.xlu0 0
        %1910 = vperm.xlu0 %1909, %v1805
        %v1911 = vpop.permute.xlu0 %1910
        %1912 = vset.pattern.permute.xlu0 0
        %1913 = vperm.xlu0 %1912, %v1807
        %v1914 = vpop.permute.xlu0 %1913
        %1915 = vset.pattern.permute.xlu0 0
        %1916 = vperm.xlu0 %1915, %v1809
        %v1917 = vpop.permute.xlu0 %1916
        %1918 = vset.pattern.permute.xlu0 0
        %1919 = vperm.xlu0 %1918, %v1811
        %v1920 = vpop.permute.xlu0 %1919
        %1921 = vset.pattern.permute.xlu0 0
        %1922 = vperm.xlu0 %1921, %v1813
        %v1923 = vpop.permute.xlu0 %1922
        %1924 = vset.pattern.permute.xlu0 0
        %1925 = vperm.xlu0 %1924, %v1815
        %v1926 = vpop.permute.xlu0 %1925
        %1927 = vset.pattern.permute.xlu0 0
        %1928 = vperm.xlu0 %1927, %v1817
        %v1929 = vpop.permute.xlu0 %1928
        %1930 = vset.pattern.permute.xlu0 0
        %1931 = vperm.xlu0 %1930, %v1819
        %v1932 = vpop.permute.xlu0 %1931
        %1933 = vset.pattern.permute.xlu0 0
        %1934 = vperm.xlu0 %1933, %v1821
        %v1935 = vpop.permute.xlu0 %1934
        %1936 = vset.pattern.permute.xlu0 0
        %1937 = vperm.xlu0 %1936, %v1823
        %v1938 = vpop.permute.xlu0 %1937
        %1939 = vset.pattern.permute.xlu0 0
        %1940 = vperm.xlu0 %1939, %v1825
        %v1941 = vpop.permute.xlu0 %1940
        %1942 = vset.pattern.permute.xlu0 0
        %1943 = vperm.xlu0 %1942, %v1827
        %v1944 = vpop.permute.xlu0 %1943
        %1945 = vset.pattern.permute.xlu0 0
        %1946 = vperm.xlu0 %1945, %v1829
        %v1947 = vpop.permute.xlu0 %1946
        %1948 = vset.pattern.permute.xlu0 0
        %1949 = vperm.xlu0 %1948, %v1831
        %v1950 = vpop.permute.xlu0 %1949
        %1951 = vset.pattern.permute.xlu0 0
        %1952 = vperm.xlu0 %1951, %v1833
        %v1953 = vpop.permute.xlu0 %1952
        %1954 = vset.pattern.permute.xlu0 0
        %1955 = vperm.xlu0 %1954, %v1835
        %v1956 = vpop.permute.xlu0 %1955
        %1957 = vset.pattern.permute.xlu0 0
        %1958 = vperm.xlu0 %1957, %v1837
        %v1959 = vpop.permute.xlu0 %1958
        %1960 = vset.pattern.permute.xlu0 0
        %1961 = vperm.xlu0 %1960, %v1839
        %v1962 = vpop.permute.xlu0 %1961
        %1963 = vset.pattern.permute.xlu0 0
        %1964 = vperm.xlu0 %1963, %v1841
        %v1965 = vpop.permute.xlu0 %1964
        %1966 = vset.pattern.permute.xlu0 0
        %1967 = vperm.xlu0 %1966, %v1843
        %v1968 = vpop.permute.xlu0 %1967
        %1969 = vset.pattern.permute.xlu0 0
        %1970 = vperm.xlu0 %1969, %v1845
        %v1971 = vpop.permute.xlu0 %1970
        %1972 = vset.pattern.permute.xlu0 0
        %1973 = vperm.xlu0 %1972, %v1847
        %v1974 = vpop.permute.xlu0 %1973
        %1975 = vset.pattern.permute.xlu0 0
        %1976 = vperm.xlu0 %1975, %v1849
        %v1977 = vpop.permute.xlu0 %1976
        %v1978 = vlaneseq
        %v1979 = vshrl.u32 %v1978, 7
        %v1980 = vsub.s32 %v1495, %v1979
        %v1981 = vrot.slane %v1884, %v1980
        %v1982 = vlaneseq
        %v1983 = vshrl.u32 %v1982, 7
        %v1984 = vsub.s32 %v1500, %v1983
        %v1985 = vrot.slane %v1887, %v1984
        %v1986 = vsel %vm1505, %v1985, %v1981
        %v1987 = vlaneseq
        %v1988 = vshrl.u32 %v1987, 7
        %v1989 = vsub.s32 %v1495, %v1988
        %v1990 = vrot.slane %v1890, %v1989
        %v1991 = vlaneseq
        %v1992 = vshrl.u32 %v1991, 7
        %v1993 = vsub.s32 %v1500, %v1992
        %v1994 = vrot.slane %v1893, %v1993
        %v1995 = vsel %vm1505, %v1994, %v1990
        %v1996 = vlaneseq
        %v1997 = vshrl.u32 %v1996, 7
        %v1998 = vsub.s32 %v1495, %v1997
        %v1999 = vrot.slane %v1896, %v1998
        %v2000 = vlaneseq
        %v2001 = vshrl.u32 %v2000, 7
        %v2002 = vsub.s32 %v1500, %v2001
        %v2003 = vrot.slane %v1899, %v2002
        %v2004 = vsel %vm1505, %v2003, %v1999
        %v2005 = vlaneseq
        %v2006 = vshrl.u32 %v2005, 7
        %v2007 = vsub.s32 %v1495, %v2006
        %v2008 = vrot.slane %v1902, %v2007
        %v2009 = vlaneseq
        %v2010 = vshrl.u32 %v2009, 7
        %v2011 = vsub.s32 %v1500, %v2010
        %v2012 = vrot.slane %v1905, %v2011
        %v2013 = vsel %vm1505, %v2012, %v2008
        %v2014 = vlaneseq
        %v2015 = vshrl.u32 %v2014, 7
        %v2016 = vsub.s32 %v1495, %v2015
        %v2017 = vrot.slane %v1908, %v2016
        %v2018 = vlaneseq
        %v2019 = vshrl.u32 %v2018, 7
        %v2020 = vsub.s32 %v1500, %v2019
        %v2021 = vrot.slane %v1911, %v2020
        %v2022 = vsel %vm1505, %v2021, %v2017
        %v2023 = vlaneseq
        %v2024 = vshrl.u32 %v2023, 7
        %v2025 = vsub.s32 %v1495, %v2024
        %v2026 = vrot.slane %v1914, %v2025
        %v2027 = vlaneseq
        %v2028 = vshrl.u32 %v2027, 7
        %v2029 = vsub.s32 %v1500, %v2028
        %v2030 = vrot.slane %v1917, %v2029
        %v2031 = vsel %vm1505, %v2030, %v2026
        %v2032 = vlaneseq
        %v2033 = vshrl.u32 %v2032, 7
        %v2034 = vsub.s32 %v1495, %v2033
        %v2035 = vrot.slane %v1920, %v2034
        %v2036 = vlaneseq
        %v2037 = vshrl.u32 %v2036, 7
        %v2038 = vsub.s32 %v1500, %v2037
        %v2039 = vrot.slane %v1923, %v2038
        %v2040 = vsel %vm1505, %v2039, %v2035
        %v2041 = vlaneseq
        %v2042 = vshrl.u32 %v2041, 7
        %v2043 = vsub.s32 %v1495, %v2042
        %v2044 = vrot.slane %v1926, %v2043
        %v2045 = vlaneseq
        %v2046 = vshrl.u32 %v2045, 7
        %v2047 = vsub.s32 %v1500, %v2046
        %v2048 = vrot.slane %v1929, %v2047
        %v2049 = vsel %vm1505, %v2048, %v2044
        %v2050 = vlaneseq
        %v2051 = vshrl.u32 %v2050, 7
        %v2052 = vsub.s32 %v1495, %v2051
        %v2053 = vrot.slane %v1932, %v2052
        %v2054 = vlaneseq
        %v2055 = vshrl.u32 %v2054, 7
        %v2056 = vsub.s32 %v1500, %v2055
        %v2057 = vrot.slane %v1935, %v2056
        %v2058 = vsel %vm1505, %v2057, %v2053
        %v2059 = vlaneseq
        %v2060 = vshrl.u32 %v2059, 7
        %v2061 = vsub.s32 %v1495, %v2060
        %v2062 = vrot.slane %v1938, %v2061
        %v2063 = vlaneseq
        %v2064 = vshrl.u32 %v2063, 7
        %v2065 = vsub.s32 %v1500, %v2064
        %v2066 = vrot.slane %v1941, %v2065
        %v2067 = vsel %vm1505, %v2066, %v2062
        %v2068 = vlaneseq
        %v2069 = vshrl.u32 %v2068, 7
        %v2070 = vsub.s32 %v1495, %v2069
        %v2071 = vrot.slane %v1944, %v2070
        %v2072 = vlaneseq
        %v2073 = vshrl.u32 %v2072, 7
        %v2074 = vsub.s32 %v1500, %v2073
        %v2075 = vrot.slane %v1947, %v2074
        %v2076 = vsel %vm1505, %v2075, %v2071
        %v2077 = vlaneseq
        %v2078 = vshrl.u32 %v2077, 7
        %v2079 = vsub.s32 %v1495, %v2078
        %v2080 = vrot.slane %v1950, %v2079
        %v2081 = vlaneseq
        %v2082 = vshrl.u32 %v2081, 7
        %v2083 = vsub.s32 %v1500, %v2082
        %v2084 = vrot.slane %v1953, %v2083
        %v2085 = vsel %vm1505, %v2084, %v2080
        %v2086 = vlaneseq
        %v2087 = vshrl.u32 %v2086, 7
        %v2088 = vsub.s32 %v1495, %v2087
        %v2089 = vrot.slane %v1956, %v2088
        %v2090 = vlaneseq
        %v2091 = vshrl.u32 %v2090, 7
        %v2092 = vsub.s32 %v1500, %v2091
        %v2093 = vrot.slane %v1959, %v2092
        %v2094 = vsel %vm1505, %v2093, %v2089
        %v2095 = vlaneseq
        %v2096 = vshrl.u32 %v2095, 7
        %v2097 = vsub.s32 %v1495, %v2096
        %v2098 = vrot.slane %v1962, %v2097
        %v2099 = vlaneseq
        %v2100 = vshrl.u32 %v2099, 7
        %v2101 = vsub.s32 %v1500, %v2100
        %v2102 = vrot.slane %v1965, %v2101
        %v2103 = vsel %vm1505, %v2102, %v2098
        %v2104 = vlaneseq
        %v2105 = vshrl.u32 %v2104, 7
        %v2106 = vsub.s32 %v1495, %v2105
        %v2107 = vrot.slane %v1968, %v2106
        %v2108 = vlaneseq
        %v2109 = vshrl.u32 %v2108, 7
        %v2110 = vsub.s32 %v1500, %v2109
        %v2111 = vrot.slane %v1971, %v2110
        %v2112 = vsel %vm1505, %v2111, %v2107
        %v2113 = vlaneseq
        %v2114 = vshrl.u32 %v2113, 7
        %v2115 = vsub.s32 %v1495, %v2114
        %v2116 = vrot.slane %v1974, %v2115
        %v2117 = vlaneseq
        %v2118 = vshrl.u32 %v2117, 7
        %v2119 = vsub.s32 %v1500, %v2118
        %v2120 = vrot.slane %v1977, %v2119
        %v2121 = vsel %vm1505, %v2120, %v2116
        %v2122 = vsel %vm1642, %v1995, %v1986
        %v2123 = vsel %vm1644, %v2004, %v2122
        %v2124 = vsel %vm1646, %v2013, %v2123
        %v2125 = vsel %vm1648, %v2022, %v2124
        %v2126 = vsel %vm1650, %v2031, %v2125
        %v2127 = vsel %vm1652, %v2040, %v2126
        %v2128 = vsel %vm1654, %v2049, %v2127
        %v2129 = vsel %vm1642, %v2067, %v2058
        %v2130 = vsel %vm1644, %v2076, %v2129
        %v2131 = vsel %vm1646, %v2085, %v2130
        %v2132 = vsel %vm1648, %v2094, %v2131
        %v2133 = vsel %vm1650, %v2103, %v2132
        %v2134 = vsel %vm1652, %v2112, %v2133
        %v2135 = vsel %vm1654, %v2121, %v2134
        %v2138 = vsel %vm1665, %v2128, 0.0
        %2139 = vadd.xlane.f32.xlu0 %v2138
        %v2140 = vpop.xlane.xlu0 %2139
        %v2141 = vsel %vm1665, %v2135, 0.0
        %2142 = vadd.xlane.f32.xlu0 %v2141
        %v2143 = vpop.xlane.xlu0 %2142
        %v2146 = vlaneseq
        %v2147 = vshrl.u32 %v2146, 7
        %v2148 = vsub.s32 0, %v2147
        %v2149 = vrot.slane %v2140, %v2148
        %v2150 = vlaneseq
        %v2151 = vshrl.u32 %v2150, 7
        %v2152 = vsub.s32 1, %v2151
        %v2153 = vrot.slane %v2140, %v2152
        %v2154 = vlaneseq
        %v2155 = vshrl.u32 %v2154, 7
        %v2156 = vsub.s32 2, %v2155
        %v2157 = vrot.slane %v2140, %v2156
        %v2158 = vlaneseq
        %v2159 = vshrl.u32 %v2158, 7
        %v2160 = vsub.s32 3, %v2159
        %v2161 = vrot.slane %v2140, %v2160
        %v2162 = vlaneseq
        %v2163 = vshrl.u32 %v2162, 7
        %v2164 = vsub.s32 4, %v2163
        %v2165 = vrot.slane %v2140, %v2164
        %v2166 = vlaneseq
        %v2167 = vshrl.u32 %v2166, 7
        %v2168 = vsub.s32 5, %v2167
        %v2169 = vrot.slane %v2140, %v2168
        %v2170 = vlaneseq
        %v2171 = vshrl.u32 %v2170, 7
        %v2172 = vsub.s32 6, %v2171
        %v2173 = vrot.slane %v2140, %v2172
        %v2174 = vlaneseq
        %v2175 = vshrl.u32 %v2174, 7
        %v2176 = vsub.s32 7, %v2175
        %v2177 = vrot.slane %v2140, %v2176
        %v2178 = vlaneseq
        %v2179 = vshrl.u32 %v2178, 7
        %v2180 = vsub.s32 0, %v2179
        %v2181 = vrot.slane %v2143, %v2180
        %v2182 = vlaneseq
        %v2183 = vshrl.u32 %v2182, 7
        %v2184 = vsub.s32 1, %v2183
        %v2185 = vrot.slane %v2143, %v2184
        %v2186 = vlaneseq
        %v2187 = vshrl.u32 %v2186, 7
        %v2188 = vsub.s32 2, %v2187
        %v2189 = vrot.slane %v2143, %v2188
        %v2190 = vlaneseq
        %v2191 = vshrl.u32 %v2190, 7
        %v2192 = vsub.s32 3, %v2191
        %v2193 = vrot.slane %v2143, %v2192
        %v2194 = vlaneseq
        %v2195 = vshrl.u32 %v2194, 7
        %v2196 = vsub.s32 4, %v2195
        %v2197 = vrot.slane %v2143, %v2196
        %v2198 = vlaneseq
        %v2199 = vshrl.u32 %v2198, 7
        %v2200 = vsub.s32 5, %v2199
        %v2201 = vrot.slane %v2143, %v2200
        %v2202 = vlaneseq
        %v2203 = vshrl.u32 %v2202, 7
        %v2204 = vsub.s32 6, %v2203
        %v2205 = vrot.slane %v2143, %v2204
        %v2206 = vlaneseq
        %v2207 = vshrl.u32 %v2206, 7
        %v2208 = vsub.s32 7, %v2207
        %v2209 = vrot.slane %v2143, %v2208
        %v2226 = vrcp.pop %v2149
        %v2227 = vmul.f32 %v1787, %v2226
        %v2228 = vmul.f32 %v1789, %v2226
        %v2229 = vrcp.pop %v2153
        %v2230 = vmul.f32 %v1791, %v2229
        %v2231 = vmul.f32 %v1793, %v2229
        %v2232 = vrcp.pop %v2157
        %v2233 = vmul.f32 %v1795, %v2232
        %v2234 = vmul.f32 %v1797, %v2232
        %v2235 = vrcp.pop %v2161
        %v2236 = vmul.f32 %v1799, %v2235
        %v2237 = vmul.f32 %v1801, %v2235
        %v2238 = vrcp.pop %v2165
        %v2239 = vmul.f32 %v1803, %v2238
        %v2240 = vmul.f32 %v1805, %v2238
        %v2241 = vrcp.pop %v2169
        %v2242 = vmul.f32 %v1807, %v2241
        %v2243 = vmul.f32 %v1809, %v2241
        %v2244 = vrcp.pop %v2173
        %v2245 = vmul.f32 %v1811, %v2244
        %v2246 = vmul.f32 %v1813, %v2244
        %v2247 = vrcp.pop %v2177
        %v2248 = vmul.f32 %v1815, %v2247
        %v2249 = vmul.f32 %v1817, %v2247
        %v2250 = vrcp.pop %v2181
        %v2251 = vmul.f32 %v1819, %v2250
        %v2252 = vmul.f32 %v1821, %v2250
        %v2253 = vrcp.pop %v2185
        %v2254 = vmul.f32 %v1823, %v2253
        %v2255 = vmul.f32 %v1825, %v2253
        %v2256 = vrcp.pop %v2189
        %v2257 = vmul.f32 %v1827, %v2256
        %v2258 = vmul.f32 %v1829, %v2256
        %v2259 = vrcp.pop %v2193
        %v2260 = vmul.f32 %v1831, %v2259
        %v2261 = vmul.f32 %v1833, %v2259
        %v2262 = vrcp.pop %v2197
        %v2263 = vmul.f32 %v1835, %v2262
        %v2264 = vmul.f32 %v1837, %v2262
        %v2265 = vrcp.pop %v2201
        %v2266 = vmul.f32 %v1839, %v2265
        %v2267 = vmul.f32 %v1841, %v2265
        %v2268 = vrcp.pop %v2205
        %v2269 = vmul.f32 %v1843, %v2268
        %v2270 = vmul.f32 %v1845, %v2268
        %v2271 = vrcp.pop %v2209
        %v2272 = vmul.f32 %v1847, %v2271
        %v2273 = vmul.f32 %v1849, %v2271
        %2306 = vset.pattern.permute.xlu0 0
        %2307 = vperm.xlu0 %2306, %v2227
        %v2308 = vpop.permute.xlu0 %2307
        %2309 = vset.pattern.permute.xlu0 0
        %2310 = vperm.xlu0 %2309, %v2228
        %v2311 = vpop.permute.xlu0 %2310
        %2312 = vset.pattern.permute.xlu0 0
        %2313 = vperm.xlu0 %2312, %v2230
        %v2314 = vpop.permute.xlu0 %2313
        %2315 = vset.pattern.permute.xlu0 0
        %2316 = vperm.xlu0 %2315, %v2231
        %v2317 = vpop.permute.xlu0 %2316
        %2318 = vset.pattern.permute.xlu0 0
        %2319 = vperm.xlu0 %2318, %v2233
        %v2320 = vpop.permute.xlu0 %2319
        %2321 = vset.pattern.permute.xlu0 0
        %2322 = vperm.xlu0 %2321, %v2234
        %v2323 = vpop.permute.xlu0 %2322
        %2324 = vset.pattern.permute.xlu0 0
        %2325 = vperm.xlu0 %2324, %v2236
        %v2326 = vpop.permute.xlu0 %2325
        %2327 = vset.pattern.permute.xlu0 0
        %2328 = vperm.xlu0 %2327, %v2237
        %v2329 = vpop.permute.xlu0 %2328
        %2330 = vset.pattern.permute.xlu0 0
        %2331 = vperm.xlu0 %2330, %v2239
        %v2332 = vpop.permute.xlu0 %2331
        %2333 = vset.pattern.permute.xlu0 0
        %2334 = vperm.xlu0 %2333, %v2240
        %v2335 = vpop.permute.xlu0 %2334
        %2336 = vset.pattern.permute.xlu0 0
        %2337 = vperm.xlu0 %2336, %v2242
        %v2338 = vpop.permute.xlu0 %2337
        %2339 = vset.pattern.permute.xlu0 0
        %2340 = vperm.xlu0 %2339, %v2243
        %v2341 = vpop.permute.xlu0 %2340
        %2342 = vset.pattern.permute.xlu0 0
        %2343 = vperm.xlu0 %2342, %v2245
        %v2344 = vpop.permute.xlu0 %2343
        %2345 = vset.pattern.permute.xlu0 0
        %2346 = vperm.xlu0 %2345, %v2246
        %v2347 = vpop.permute.xlu0 %2346
        %2348 = vset.pattern.permute.xlu0 0
        %2349 = vperm.xlu0 %2348, %v2248
        %v2350 = vpop.permute.xlu0 %2349
        %2351 = vset.pattern.permute.xlu0 0
        %2352 = vperm.xlu0 %2351, %v2249
        %v2353 = vpop.permute.xlu0 %2352
        %2354 = vset.pattern.permute.xlu0 0
        %2355 = vperm.xlu0 %2354, %v2251
        %v2356 = vpop.permute.xlu0 %2355
        %2357 = vset.pattern.permute.xlu0 0
        %2358 = vperm.xlu0 %2357, %v2252
        %v2359 = vpop.permute.xlu0 %2358
        %2360 = vset.pattern.permute.xlu0 0
        %2361 = vperm.xlu0 %2360, %v2254
        %v2362 = vpop.permute.xlu0 %2361
        %2363 = vset.pattern.permute.xlu0 0
        %2364 = vperm.xlu0 %2363, %v2255
        %v2365 = vpop.permute.xlu0 %2364
        %2366 = vset.pattern.permute.xlu0 0
        %2367 = vperm.xlu0 %2366, %v2257
        %v2368 = vpop.permute.xlu0 %2367
        %2369 = vset.pattern.permute.xlu0 0
        %2370 = vperm.xlu0 %2369, %v2258
        %v2371 = vpop.permute.xlu0 %2370
        %2372 = vset.pattern.permute.xlu0 0
        %2373 = vperm.xlu0 %2372, %v2260
        %v2374 = vpop.permute.xlu0 %2373
        %2375 = vset.pattern.permute.xlu0 0
        %2376 = vperm.xlu0 %2375, %v2261
        %v2377 = vpop.permute.xlu0 %2376
        %2378 = vset.pattern.permute.xlu0 0
        %2379 = vperm.xlu0 %2378, %v2263
        %v2380 = vpop.permute.xlu0 %2379
        %2381 = vset.pattern.permute.xlu0 0
        %2382 = vperm.xlu0 %2381, %v2264
        %v2383 = vpop.permute.xlu0 %2382
        %2384 = vset.pattern.permute.xlu0 0
        %2385 = vperm.xlu0 %2384, %v2266
        %v2386 = vpop.permute.xlu0 %2385
        %2387 = vset.pattern.permute.xlu0 0
        %2388 = vperm.xlu0 %2387, %v2267
        %v2389 = vpop.permute.xlu0 %2388
        %2390 = vset.pattern.permute.xlu0 0
        %2391 = vperm.xlu0 %2390, %v2269
        %v2392 = vpop.permute.xlu0 %2391
        %2393 = vset.pattern.permute.xlu0 0
        %2394 = vperm.xlu0 %2393, %v2270
        %v2395 = vpop.permute.xlu0 %2394
        %2396 = vset.pattern.permute.xlu0 0
        %2397 = vperm.xlu0 %2396, %v2272
        %v2398 = vpop.permute.xlu0 %2397
        %2399 = vset.pattern.permute.xlu0 0
        %2400 = vperm.xlu0 %2399, %v2273
        %v2401 = vpop.permute.xlu0 %2400
        %v2402 = vlaneseq
        %v2403 = vshrl.u32 %v2402, 7
        %v2404 = vsub.s32 %v1495, %v2403
        %v2405 = vrot.slane %v2308, %v2404
        %v2406 = vlaneseq
        %v2407 = vshrl.u32 %v2406, 7
        %v2408 = vsub.s32 %v1500, %v2407
        %v2409 = vrot.slane %v2311, %v2408
        %v2410 = vsel %vm1505, %v2409, %v2405
        %v2411 = vlaneseq
        %v2412 = vshrl.u32 %v2411, 7
        %v2413 = vsub.s32 %v1495, %v2412
        %v2414 = vrot.slane %v2314, %v2413
        %v2415 = vlaneseq
        %v2416 = vshrl.u32 %v2415, 7
        %v2417 = vsub.s32 %v1500, %v2416
        %v2418 = vrot.slane %v2317, %v2417
        %v2419 = vsel %vm1505, %v2418, %v2414
        %v2420 = vlaneseq
        %v2421 = vshrl.u32 %v2420, 7
        %v2422 = vsub.s32 %v1495, %v2421
        %v2423 = vrot.slane %v2320, %v2422
        %v2424 = vlaneseq
        %v2425 = vshrl.u32 %v2424, 7
        %v2426 = vsub.s32 %v1500, %v2425
        %v2427 = vrot.slane %v2323, %v2426
        %v2428 = vsel %vm1505, %v2427, %v2423
        %v2429 = vlaneseq
        %v2430 = vshrl.u32 %v2429, 7
        %v2431 = vsub.s32 %v1495, %v2430
        %v2432 = vrot.slane %v2326, %v2431
        %v2433 = vlaneseq
        %v2434 = vshrl.u32 %v2433, 7
        %v2435 = vsub.s32 %v1500, %v2434
        %v2436 = vrot.slane %v2329, %v2435
        %v2437 = vsel %vm1505, %v2436, %v2432
        %v2438 = vlaneseq
        %v2439 = vshrl.u32 %v2438, 7
        %v2440 = vsub.s32 %v1495, %v2439
        %v2441 = vrot.slane %v2332, %v2440
        %v2442 = vlaneseq
        %v2443 = vshrl.u32 %v2442, 7
        %v2444 = vsub.s32 %v1500, %v2443
        %v2445 = vrot.slane %v2335, %v2444
        %v2446 = vsel %vm1505, %v2445, %v2441
        %v2447 = vlaneseq
        %v2448 = vshrl.u32 %v2447, 7
        %v2449 = vsub.s32 %v1495, %v2448
        %v2450 = vrot.slane %v2338, %v2449
        %v2451 = vlaneseq
        %v2452 = vshrl.u32 %v2451, 7
        %v2453 = vsub.s32 %v1500, %v2452
        %v2454 = vrot.slane %v2341, %v2453
        %v2455 = vsel %vm1505, %v2454, %v2450
        %v2456 = vlaneseq
        %v2457 = vshrl.u32 %v2456, 7
        %v2458 = vsub.s32 %v1495, %v2457
        %v2459 = vrot.slane %v2344, %v2458
        %v2460 = vlaneseq
        %v2461 = vshrl.u32 %v2460, 7
        %v2462 = vsub.s32 %v1500, %v2461
        %v2463 = vrot.slane %v2347, %v2462
        %v2464 = vsel %vm1505, %v2463, %v2459
        %v2465 = vlaneseq
        %v2466 = vshrl.u32 %v2465, 7
        %v2467 = vsub.s32 %v1495, %v2466
        %v2468 = vrot.slane %v2350, %v2467
        %v2469 = vlaneseq
        %v2470 = vshrl.u32 %v2469, 7
        %v2471 = vsub.s32 %v1500, %v2470
        %v2472 = vrot.slane %v2353, %v2471
        %v2473 = vsel %vm1505, %v2472, %v2468
        %v2474 = vlaneseq
        %v2475 = vshrl.u32 %v2474, 7
        %v2476 = vsub.s32 %v1495, %v2475
        %v2477 = vrot.slane %v2356, %v2476
        %v2478 = vlaneseq
        %v2479 = vshrl.u32 %v2478, 7
        %v2480 = vsub.s32 %v1500, %v2479
        %v2481 = vrot.slane %v2359, %v2480
        %v2482 = vsel %vm1505, %v2481, %v2477
        %v2483 = vlaneseq
        %v2484 = vshrl.u32 %v2483, 7
        %v2485 = vsub.s32 %v1495, %v2484
        %v2486 = vrot.slane %v2362, %v2485
        %v2487 = vlaneseq
        %v2488 = vshrl.u32 %v2487, 7
        %v2489 = vsub.s32 %v1500, %v2488
        %v2490 = vrot.slane %v2365, %v2489
        %v2491 = vsel %vm1505, %v2490, %v2486
        %v2492 = vlaneseq
        %v2493 = vshrl.u32 %v2492, 7
        %v2494 = vsub.s32 %v1495, %v2493
        %v2495 = vrot.slane %v2368, %v2494
        %v2496 = vlaneseq
        %v2497 = vshrl.u32 %v2496, 7
        %v2498 = vsub.s32 %v1500, %v2497
        %v2499 = vrot.slane %v2371, %v2498
        %v2500 = vsel %vm1505, %v2499, %v2495
        %v2501 = vlaneseq
        %v2502 = vshrl.u32 %v2501, 7
        %v2503 = vsub.s32 %v1495, %v2502
        %v2504 = vrot.slane %v2374, %v2503
        %v2505 = vlaneseq
        %v2506 = vshrl.u32 %v2505, 7
        %v2507 = vsub.s32 %v1500, %v2506
        %v2508 = vrot.slane %v2377, %v2507
        %v2509 = vsel %vm1505, %v2508, %v2504
        %v2510 = vlaneseq
        %v2511 = vshrl.u32 %v2510, 7
        %v2512 = vsub.s32 %v1495, %v2511
        %v2513 = vrot.slane %v2380, %v2512
        %v2514 = vlaneseq
        %v2515 = vshrl.u32 %v2514, 7
        %v2516 = vsub.s32 %v1500, %v2515
        %v2517 = vrot.slane %v2383, %v2516
        %v2518 = vsel %vm1505, %v2517, %v2513
        %v2519 = vlaneseq
        %v2520 = vshrl.u32 %v2519, 7
        %v2521 = vsub.s32 %v1495, %v2520
        %v2522 = vrot.slane %v2386, %v2521
        %v2523 = vlaneseq
        %v2524 = vshrl.u32 %v2523, 7
        %v2525 = vsub.s32 %v1500, %v2524
        %v2526 = vrot.slane %v2389, %v2525
        %v2527 = vsel %vm1505, %v2526, %v2522
        %v2528 = vlaneseq
        %v2529 = vshrl.u32 %v2528, 7
        %v2530 = vsub.s32 %v1495, %v2529
        %v2531 = vrot.slane %v2392, %v2530
        %v2532 = vlaneseq
        %v2533 = vshrl.u32 %v2532, 7
        %v2534 = vsub.s32 %v1500, %v2533
        %v2535 = vrot.slane %v2395, %v2534
        %v2536 = vsel %vm1505, %v2535, %v2531
        %v2537 = vlaneseq
        %v2538 = vshrl.u32 %v2537, 7
        %v2539 = vsub.s32 %v1495, %v2538
        %v2540 = vrot.slane %v2398, %v2539
        %v2541 = vlaneseq
        %v2542 = vshrl.u32 %v2541, 7
        %v2543 = vsub.s32 %v1500, %v2542
        %v2544 = vrot.slane %v2401, %v2543
        %v2545 = vsel %vm1505, %v2544, %v2540
        %v2546 = vsel %vm1642, %v2419, %v2410
        %v2547 = vsel %vm1644, %v2428, %v2546
        %v2548 = vsel %vm1646, %v2437, %v2547
        %v2549 = vsel %vm1648, %v2446, %v2548
        %v2550 = vsel %vm1650, %v2455, %v2549
        %v2551 = vsel %vm1652, %v2464, %v2550
        %v2552 = vsel %vm1654, %v2473, %v2551
        %v2553 = vsel %vm1642, %v2491, %v2482
        %v2554 = vsel %vm1644, %v2500, %v2553
        %v2555 = vsel %vm1646, %v2509, %v2554
        %v2556 = vsel %vm1648, %v2518, %v2555
        %v2557 = vsel %vm1650, %v2527, %v2556
        %v2558 = vsel %vm1652, %v2536, %v2557
        %v2559 = vsel %vm1654, %v2545, %v2558
        %2562 = vst.msk [vmem:[%s549] sm:$0xff] %vm1665, %v2552
        %2563 = vst.msk [vmem:[%s549 + $0x8] sm:$0xff] %vm1665, %v2559
        %s2564 = sand.u32 %s267, 1
        %s2565 = scalar_lea.sflag [#allocation4], %s2564
        %s2566 = sand.u32 %s267, 1
        %s2567 = smul.addr %s2566, 16
        %s2568 = scalar_lea.vmem [#allocation19], %s2567
        // Predicated region
        $region101: #{tpu_custom_call.1} parent=59 // pred_check
          %p2569 = pneg %p277
        $region102: #{tpu_custom_call.1} parent=59 // pred_check_branch
          %2571 = sbr.rel (%p2569) target = $region104
        $region103: #{tpu_custom_call.1} parent=59 // pred_region
          %s2572 = smul.u32 2, %s34
          %s2574 = ssub.s32 256, 256
          %2575 = vsyncadd %s2565, %s2574
          %s2576 = smul.addr %s2572, 128
          %s2577 = scalar_lea.hbm %s10, %s2576
          %s2578 = sshll.u32 %s2568, 4
          %s2579 = int_to_ptr.vmem [resolvable:$true] %s2578
          %2584 = dma.vmem_to_hbm [thread:$0]  %s2579, 256, %s2577, %s2565, 128, 128, 8
        $region104: #{tpu_custom_call.1} parent=59 // pred_fallthru
          _
      $region60: #{tpu_custom_call.1} parent=5 // pred_fallthru
        _
      %p2585 = scmp.le.s32.totalorder 2, %s29
      // Predicated region
      $region105: #{tpu_custom_call.1} parent=5 // pred_check
        %p2586 = pneg %p2585
      $region106: #{tpu_custom_call.1} parent=5 // pred_check_branch
        %2588 = sbr.rel (%p2586) target = $region108
      $region107: #{tpu_custom_call.1} parent=5 // pred_region
        %s2589 = ssub.s32 %s29, 2
        // Predicated region
        $region109: #{tpu_custom_call.1} parent=107 // pred_check
          %p2590 = pneg %p283
        $region110: #{tpu_custom_call.1} parent=107 // pred_check_branch
          %2592 = sbr.rel (%p2590) target = $region112
        $region111: #{tpu_custom_call.1} parent=107 // pred_region
          %s2593 = sand.u32 %s268, 1
          %s2594 = scalar_lea.sflag [#allocation4], %s2593
          %s2595 = sand.u32 %s268, 1
          %s2596 = smul.addr %s2595, 16
          %s2597 = scalar_lea.vmem [#allocation19], %s2596
          %2598 = dma.done %s2594, 256
        $region112: #{tpu_custom_call.1} parent=107 // pred_fallthru
          _
      $region108: #{tpu_custom_call.1} parent=5 // pred_fallthru
        _
    $region6: #{tpu_custom_call.1} parent=1 // loop_footer
      %s33 = sadd.s32 1, %s29
    $region7: #{tpu_custom_call.1} parent=1 // loop_footer_branch
      %28 = sbr.rel target = $region3
    $region8: #{tpu_custom_call.1} parent=1 // loop_exit
      _
    %2599 = vsyncpa [#allocation3], 1
    %s2600 = scalar_lea.sflag [#allocation3], 1
    %2601 = vsyncpa %s2600, 1
    %2602 = vsyncpa [#allocation6], 1
    %s2603 = scalar_lea.sflag [#allocation6], 1
    %2604 = vsyncpa %s2603, 1
    %2605 = vsyncpa [#allocation9], 1
    %2606 = vsyncpa [#allocation12], 1
    %2607 = vsyncpa [#allocation15], 1
    %2608 = vsyncpa [#allocation18], 1
    %2609 = vsyncpa [#allocation4], 1
    %s2610 = scalar_lea.sflag [#allocation4], 1
    %2611 = vsyncpa %s2610, 1

</llo_original>
